<compile_context>
chip_gen: v7x
topology: tpu7x:2x2x1
jax: 0.10.0
libtpu: 0.0.40
codegen_flags: <defaults>
</compile_context>

<pallas_src>
import jax
import jax.numpy as jnp
from jax import lax
from jax.experimental import pallas as pl
from jax.experimental.pallas import tpu as pltpu


# --------------------------------- kernel -----------------------------------

def basic_block_kernel(x_ref, w1sc_ref, b1_ref, w2_ref, bout_ref,
                       out_ref, xpad_scr, hpad_scr):
    """Fused BasicBlock forward for one batch image (NHWC).

    x_ref    : (1, H, W, Cin)   bf16  input image
    w1sc_ref : (9*Cin, 2*Cout)  bf16  [conv1*s1 | 1x1 shortcut*ssc in centre-tap rows]
    b1_ref   : (1, Cout)        f32   folded conv1 + BN1 bias
    w2_ref   : (9*Cout, Cout)   bf16  conv2 weights * BN2 scale
    bout_ref : (1, Cout)        f32   folded (conv2+BN2 bias) + (shortcut+BNsc bias)
    out_ref  : (1, H, W, Cout)  f32
    xpad_scr : (H+2, W+2, Cin)  bf16  VMEM scratch (zero-padded input)
    hpad_scr : (H+2, W+2, Cout) bf16  VMEM scratch (zero-padded intermediate)
    """
    H, W, Cin = x_ref.shape[1], x_ref.shape[2], x_ref.shape[3]
    Cout = w2_ref.shape[1]

    def store_padded(pad_ref, interior, c):
        # Border zeros + interior write (~1.2 passes instead of 2 full passes).
        # The border is rewritten every grid step on purpose: scratch is
        # per-core, so a program_id==0 init guard would be wrong under
        # megacore (v7x) sharding of the batch axis.
        zrow = jnp.zeros((1, W + 2, c), pad_ref.dtype)
        zcol = jnp.zeros((H, 1, c), pad_ref.dtype)
        pad_ref[0:1, :, :] = zrow
        pad_ref[H + 1:H + 2, :, :] = zrow
        pad_ref[1:H + 1, 0:1, :] = zcol
        pad_ref[1:H + 1, W + 1:W + 2, :] = zcol
        pad_ref[1:H + 1, 1:W + 1, :] = interior

    def im2col(pad_ref, c):
        # (H*W, 9*c) patch matrix: 9 shifted windows concatenated on the lane
        # axis -> each 3x3 conv becomes a single large-K MXU dot.
        cols = [pad_ref[dy:dy + H, dx:dx + W, :]
                for dy in range(3) for dx in range(3)]
        return jnp.concatenate(cols, axis=-1).reshape(H * W, 9 * c)

    # ---- conv1 (3x3, pad=1) + 1x1 shortcut fused into ONE dot, K = 9*Cin ----
    store_padded(xpad_scr, x_ref[0], Cin)
    p1 = im2col(xpad_scr, Cin)
    acc1 = jnp.dot(p1, w1sc_ref[...], preferred_element_type=jnp.float32)
    h1 = jnp.maximum(acc1[:, :Cout] + b1_ref[...], 0.0)   # BN1 bias + ReLU
    sc = acc1[:, Cout:]                                    # shortcut (bias added later)

    # ---- conv2 (3x3, pad=1): ONE dot, K = 9*Cout ----
    store_padded(hpad_scr, h1.reshape(H, W, Cout).astype(hpad_scr.dtype), Cout)
    p2 = im2col(hpad_scr, Cout)
    acc2 = jnp.dot(p2, w2_ref[...], preferred_element_type=jnp.float32)

    # ---- residual add (biases pre-summed on host) + final ReLU ----
    out = jnp.maximum(acc2 + sc + bout_ref[...], 0.0)
    out_ref[...] = out.reshape(1, H, W, Cout)


# --------------------------------- wrapper ----------------------------------

def basic_block_pallas(x_nchw, folded):
    """x_nchw: (N, Cin, H, W) f32.  `folded`: BN-scale-folded f32 params."""
    w1_hwio, b1, w2_hwio, b2, wsc, bsc = folded
    N, Cin, H, W = x_nchw.shape
    Cout = w1_hwio.shape[-1]

    # NCHW -> NHWC, bf16 at the kernel boundary (halves DMA bytes, feeds MXU).
    x_nhwc = jnp.transpose(x_nchw, (0, 2, 3, 1)).astype(jnp.bfloat16)

    # conv1 weights (HWIO, BN scale folded) flattened tap-major to (9*Cin, Cout);
    # the 1x1 shortcut is appended as extra output columns living only in the
    # centre-tap rows, so conv1 + shortcut are a single MXU dot in the kernel.
    w1_flat = w1_hwio.reshape(9 * Cin, Cout)
    sc_cols = jnp.zeros((9 * Cin, Cout), jnp.float32)
    sc_cols = sc_cols.at[4 * Cin:5 * Cin, :].set(wsc)
    w1sc = jnp.concatenate([w1_flat, sc_cols], axis=1).astype(jnp.bfloat16)
    w2_flat = w2_hwio.reshape(9 * Cout, Cout).astype(jnp.bfloat16)

    b1_row = b1.reshape(1, Cout).astype(jnp.float32)
    bout_row = (b2 + bsc).reshape(1, Cout).astype(jnp.float32)

    out_nhwc = pl.pallas_call(
        basic_block_kernel,
        out_shape=jax.ShapeDtypeStruct((N, H, W, Cout), jnp.float32),
        grid=(N,),
        in_specs=[
            pl.BlockSpec((1, H, W, Cin), lambda n: (n, 0, 0, 0)),
            pl.BlockSpec((9 * Cin, 2 * Cout), lambda n: (0, 0)),
            pl.BlockSpec((1, Cout), lambda n: (0, 0)),
            pl.BlockSpec((9 * Cout, Cout), lambda n: (0, 0)),
            pl.BlockSpec((1, Cout), lambda n: (0, 0)),
        ],
        out_specs=pl.BlockSpec((1, H, W, Cout), lambda n: (n, 0, 0, 0)),
        scratch_shapes=[
            pltpu.VMEM((H + 2, W + 2, Cin), jnp.bfloat16),
            pltpu.VMEM((H + 2, W + 2, Cout), jnp.bfloat16),
        ],
        compiler_params=pltpu.CompilerParams(
            dimension_semantics=("parallel",)),   # batch axis shardable on v7x's 2 TCs
    )(x_nhwc, w1sc, b1_row, w2_flat, bout_row)

    # NHWC -> NCHW to match the PyTorch output convention.
    return jnp.transpose(out_nhwc, (0, 3, 1, 2))


# ----------------------------- parameter setup ------------------------------

def fold_bn_into_conv(w_hwio, conv_bias, gamma, beta, mean, var, eps=1e-5):
    """Fold inference BatchNorm into the conv: y = conv(x, w*s) + (beta + s*(b - mean))."""
    s = gamma / jnp.sqrt(var + eps)
    return w_hwio * s, beta + s * (conv_bias - mean)


def make_params(key, cin, cout):
    ks = jax.random.split(key, 12)
    w1_oihw = 0.1 * jax.random.normal(ks[0], (cout, cin, 3, 3), jnp.float32)
    b1_conv = 0.05 * jax.random.normal(ks[1], (cout,), jnp.float32)
    w2_oihw = 0.1 * jax.random.normal(ks[2], (cout, cout, 3, 3), jnp.float32)
    b2_conv = 0.05 * jax.random.normal(ks[3], (cout,), jnp.float32)
    wsc_oihw = 0.1 * jax.random.normal(ks[4], (cout, cin, 1, 1), jnp.float32)
    bsc_conv = 0.05 * jax.random.normal(ks[5], (cout,), jnp.float32)
    # BatchNorm params (inference / running stats).
    g1 = 1.0 + 0.1 * jax.random.normal(ks[6], (cout,), jnp.float32)
    be1 = 0.1 * jax.random.normal(ks[7], (cout,), jnp.float32)
    m1 = 0.1 * jax.random.normal(ks[8], (cout,), jnp.float32)
    v1 = 0.5 + jax.random.uniform(ks[9], (cout,), jnp.float32)
    g2 = 1.0 + 0.1 * jax.random.normal(ks[10], (cout,), jnp.float32)
    be2 = 0.1 * jax.random.normal(ks[11], (cout,), jnp.float32)
    m2 = 0.05 * jnp.ones((cout,), jnp.float32)
    v2 = 0.8 * jnp.ones((cout,), jnp.float32)
    gsc = 0.9 * jnp.ones((cout,), jnp.float32)
    besc = 0.02 * jnp.ones((cout,), jnp.float32)
    msc = 0.01 * jnp.ones((cout,), jnp.float32)
    vsc = 1.2 * jnp.ones((cout,), jnp.float32)

    def hwio(w_oihw):
        return jnp.transpose(w_oihw, (2, 3, 1, 0))

    w1f, b1f = fold_bn_into_conv(hwio(w1_oihw), b1_conv, g1, be1, m1, v1)
    w2f, b2f = fold_bn_into_conv(hwio(w2_oihw), b2_conv, g2, be2, m2, v2)
    wscf, bscf = fold_bn_into_conv(hwio(wsc_oihw), bsc_conv, gsc, besc, msc, vsc)
    folded = (w1f, b1f, w2f, b2f, wscf[0, 0], bscf)   # shortcut weight as (Cin, Cout)

    raw = dict(w1_oihw=w1_oihw, b1_conv=b1_conv, g1=g1, be1=be1, m1=m1, v1=v1,
               w2_oihw=w2_oihw, b2_conv=b2_conv, g2=g2, be2=be2, m2=m2, v2=v2,
               wsc_oihw=wsc_oihw, bsc_conv=bsc_conv, gsc=gsc, besc=besc,
               msc=msc, vsc=vsc)
    return folded, raw


# ------------------------------ JAX references -------------------------------

def _conv_nhwc(x, w_hwio, pad, out_dtype=None):
    return lax.conv_general_dilated(
        x, w_hwio, window_strides=(1, 1),
        padding=[(pad, pad), (pad, pad)],
        dimension_numbers=("NHWC", "HWIO", "NHWC"),
        preferred_element_type=out_dtype)


def basic_block_ref_bf16(x_nchw, folded):
    """Reference mirroring the kernel numerics (folded BN, bf16 inputs, f32 acc)."""
    w1f, b1f, w2f, b2f, wscf, bscf = folded
    x = jnp.transpose(x_nchw, (0, 2, 3, 1)).astype(jnp.bfloat16)
    h = _conv_nhwc(x, w1f.astype(jnp.bfloat16), pad=1, out_dtype=jnp.float32) + b1f
    h = jnp.maximum(h, 0.0)
    h = _conv_nhwc(h.astype(jnp.bfloat16), w2f.astype(jnp.bfloat16), pad=1,
                   out_dtype=jnp.float32) + b2f
    wsc_hwio = wscf.reshape(1, 1, *wscf.shape).astype(jnp.bfloat16)
    sc = _conv_nhwc(x, wsc_hwio, pad=0, out_dtype=jnp.float32) + bscf
    out = jnp.maximum(h + sc, 0.0)
    return jnp.transpose(out, (0, 3, 1, 2))


def basic_block_ref_f32(x_nchw, raw, eps=1e-5):
    """Full-precision reference with the PyTorch module's semantics."""
    def bn(x, g, b, m, v):
        return (x - m) / jnp.sqrt(v + eps) * g + b

    x = jnp.transpose(x_nchw, (0, 2, 3, 1)).astype(jnp.float32)
    h = _conv_nhwc(x, jnp.transpose(raw["w1_oihw"], (2, 3, 1, 0)), pad=1) + raw["b1_conv"]
    h = jnp.maximum(bn(h, raw["g1"], raw["be1"], raw["m1"], raw["v1"]), 0.0)
    h = _conv_nhwc(h, jnp.transpose(raw["w2_oihw"], (2, 3, 1, 0)), pad=1) + raw["b2_conv"]
    h = bn(h, raw["g2"], raw["be2"], raw["m2"], raw["v2"])
    sc = _conv_nhwc(x, jnp.transpose(raw["wsc_oihw"], (2, 3, 1, 0)), pad=0) + raw["bsc_conv"]
    sc = bn(sc, raw["gsc"], raw["besc"], raw["msc"], raw["vsc"])
    out = jnp.maximum(h + sc, 0.0)
    return jnp.transpose(out, (0, 3, 1, 2))


# ----------------------------------- main ------------------------------------

if __name__ == "__main__":
    N, CIN, COUT, H, W = 2, 8, 16, 16, 16   # stride=1, Cin != Cout -> conv shortcut

    key = jax.random.PRNGKey(0)
    kx, kp = jax.random.split(key)
    x = jax.random.normal(kx, (N, CIN, H, W), jnp.float32)   # NCHW like PyTorch
    folded, raw = make_params(kp, CIN, COUT)

    out = jax.block_until_ready(basic_block_pallas(x, folded))
    assert out.shape == (N, COUT, H, W), out.shape

    # Tight check against a reference that mirrors the kernel numerics
    # (folded BN, bf16 matmul inputs, f32 accumulation).
    ref16 = jax.block_until_ready(basic_block_ref_bf16(x, folded))
    err16 = float(jnp.max(jnp.abs(out - ref16)))
    assert jnp.allclose(out, ref16, rtol=5e-3, atol=5e-3), err16

    # Loose sanity check against the full-f32 PyTorch-semantics reference
    # (the only differences are bf16 quantisation of the matmul inputs).
    ref32 = jax.block_until_ready(basic_block_ref_f32(x, raw))
    err32 = float(jnp.max(jnp.abs(out - ref32)))
    assert jnp.allclose(out, ref32, rtol=0.1, atol=0.1), err32

    print("KERNEL_OK")
</pallas_src>

<mosaic_0001>
module attributes {stable_mosaic.version = 11 : i64} {
  func.func @basic_block_kernel(%arg0: i32, %arg1: memref<1x16x16x8xbf16, #tpu.memory_space<vmem>>, %arg2: memref<72x32xbf16, #tpu.memory_space<vmem>>, %arg3: memref<1x16xf32, #tpu.memory_space<vmem>>, %arg4: memref<144x16xbf16, #tpu.memory_space<vmem>>, %arg5: memref<1x16xf32, #tpu.memory_space<vmem>>, %arg6: memref<1x16x16x16xf32, #tpu.memory_space<vmem>>, %arg7: memref<18x18x8xbf16, #tpu.memory_space<vmem>>, %arg8: memref<18x18x16xbf16, #tpu.memory_space<vmem>>) attributes {dimension_semantics = [#tpu.dimension_semantics<parallel>], iteration_bounds = array<i64: 2>, scalar_prefetch = 0 : i64, scratch_operands = 2 : i64, tpu.core_type = #tpu.core_type<tc>, window_params = [{transform_indices = @transform_0, window_bounds = array<i64: 1, 16, 16, 8>}, {pipeline_mode = #tpu.pipeline_mode<synchronous>, transform_indices = @transform_1, window_bounds = array<i64: 72, 32>}, {pipeline_mode = #tpu.pipeline_mode<synchronous>, transform_indices = @transform_2, window_bounds = array<i64: 1, 16>}, {pipeline_mode = #tpu.pipeline_mode<synchronous>, transform_indices = @transform_3, window_bounds = array<i64: 144, 16>}, {pipeline_mode = #tpu.pipeline_mode<synchronous>, transform_indices = @transform_4, window_bounds = array<i64: 1, 16>}, {transform_indices = @transform_5, window_bounds = array<i64: 1, 16, 16, 16>}]} {
    %c0 = arith.constant 0 : index
    %c0_0 = arith.constant 0 : index
    %c0_1 = arith.constant 0 : index
    %c0_2 = arith.constant 0 : index
    %0 = vector.load %arg1[%c0, %c0_0, %c0_1, %c0_2] : memref<1x16x16x8xbf16, #tpu.memory_space<vmem>>, vector<1x16x16x8xbf16>
    %1 = vector.shape_cast %0 : vector<1x16x16x8xbf16> to vector<16x16x8xbf16>
    %cst = arith.constant 0.000000e+00 : bf16
    %2 = vector.broadcast %cst : bf16 to vector<1x18x8xbf16>
    %cst_3 = arith.constant 0.000000e+00 : bf16
    %3 = vector.broadcast %cst_3 : bf16 to vector<16x1x8xbf16>
    %c0_4 = arith.constant 0 : index
    %c0_5 = arith.constant 0 : index
    %c0_6 = arith.constant 0 : index
    %4 = vector.load %arg7[%c0_4, %c0_5, %c0_6] : memref<18x18x8xbf16, #tpu.memory_space<vmem>>, vector<1x18x8xbf16>
    tpu.vector_store %arg7[%c0_4, %c0_5, %c0_6], %2 {strides = array<i32>} : memref<18x18x8xbf16, #tpu.memory_space<vmem>>, vector<1x18x8xbf16>,
    %c17 = arith.constant 17 : index
    %c0_7 = arith.constant 0 : index
    %c0_8 = arith.constant 0 : index
    %5 = vector.load %arg7[%c17, %c0_7, %c0_8] : memref<18x18x8xbf16, #tpu.memory_space<vmem>>, vector<1x18x8xbf16>
    tpu.vector_store %arg7[%c17, %c0_7, %c0_8], %2 {strides = array<i32>} : memref<18x18x8xbf16, #tpu.memory_space<vmem>>, vector<1x18x8xbf16>,
    %c1 = arith.constant 1 : index
    %c0_9 = arith.constant 0 : index
    %c0_10 = arith.constant 0 : index
    %6 = vector.load %arg7[%c1, %c0_9, %c0_10] : memref<18x18x8xbf16, #tpu.memory_space<vmem>>, vector<16x1x8xbf16>
    tpu.vector_store %arg7[%c1, %c0_9, %c0_10], %3 {strides = array<i32>} : memref<18x18x8xbf16, #tpu.memory_space<vmem>>, vector<16x1x8xbf16>,
    %c1_11 = arith.constant 1 : index
    %c17_12 = arith.constant 17 : index
    %c0_13 = arith.constant 0 : index
    %7 = vector.load %arg7[%c1_11, %c17_12, %c0_13] : memref<18x18x8xbf16, #tpu.memory_space<vmem>>, vector<16x1x8xbf16>
    tpu.vector_store %arg7[%c1_11, %c17_12, %c0_13], %3 {strides = array<i32>} : memref<18x18x8xbf16, #tpu.memory_space<vmem>>, vector<16x1x8xbf16>,
    %c1_14 = arith.constant 1 : index
    %c1_15 = arith.constant 1 : index
    %c0_16 = arith.constant 0 : index
    %8 = vector.load %arg7[%c1_14, %c1_15, %c0_16] : memref<18x18x8xbf16, #tpu.memory_space<vmem>>, vector<16x16x8xbf16>
    tpu.vector_store %arg7[%c1_14, %c1_15, %c0_16], %1 {strides = array<i32>} : memref<18x18x8xbf16, #tpu.memory_space<vmem>>, vector<16x16x8xbf16>,
    %c0_17 = arith.constant 0 : index
    %c0_18 = arith.constant 0 : index
    %c0_19 = arith.constant 0 : index
    %9 = vector.load %arg7[%c0_17, %c0_18, %c0_19] : memref<18x18x8xbf16, #tpu.memory_space<vmem>>, vector<16x16x8xbf16>
    %c0_20 = arith.constant 0 : index
    %c1_21 = arith.constant 1 : index
    %c0_22 = arith.constant 0 : index
    %10 = vector.load %arg7[%c0_20, %c1_21, %c0_22] : memref<18x18x8xbf16, #tpu.memory_space<vmem>>, vector<16x16x8xbf16>
    %c0_23 = arith.constant 0 : index
    %c2 = arith.constant 2 : index
    %c0_24 = arith.constant 0 : index
    %11 = vector.load %arg7[%c0_23, %c2, %c0_24] : memref<18x18x8xbf16, #tpu.memory_space<vmem>>, vector<16x16x8xbf16>
    %c1_25 = arith.constant 1 : index
    %c0_26 = arith.constant 0 : index
    %c0_27 = arith.constant 0 : index
    %12 = vector.load %arg7[%c1_25, %c0_26, %c0_27] : memref<18x18x8xbf16, #tpu.memory_space<vmem>>, vector<16x16x8xbf16>
    %c1_28 = arith.constant 1 : index
    %c1_29 = arith.constant 1 : index
    %c0_30 = arith.constant 0 : index
    %13 = vector.load %arg7[%c1_28, %c1_29, %c0_30] : memref<18x18x8xbf16, #tpu.memory_space<vmem>>, vector<16x16x8xbf16>
    %c1_31 = arith.constant 1 : index
    %c2_32 = arith.constant 2 : index
    %c0_33 = arith.constant 0 : index
    %14 = vector.load %arg7[%c1_31, %c2_32, %c0_33] : memref<18x18x8xbf16, #tpu.memory_space<vmem>>, vector<16x16x8xbf16>
    %c2_34 = arith.constant 2 : index
    %c0_35 = arith.constant 0 : index
    %c0_36 = arith.constant 0 : index
    %15 = vector.load %arg7[%c2_34, %c0_35, %c0_36] : memref<18x18x8xbf16, #tpu.memory_space<vmem>>, vector<16x16x8xbf16>
    %c2_37 = arith.constant 2 : index
    %c1_38 = arith.constant 1 : index
    %c0_39 = arith.constant 0 : index
    %16 = vector.load %arg7[%c2_37, %c1_38, %c0_39] : memref<18x18x8xbf16, #tpu.memory_space<vmem>>, vector<16x16x8xbf16>
    %c2_40 = arith.constant 2 : index
    %c2_41 = arith.constant 2 : index
    %c0_42 = arith.constant 0 : index
    %17 = vector.load %arg7[%c2_40, %c2_41, %c0_42] : memref<18x18x8xbf16, #tpu.memory_space<vmem>>, vector<16x16x8xbf16>
    %18 = tpu.concatenate %9, %10, %11, %12, %13, %14, %15, %16, %17 in 2 : vector<16x16x8xbf16>, vector<16x16x8xbf16>, vector<16x16x8xbf16>, vector<16x16x8xbf16>, vector<16x16x8xbf16>, vector<16x16x8xbf16>, vector<16x16x8xbf16>, vector<16x16x8xbf16>, vector<16x16x8xbf16> -> vector<16x16x72xbf16>
    %19 = vector.shape_cast %18 : vector<16x16x72xbf16> to vector<256x72xbf16>
    %c0_43 = arith.constant 0 : index
    %c0_44 = arith.constant 0 : index
    %20 = vector.load %arg2[%c0_43, %c0_44] : memref<72x32xbf16, #tpu.memory_space<vmem>>, vector<72x32xbf16>
    %cst_45 = arith.constant dense<0.000000e+00> : vector<256x32xf32>
    %21 = tpu.matmul %19, %20, %cst_45 {dimension_numbers = #tpu.dot_dimension_numbers<[1], [0], [0], [1], [0, 0, 1, 1], [], []>} : vector<256x72xbf16>, vector<72x32xbf16>, vector<256x32xf32> -> vector<256x32xf32>
    %22 = vector.extract_strided_slice %21 {offsets = [0, 0], sizes = [256, 16], strides = [1, 1]} : vector<256x32xf32> to vector<256x16xf32>
    %c0_46 = arith.constant 0 : index
    %c0_47 = arith.constant 0 : index
    %23 = vector.load %arg3[%c0_46, %c0_47] : memref<1x16xf32, #tpu.memory_space<vmem>>, vector<1x16xf32>
    %24 = vector.broadcast %23 : vector<1x16xf32> to vector<256x16xf32>
    %25 = arith.addf %22, %24 : vector<256x16xf32>
    %cst_48 = arith.constant 0.000000e+00 : f32
    %26 = vector.broadcast %cst_48 : f32 to vector<256x16xf32>
    %27 = arith.maximumf %25, %26 : vector<256x16xf32>
    %28 = vector.extract_strided_slice %21 {offsets = [0, 16], sizes = [256, 16], strides = [1, 1]} : vector<256x32xf32> to vector<256x16xf32>
    %29 = vector.shape_cast %27 : vector<256x16xf32> to vector<16x16x16xf32>
    %30 = arith.truncf %29 : vector<16x16x16xf32> to vector<16x16x16xbf16>
    %cst_49 = arith.constant 0.000000e+00 : bf16
    %31 = vector.broadcast %cst_49 : bf16 to vector<1x18x16xbf16>
    %cst_50 = arith.constant 0.000000e+00 : bf16
    %32 = vector.broadcast %cst_50 : bf16 to vector<16x1x16xbf16>
    %c0_51 = arith.constant 0 : index
    %c0_52 = arith.constant 0 : index
    %c0_53 = arith.constant 0 : index
    %33 = vector.load %arg8[%c0_51, %c0_52, %c0_53] : memref<18x18x16xbf16, #tpu.memory_space<vmem>>, vector<1x18x16xbf16>
    tpu.vector_store %arg8[%c0_51, %c0_52, %c0_53], %31 {strides = array<i32>} : memref<18x18x16xbf16, #tpu.memory_space<vmem>>, vector<1x18x16xbf16>,
    %c17_54 = arith.constant 17 : index
    %c0_55 = arith.constant 0 : index
    %c0_56 = arith.constant 0 : index
    %34 = vector.load %arg8[%c17_54, %c0_55, %c0_56] : memref<18x18x16xbf16, #tpu.memory_space<vmem>>, vector<1x18x16xbf16>
    tpu.vector_store %arg8[%c17_54, %c0_55, %c0_56], %31 {strides = array<i32>} : memref<18x18x16xbf16, #tpu.memory_space<vmem>>, vector<1x18x16xbf16>,
    %c1_57 = arith.constant 1 : index
    %c0_58 = arith.constant 0 : index
    %c0_59 = arith.constant 0 : index
    %35 = vector.load %arg8[%c1_57, %c0_58, %c0_59] : memref<18x18x16xbf16, #tpu.memory_space<vmem>>, vector<16x1x16xbf16>
    tpu.vector_store %arg8[%c1_57, %c0_58, %c0_59], %32 {strides = array<i32>} : memref<18x18x16xbf16, #tpu.memory_space<vmem>>, vector<16x1x16xbf16>,
    %c1_60 = arith.constant 1 : index
    %c17_61 = arith.constant 17 : index
    %c0_62 = arith.constant 0 : index
    %36 = vector.load %arg8[%c1_60, %c17_61, %c0_62] : memref<18x18x16xbf16, #tpu.memory_space<vmem>>, vector<16x1x16xbf16>
    tpu.vector_store %arg8[%c1_60, %c17_61, %c0_62], %32 {strides = array<i32>} : memref<18x18x16xbf16, #tpu.memory_space<vmem>>, vector<16x1x16xbf16>,
    %c1_63 = arith.constant 1 : index
    %c1_64 = arith.constant 1 : index
    %c0_65 = arith.constant 0 : index
    %37 = vector.load %arg8[%c1_63, %c1_64, %c0_65] : memref<18x18x16xbf16, #tpu.memory_space<vmem>>, vector<16x16x16xbf16>
    tpu.vector_store %arg8[%c1_63, %c1_64, %c0_65], %30 {strides = array<i32>} : memref<18x18x16xbf16, #tpu.memory_space<vmem>>, vector<16x16x16xbf16>,
    %c0_66 = arith.constant 0 : index
    %c0_67 = arith.constant 0 : index
    %c0_68 = arith.constant 0 : index
    %38 = vector.load %arg8[%c0_66, %c0_67, %c0_68] : memref<18x18x16xbf16, #tpu.memory_space<vmem>>, vector<16x16x16xbf16>
    %c0_69 = arith.constant 0 : index
    %c1_70 = arith.constant 1 : index
    %c0_71 = arith.constant 0 : index
    %39 = vector.load %arg8[%c0_69, %c1_70, %c0_71] : memref<18x18x16xbf16, #tpu.memory_space<vmem>>, vector<16x16x16xbf16>
    %c0_72 = arith.constant 0 : index
    %c2_73 = arith.constant 2 : index
    %c0_74 = arith.constant 0 : index
    %40 = vector.load %arg8[%c0_72, %c2_73, %c0_74] : memref<18x18x16xbf16, #tpu.memory_space<vmem>>, vector<16x16x16xbf16>
    %c1_75 = arith.constant 1 : index
    %c0_76 = arith.constant 0 : index
    %c0_77 = arith.constant 0 : index
    %41 = vector.load %arg8[%c1_75, %c0_76, %c0_77] : memref<18x18x16xbf16, #tpu.memory_space<vmem>>, vector<16x16x16xbf16>
    %c1_78 = arith.constant 1 : index
    %c1_79 = arith.constant 1 : index
    %c0_80 = arith.constant 0 : index
    %42 = vector.load %arg8[%c1_78, %c1_79, %c0_80] : memref<18x18x16xbf16, #tpu.memory_space<vmem>>, vector<16x16x16xbf16>
    %c1_81 = arith.constant 1 : index
    %c2_82 = arith.constant 2 : index
    %c0_83 = arith.constant 0 : index
    %43 = vector.load %arg8[%c1_81, %c2_82, %c0_83] : memref<18x18x16xbf16, #tpu.memory_space<vmem>>, vector<16x16x16xbf16>
    %c2_84 = arith.constant 2 : index
    %c0_85 = arith.constant 0 : index
    %c0_86 = arith.constant 0 : index
    %44 = vector.load %arg8[%c2_84, %c0_85, %c0_86] : memref<18x18x16xbf16, #tpu.memory_space<vmem>>, vector<16x16x16xbf16>
    %c2_87 = arith.constant 2 : index
    %c1_88 = arith.constant 1 : index
    %c0_89 = arith.constant 0 : index
    %45 = vector.load %arg8[%c2_87, %c1_88, %c0_89] : memref<18x18x16xbf16, #tpu.memory_space<vmem>>, vector<16x16x16xbf16>
    %c2_90 = arith.constant 2 : index
    %c2_91 = arith.constant 2 : index
    %c0_92 = arith.constant 0 : index
    %46 = vector.load %arg8[%c2_90, %c2_91, %c0_92] : memref<18x18x16xbf16, #tpu.memory_space<vmem>>, vector<16x16x16xbf16>
    %47 = tpu.concatenate %38, %39, %40, %41, %42, %43, %44, %45, %46 in 2 : vector<16x16x16xbf16>, vector<16x16x16xbf16>, vector<16x16x16xbf16>, vector<16x16x16xbf16>, vector<16x16x16xbf16>, vector<16x16x16xbf16>, vector<16x16x16xbf16>, vector<16x16x16xbf16>, vector<16x16x16xbf16> -> vector<16x16x144xbf16>
    %48 = vector.shape_cast %47 : vector<16x16x144xbf16> to vector<256x144xbf16>
    %c0_93 = arith.constant 0 : index
    %c0_94 = arith.constant 0 : index
    %49 = vector.load %arg4[%c0_93, %c0_94] : memref<144x16xbf16, #tpu.memory_space<vmem>>, vector<144x16xbf16>
    %cst_95 = arith.constant dense<0.000000e+00> : vector<256x16xf32>
    %50 = tpu.matmul %48, %49, %cst_95 {dimension_numbers = #tpu.dot_dimension_numbers<[1], [0], [0], [1], [0, 0, 1, 1], [], []>} : vector<256x144xbf16>, vector<144x16xbf16>, vector<256x16xf32> -> vector<256x16xf32>
    %51 = arith.addf %50, %28 : vector<256x16xf32>
    %c0_96 = arith.constant 0 : index
    %c0_97 = arith.constant 0 : index
    %52 = vector.load %arg5[%c0_96, %c0_97] : memref<1x16xf32, #tpu.memory_space<vmem>>, vector<1x16xf32>
    %53 = vector.broadcast %52 : vector<1x16xf32> to vector<256x16xf32>
    %54 = arith.addf %51, %53 : vector<256x16xf32>
    %cst_98 = arith.constant 0.000000e+00 : f32
    %55 = vector.broadcast %cst_98 : f32 to vector<256x16xf32>
    %56 = arith.maximumf %54, %55 : vector<256x16xf32>
    %57 = vector.shape_cast %56 : vector<256x16xf32> to vector<1x16x16x16xf32>
    %c0_99 = arith.constant 0 : index
    %c0_100 = arith.constant 0 : index
    %c0_101 = arith.constant 0 : index
    %c0_102 = arith.constant 0 : index
    %58 = vector.load %arg6[%c0_99, %c0_100, %c0_101, %c0_102] : memref<1x16x16x16xf32, #tpu.memory_space<vmem>>, vector<1x16x16x16xf32>
    tpu.vector_store %arg6[%c0_99, %c0_100, %c0_101, %c0_102], %57 {strides = array<i32>} : memref<1x16x16x16xf32, #tpu.memory_space<vmem>>, vector<1x16x16x16xf32>,
    return
  }
  func.func @transform_0(%arg0: i32) -> (i32, i32, i32, i32) {
    %c0_i32 = arith.constant 0 : i32
    %c0_i32_0 = arith.constant 0 : i32
    %c0_i32_1 = arith.constant 0 : i32
    %c0_i32_2 = arith.constant 0 : i32
    return %arg0, %c0_i32, %c0_i32_0, %c0_i32_1 : i32, i32, i32, i32
  }
  func.func @transform_1(%arg0: i32) -> (i32, i32) {
    %c0_i32 = arith.constant 0 : i32
    %c0_i32_0 = arith.constant 0 : i32
    %c0_i32_1 = arith.constant 0 : i32
    return %c0_i32, %c0_i32_0 : i32, i32
  }
  func.func @transform_2(%arg0: i32) -> (i32, i32) {
    %c0_i32 = arith.constant 0 : i32
    %c0_i32_0 = arith.constant 0 : i32
    %c0_i32_1 = arith.constant 0 : i32
    return %c0_i32, %c0_i32_0 : i32, i32
  }
  func.func @transform_3(%arg0: i32) -> (i32, i32) {
    %c0_i32 = arith.constant 0 : i32
    %c0_i32_0 = arith.constant 0 : i32
    %c0_i32_1 = arith.constant 0 : i32
    return %c0_i32, %c0_i32_0 : i32, i32
  }
  func.func @transform_4(%arg0: i32) -> (i32, i32) {
    %c0_i32 = arith.constant 0 : i32
    %c0_i32_0 = arith.constant 0 : i32
    %c0_i32_1 = arith.constant 0 : i32
    return %c0_i32, %c0_i32_0 : i32, i32
  }
  func.func @transform_5(%arg0: i32) -> (i32, i32, i32, i32) {
    %c0_i32 = arith.constant 0 : i32
    %c0_i32_0 = arith.constant 0 : i32
    %c0_i32_1 = arith.constant 0 : i32
    %c0_i32_2 = arith.constant 0 : i32
    return %arg0, %c0_i32, %c0_i32_0, %c0_i32_1 : i32, i32, i32, i32
  }
}

</mosaic_0001>

<llo_original>
// kernel: tpu_custom_call.1
$region0: #{tpu_custom_call.1}
  #allocation0 [shape = 'u32[]', space=smem, size = 0x4, offset = 0x4, fixed_abs, tag = 'smem constant byte address 0x4 - core index']
  #allocation1 [shape = 'u32[144,128]{1,0:T(1,128)}', space=vmem, size = 0x12000, scoped, tag = 'internal scratch']
  #allocation2 [shape = 'bf16[18,18,8]{2,1,0:T(8,128)(2,1)}', space=vmem, size = 0x1b000, scoped, tag = 'scratch operand']
  #allocation3 [shape = 'bf16[18,18,16]{2,1,0:T(8,128)(2,1)}', space=vmem, size = 0x1b000, scoped, tag = 'scratch operand']
  %s0 = inlined_call_operand.vmem [shape: bf16[2,16,16,8], index: 0, kind: input, shape index: {}]
  %s1 = inlined_call_operand.vmem [shape: bf16[72,32], index: 1, kind: input, shape index: {}]
  %s2 = inlined_call_operand.vmem [shape: f32[1,16], index: 2, kind: input, shape index: {}]
  %s3 = inlined_call_operand.vmem [shape: bf16[144,16], index: 3, kind: input, shape index: {}]
  %s4 = inlined_call_operand.vmem [shape: f32[1,16], index: 4, kind: input, shape index: {}]
  %s5 = inlined_call_operand.hbm [shape: f32[2,16,16,16], index: 5, kind: output, shape index: {}]
  %s6 = sld [smem:[#allocation0]]
  $region53: #{tpu_custom_call.1} parent=0
    _
  %s8 = ssub.s32 1, %s6
  %s9 = scalar_select 0, %s8, %s6
  $region1: #{tpu_custom_call.1} parent=0
    #allocation4 [shape = 'u8[262144]{0}', space=vmem, size = 0x40000, scoped, tag = 'output window, operand 0']
    #allocation5 [shape = 's32[2]{0}', space=sflag, size = 0x8, scoped, tag = 'scoped memory for tpu_custom_call.1']
    %10 = vsyncpa [#allocation5], 0
    %s11 = scalar_lea.sflag [#allocation5], 1
    %12 = vsyncpa %s11, 0
    loop: start=0, step=1, limit=4
    $region2: #{tpu_custom_call.1} parent=1 // loop_pre_header
      _
    $region3: #{tpu_custom_call.1} parent=1 // loop_header
      %s14 = sphi 0, %s18
      %p15 = scmp.ge.s32.totalorder %s14, 4
      %s24 = sphi 0, %s26
      %s27 = sphi 0, %s24
      %s28 = sphi 0, %s27
      %s44 = sphi 0, %s28
      %s48 = sphi 0, %s48
      %s50 = sphi 0, %s48
      %s51 = sphi 0, %s50
      %s65 = sphi 0, %s51
      %s69 = sphi 0, %s69
      %s71 = sphi 0, %s69
      %s72 = sphi 0, %s71
      %s86 = sphi 0, %s72
      %s90 = sphi 0, %s90
      %s92 = sphi 0, %s90
      %s93 = sphi 0, %s92
      %s107 = sphi 0, %s93
      %s111 = sphi 0, %s111
      %s113 = sphi 0, %s111
      %s114 = sphi 0, %s113
      %s128 = sphi 0, %s114
      %s134 = sphi 0, %s136
      %s137 = sphi 0, %s134
      %s138 = sphi 0, %s137
      %s154 = sphi 0, %s138
    $region4: #{tpu_custom_call.1} parent=1 // loop_header_branch
      %17 = sbr.rel (%p15) target = $region8
    $region5: #{tpu_custom_call.1} parent=1 // loop_body
      %s19 = ssub.s32 %s14, 1
      %s20 = ssub.s32 %s14, 2
      %s21 = sadd.s32 %s14, 1
      %s22 = ssub.s32 %s14, %s21
      %p23 = scmp.eq.s32.totalorder %s22, 0
      %s25 = sadd.s32 %s24, 1
      %s26 = scalar_select %p23, %s24, %s25
      %p29 = pneg %p23
      %p30 = scmp.eq.s32.totalorder %s14, 1
      %p31 = por %p29, %p30
      %p32 = scmp.ne.s32.totalorder %s24, %s27
      %p33 = scmp.eq.s32.totalorder %s14, 0
      %p34 = por %p32, %p33
      %p35 = scmp.ne.s32.totalorder %s24, %s27
      %p36 = scmp.eq.s32.totalorder %s19, 1
      %p37 = por %p35, %p36
      %p38 = scmp.ne.s32.totalorder %s27, %s28
      %p39 = scmp.eq.s32.totalorder %s19, 0
      %p40 = por %p38, %p39
      %p41 = scmp.ne.s32.totalorder %s27, %s28
      %p42 = scmp.eq.s32.totalorder %s20, 1
      %p43 = por %p41, %p42
      %p45 = scmp.ne.s32.totalorder %s28, %s44
      %p46 = scmp.eq.s32.totalorder %s20, 0
      %p47 = por %p45, %p46
      %s49 = sadd.s32 %s48, 1
      %p52 = scmp.eq.s32.totalorder %s14, 1
      %p53 = scmp.ne.s32.totalorder %s48, %s50
      %p54 = scmp.eq.s32.totalorder %s14, 0
      %p55 = por %p53, %p54
      %p56 = scmp.ne.s32.totalorder %s48, %s50
      %p57 = scmp.eq.s32.totalorder %s19, 1
      %p58 = por %p56, %p57
      %p59 = scmp.ne.s32.totalorder %s50, %s51
      %p60 = scmp.eq.s32.totalorder %s19, 0
      %p61 = por %p59, %p60
      %p62 = scmp.ne.s32.totalorder %s50, %s51
      %p63 = scmp.eq.s32.totalorder %s20, 1
      %p64 = por %p62, %p63
      %p66 = scmp.ne.s32.totalorder %s51, %s65
      %p67 = scmp.eq.s32.totalorder %s20, 0
      %p68 = por %p66, %p67
      %s70 = sadd.s32 %s69, 1
      %p73 = scmp.eq.s32.totalorder %s14, 1
      %p74 = scmp.ne.s32.totalorder %s69, %s71
      %p75 = scmp.eq.s32.totalorder %s14, 0
      %p76 = por %p74, %p75
      %p77 = scmp.ne.s32.totalorder %s69, %s71
      %p78 = scmp.eq.s32.totalorder %s19, 1
      %p79 = por %p77, %p78
      %p80 = scmp.ne.s32.totalorder %s71, %s72
      %p81 = scmp.eq.s32.totalorder %s19, 0
      %p82 = por %p80, %p81
      %p83 = scmp.ne.s32.totalorder %s71, %s72
      %p84 = scmp.eq.s32.totalorder %s20, 1
      %p85 = por %p83, %p84
      %p87 = scmp.ne.s32.totalorder %s72, %s86
      %p88 = scmp.eq.s32.totalorder %s20, 0
      %p89 = por %p87, %p88
      %s91 = sadd.s32 %s90, 1
      %p94 = scmp.eq.s32.totalorder %s14, 1
      %p95 = scmp.ne.s32.totalorder %s90, %s92
      %p96 = scmp.eq.s32.totalorder %s14, 0
      %p97 = por %p95, %p96
      %p98 = scmp.ne.s32.totalorder %s90, %s92
      %p99 = scmp.eq.s32.totalorder %s19, 1
      %p100 = por %p98, %p99
      %p101 = scmp.ne.s32.totalorder %s92, %s93
      %p102 = scmp.eq.s32.totalorder %s19, 0
      %p103 = por %p101, %p102
      %p104 = scmp.ne.s32.totalorder %s92, %s93
      %p105 = scmp.eq.s32.totalorder %s20, 1
      %p106 = por %p104, %p105
      %p108 = scmp.ne.s32.totalorder %s93, %s107
      %p109 = scmp.eq.s32.totalorder %s20, 0
      %p110 = por %p108, %p109
      %s112 = sadd.s32 %s111, 1
      %p115 = scmp.eq.s32.totalorder %s14, 1
      %p116 = scmp.ne.s32.totalorder %s111, %s113
      %p117 = scmp.eq.s32.totalorder %s14, 0
      %p118 = por %p116, %p117
      %p119 = scmp.ne.s32.totalorder %s111, %s113
      %p120 = scmp.eq.s32.totalorder %s19, 1
      %p121 = por %p119, %p120
      %p122 = scmp.ne.s32.totalorder %s113, %s114
      %p123 = scmp.eq.s32.totalorder %s19, 0
      %p124 = por %p122, %p123
      %p125 = scmp.ne.s32.totalorder %s113, %s114
      %p126 = scmp.eq.s32.totalorder %s20, 1
      %p127 = por %p125, %p126
      %p129 = scmp.ne.s32.totalorder %s114, %s128
      %p130 = scmp.eq.s32.totalorder %s20, 0
      %p131 = por %p129, %p130
      %s132 = ssub.s32 %s14, %s21
      %p133 = scmp.eq.s32.totalorder %s132, 0
      %s135 = sadd.s32 %s134, 1
      %s136 = scalar_select %p133, %s134, %s135
      %p139 = pneg %p133
      %p140 = scmp.eq.s32.totalorder %s14, 1
      %p141 = por %p139, %p140
      %p142 = scmp.ne.s32.totalorder %s134, %s137
      %p143 = scmp.eq.s32.totalorder %s14, 0
      %p144 = por %p142, %p143
      %p145 = scmp.ne.s32.totalorder %s134, %s137
      %p146 = scmp.eq.s32.totalorder %s19, 1
      %p147 = por %p145, %p146
      %p148 = scmp.ne.s32.totalorder %s137, %s138
      %p149 = scmp.eq.s32.totalorder %s19, 0
      %p150 = por %p148, %p149
      %p151 = scmp.ne.s32.totalorder %s137, %s138
      %p152 = scmp.eq.s32.totalorder %s20, 1
      %p153 = por %p151, %p152
      %p155 = scmp.ne.s32.totalorder %s138, %s154
      %p156 = scmp.eq.s32.totalorder %s20, 0
      %p157 = por %p155, %p156
      %p158 = scmp.le.s32.totalorder 1, %s14
      %p159 = scmp.lt.s32.totalorder %s14, 3
      %p160 = pnand %p158, %p159
      %p161 = pneg %p160
      // Predicated region
      $region9: #{tpu_custom_call.1} parent=5 // pred_check
        _
      $region10: #{tpu_custom_call.1} parent=5 // pred_check_branch
        %163 = sbr.rel (%p160) target = $region12
      $region11: #{tpu_custom_call.1} parent=5 // pred_region
        %s164 = ssub.s32 %s14, 1
        // Predicated region
        $region13: #{tpu_custom_call.1} parent=11 // pred_check
          %p165 = pneg %p61
        $region14: #{tpu_custom_call.1} parent=11 // pred_check_branch
          %167 = sbr.rel (%p165) target = $region16
        $region15: #{tpu_custom_call.1} parent=11 // pred_region
          _
        $region16: #{tpu_custom_call.1} parent=11 // pred_fallthru
          _
        // Predicated region
        $region17: #{tpu_custom_call.1} parent=11 // pred_check
          %p168 = pneg %p82
        $region18: #{tpu_custom_call.1} parent=11 // pred_check_branch
          %170 = sbr.rel (%p168) target = $region20
        $region19: #{tpu_custom_call.1} parent=11 // pred_region
          _
        $region20: #{tpu_custom_call.1} parent=11 // pred_fallthru
          _
        // Predicated region
        $region21: #{tpu_custom_call.1} parent=11 // pred_check
          %p171 = pneg %p103
        $region22: #{tpu_custom_call.1} parent=11 // pred_check_branch
          %173 = sbr.rel (%p171) target = $region24
        $region23: #{tpu_custom_call.1} parent=11 // pred_region
          _
        $region24: #{tpu_custom_call.1} parent=11 // pred_fallthru
          _
        // Predicated region
        $region25: #{tpu_custom_call.1} parent=11 // pred_check
          %p174 = pneg %p124
        $region26: #{tpu_custom_call.1} parent=11 // pred_check_branch
          %176 = sbr.rel (%p174) target = $region28
        $region27: #{tpu_custom_call.1} parent=11 // pred_region
          _
        $region28: #{tpu_custom_call.1} parent=11 // pred_fallthru
          _
      $region12: #{tpu_custom_call.1} parent=5 // pred_fallthru
        _
      %p177 = scmp.lt.s32.totalorder %s14, 2
      // Predicated region
      $region29: #{tpu_custom_call.1} parent=5 // pred_check
        %p178 = pneg %p177
      $region30: #{tpu_custom_call.1} parent=5 // pred_check_branch
        %180 = sbr.rel (%p178) target = $region32
      $region31: #{tpu_custom_call.1} parent=5 // pred_region
        // Predicated region
        $region33: #{tpu_custom_call.1} parent=31 // pred_check
          %p181 = pneg %p34
        $region34: #{tpu_custom_call.1} parent=31 // pred_check_branch
          %183 = sbr.rel (%p181) target = $region36
        $region35: #{tpu_custom_call.1} parent=31 // pred_region
          %p184 = scmp.lt.s32.totalorder %s14, 1
          %s185 = scalar_select %p184, %s14, 1
          %s186 = smul.addr %s185, 32
          %s187 = smul.addr %s186, 4
          %s188 = scalar_lea.vmem %s0, %s187
        $region36: #{tpu_custom_call.1} parent=31 // pred_fallthru
          _
      $region32: #{tpu_custom_call.1} parent=5 // pred_fallthru
        _
      %p189 = scmp.le.s32.totalorder 1, %s14
      %p190 = scmp.lt.s32.totalorder %s14, 3
      %p191 = pnand %p189, %p190
      %p192 = pneg %p191
      // Predicated region
      $region37: #{tpu_custom_call.1} parent=5 // pred_check
        _
      $region38: #{tpu_custom_call.1} parent=5 // pred_check_branch
        %194 = sbr.rel (%p191) target = $region40
      $region39: #{tpu_custom_call.1} parent=5 // pred_region
        %s195 = ssub.s32 %s14, 1
        %p196 = scmp.lt.s32.totalorder %s19, 1
        %s197 = scalar_select %p196, %s19, 1
        %s198 = smul.addr %s197, 32
        %s199 = smul.addr %s198, 4
        %s200 = scalar_lea.vmem %s0, %s199
        %p201 = pneg %p40
        %p202 = pneg %p37
        %p203 = pneg %p61
        %p204 = pneg %p58
        %p205 = pneg %p82
        %p206 = pneg %p79
        %p207 = pneg %p103
        %p208 = pneg %p100
        %p209 = pneg %p124
        %p210 = pneg %p121
        %p211 = pneg %p150
        %p212 = pneg %p147
        %s213 = sand.u32 %s137, 1
        %s214 = scalar_lea.sflag [#allocation5], %s213
        %s215 = sand.u32 %s137, 1
        %s216 = smul.addr %s215, 256
        %s217 = scalar_lea.vmem [#allocation4], %s216
        %p218 = scmp.lt.s32.totalorder %s19, 1
        %s219 = scalar_select %p218, %s19, 1
        %s220 = smul.addr %s219, 32
        %s221 = smul.addr %s220, 4
        %s222 = scalar_lea.vmem %s0, %s221
        %v224 = vld [vmem:[%s222] sm:$0xf]
        %v225 = vld [vmem:[%s222 + $0x4] sm:$0xf]
        %v226 = vld [vmem:[%s222 + $0x8] sm:$0xf]
        %v227 = vld [vmem:[%s222 + $0xc] sm:$0xf]
        %v228 = vld [vmem:[%s222 + $0x10] sm:$0xf]
        %v229 = vld [vmem:[%s222 + $0x14] sm:$0xf]
        %v230 = vld [vmem:[%s222 + $0x18] sm:$0xf]
        %v231 = vld [vmem:[%s222 + $0x1c] sm:$0xf]
        %v232 = vld [vmem:[%s222 + $0x20] sm:$0xf]
        %v233 = vld [vmem:[%s222 + $0x24] sm:$0xf]
        %v234 = vld [vmem:[%s222 + $0x28] sm:$0xf]
        %v235 = vld [vmem:[%s222 + $0x2c] sm:$0xf]
        %v236 = vld [vmem:[%s222 + $0x30] sm:$0xf]
        %v237 = vld [vmem:[%s222 + $0x34] sm:$0xf]
        %v238 = vld [vmem:[%s222 + $0x38] sm:$0xf]
        %v239 = vld [vmem:[%s222 + $0x3c] sm:$0xf]
        %v240 = vld [vmem:[%s222 + $0x40] sm:$0xf]
        %v241 = vld [vmem:[%s222 + $0x44] sm:$0xf]
        %v242 = vld [vmem:[%s222 + $0x48] sm:$0xf]
        %v243 = vld [vmem:[%s222 + $0x4c] sm:$0xf]
        %v244 = vld [vmem:[%s222 + $0x50] sm:$0xf]
        %v245 = vld [vmem:[%s222 + $0x54] sm:$0xf]
        %v246 = vld [vmem:[%s222 + $0x58] sm:$0xf]
        %v247 = vld [vmem:[%s222 + $0x5c] sm:$0xf]
        %v248 = vld [vmem:[%s222 + $0x60] sm:$0xf]
        %v249 = vld [vmem:[%s222 + $0x64] sm:$0xf]
        %v250 = vld [vmem:[%s222 + $0x68] sm:$0xf]
        %v251 = vld [vmem:[%s222 + $0x6c] sm:$0xf]
        %v252 = vld [vmem:[%s222 + $0x70] sm:$0xf]
        %v253 = vld [vmem:[%s222 + $0x74] sm:$0xf]
        %v254 = vld [vmem:[%s222 + $0x78] sm:$0xf]
        %v255 = vld [vmem:[%s222 + $0x7c] sm:$0xf]
        %vm256 = vcmask 60416
        %257 = vst.msk [vmem:[#allocation2] sm:$0xf] %vm256, 0
        %258 = vst.msk [vmem:[#allocation2 + $0x4] sm:$0xf] %vm256, 0
        %vm259 = vcmask 57344
        %260 = vst.msk [vmem:[#allocation2 + $0x8] sm:$0x1] %vm259, 0
        %s261 = scalar_lea.vmem [#allocation2], 204
        %262 = vst.msk [vmem:[%s261] sm:$0xf] %vm256, 0
        %263 = vst.msk [vmem:[%s261 + $0x4] sm:$0xf] %vm256, 0
        %264 = vst.msk [vmem:[%s261 + $0x8] sm:$0x1] %vm259, 0
        %s265 = scalar_lea.vmem [#allocation2], 12
        %vm266 = vcmask 57344
        %vm267 = vsmask.f32 256
        %vm268 = vmand %vm266, %vm267
        %v269 = vld [vmem:[%s265] sm:$0x1]
        %v270 = vsel %vm268, 0, %v269
        %271 = vst [vmem:[%s265] sm:$0x1] %v270
        %v272 = vld [vmem:[%s265 + $0xc] sm:$0x1]
        %v273 = vsel %vm268, 0, %v272
        %274 = vst [vmem:[%s265 + $0xc] sm:$0x1] %v273
        %v275 = vld [vmem:[%s265 + $0x18] sm:$0x1]
        %v276 = vsel %vm268, 0, %v275
        %277 = vst [vmem:[%s265 + $0x18] sm:$0x1] %v276
        %v278 = vld [vmem:[%s265 + $0x24] sm:$0x1]
        %v279 = vsel %vm268, 0, %v278
        %280 = vst [vmem:[%s265 + $0x24] sm:$0x1] %v279
        %v281 = vld [vmem:[%s265 + $0x30] sm:$0x1]
        %v282 = vsel %vm268, 0, %v281
        %283 = vst [vmem:[%s265 + $0x30] sm:$0x1] %v282
        %v284 = vld [vmem:[%s265 + $0x3c] sm:$0x1]
        %v285 = vsel %vm268, 0, %v284
        %286 = vst [vmem:[%s265 + $0x3c] sm:$0x1] %v285
        %v287 = vld [vmem:[%s265 + $0x48] sm:$0x1]
        %v288 = vsel %vm268, 0, %v287
        %289 = vst [vmem:[%s265 + $0x48] sm:$0x1] %v288
        %v290 = vld [vmem:[%s265 + $0x54] sm:$0x1]
        %v291 = vsel %vm268, 0, %v290
        %292 = vst [vmem:[%s265 + $0x54] sm:$0x1] %v291
        %v293 = vld [vmem:[%s265 + $0x60] sm:$0x1]
        %v294 = vsel %vm268, 0, %v293
        %295 = vst [vmem:[%s265 + $0x60] sm:$0x1] %v294
        %v296 = vld [vmem:[%s265 + $0x6c] sm:$0x1]
        %v297 = vsel %vm268, 0, %v296
        %298 = vst [vmem:[%s265 + $0x6c] sm:$0x1] %v297
        %v299 = vld [vmem:[%s265 + $0x78] sm:$0x1]
        %v300 = vsel %vm268, 0, %v299
        %301 = vst [vmem:[%s265 + $0x78] sm:$0x1] %v300
        %v302 = vld [vmem:[%s265 + $0x84] sm:$0x1]
        %v303 = vsel %vm268, 0, %v302
        %304 = vst [vmem:[%s265 + $0x84] sm:$0x1] %v303
        %v305 = vld [vmem:[%s265 + $0x90] sm:$0x1]
        %v306 = vsel %vm268, 0, %v305
        %307 = vst [vmem:[%s265 + $0x90] sm:$0x1] %v306
        %v308 = vld [vmem:[%s265 + $0x9c] sm:$0x1]
        %v309 = vsel %vm268, 0, %v308
        %310 = vst [vmem:[%s265 + $0x9c] sm:$0x1] %v309
        %v311 = vld [vmem:[%s265 + $0xa8] sm:$0x1]
        %v312 = vsel %vm268, 0, %v311
        %313 = vst [vmem:[%s265 + $0xa8] sm:$0x1] %v312
        %v314 = vld [vmem:[%s265 + $0xb4] sm:$0x1]
        %v315 = vsel %vm268, 0, %v314
        %316 = vst [vmem:[%s265 + $0xb4] sm:$0x1] %v315
        %vm317 = vsmask.f32 7938
        %vm318 = vmand %vm266, %vm317
        %v319 = vld [vmem:[%s265 + $0x8] sm:$0x1]
        %v320 = vsel %vm318, 0, %v319
        %321 = vst [vmem:[%s265 + $0x8] sm:$0x1] %v320
        %v322 = vld [vmem:[%s265 + $0x14] sm:$0x1]
        %v323 = vsel %vm318, 0, %v322
        %324 = vst [vmem:[%s265 + $0x14] sm:$0x1] %v323
        %v325 = vld [vmem:[%s265 + $0x20] sm:$0x1]
        %v326 = vsel %vm318, 0, %v325
        %327 = vst [vmem:[%s265 + $0x20] sm:$0x1] %v326
        %v328 = vld [vmem:[%s265 + $0x2c] sm:$0x1]
        %v329 = vsel %vm318, 0, %v328
        %330 = vst [vmem:[%s265 + $0x2c] sm:$0x1] %v329
        %v331 = vld [vmem:[%s265 + $0x38] sm:$0x1]
        %v332 = vsel %vm318, 0, %v331
        %333 = vst [vmem:[%s265 + $0x38] sm:$0x1] %v332
        %v334 = vld [vmem:[%s265 + $0x44] sm:$0x1]
        %v335 = vsel %vm318, 0, %v334
        %336 = vst [vmem:[%s265 + $0x44] sm:$0x1] %v335
        %v337 = vld [vmem:[%s265 + $0x50] sm:$0x1]
        %v338 = vsel %vm318, 0, %v337
        %339 = vst [vmem:[%s265 + $0x50] sm:$0x1] %v338
        %v340 = vld [vmem:[%s265 + $0x5c] sm:$0x1]
        %v341 = vsel %vm318, 0, %v340
        %342 = vst [vmem:[%s265 + $0x5c] sm:$0x1] %v341
        %v343 = vld [vmem:[%s265 + $0x68] sm:$0x1]
        %v344 = vsel %vm318, 0, %v343
        %345 = vst [vmem:[%s265 + $0x68] sm:$0x1] %v344
        %v346 = vld [vmem:[%s265 + $0x74] sm:$0x1]
        %v347 = vsel %vm318, 0, %v346
        %348 = vst [vmem:[%s265 + $0x74] sm:$0x1] %v347
        %v349 = vld [vmem:[%s265 + $0x80] sm:$0x1]
        %v350 = vsel %vm318, 0, %v349
        %351 = vst [vmem:[%s265 + $0x80] sm:$0x1] %v350
        %v352 = vld [vmem:[%s265 + $0x8c] sm:$0x1]
        %v353 = vsel %vm318, 0, %v352
        %354 = vst [vmem:[%s265 + $0x8c] sm:$0x1] %v353
        %v355 = vld [vmem:[%s265 + $0x98] sm:$0x1]
        %v356 = vsel %vm318, 0, %v355
        %357 = vst [vmem:[%s265 + $0x98] sm:$0x1] %v356
        %v358 = vld [vmem:[%s265 + $0xa4] sm:$0x1]
        %v359 = vsel %vm318, 0, %v358
        %360 = vst [vmem:[%s265 + $0xa4] sm:$0x1] %v359
        %v361 = vld [vmem:[%s265 + $0xb0] sm:$0x1]
        %v362 = vsel %vm318, 0, %v361
        %363 = vst [vmem:[%s265 + $0xb0] sm:$0x1] %v362
        %v364 = vld [vmem:[%s265 + $0xbc] sm:$0x1]
        %v365 = vsel %vm318, 0, %v364
        %366 = vst [vmem:[%s265 + $0xbc] sm:$0x1] %v365
        %vm367 = vsmask.f32 4368
        %vm368 = vmor %vm267, %vm367
        %v370 = vshrl.u32 %v224, 16
        %v372 = vrot.slane %v370, 7
        %v373 = vshll.u32 %v224, 16
        %v375 = vor.u32 %v372, %v373
        %v376 = vrot.slane %v372, 4
        %v378 = vshrl.u32 %v225, 16
        %v380 = vrot.slane %v378, 7
        %v381 = vshll.u32 %v225, 16
        %v383 = vor.u32 %v380, %v381
        %v384 = vsel %vm368, %v376, %v383
        %v385 = vrot.slane %v380, 4
        %v387 = vshrl.u32 %v226, 16
        %v389 = vrot.slane %v387, 7
        %v390 = vshll.u32 %v226, 16
        %v392 = vor.u32 %v389, %v390
        %v393 = vrot.slane %v389, 4
        %v395 = vshrl.u32 %v227, 16
        %v397 = vrot.slane %v395, 7
        %v398 = vshll.u32 %v227, 16
        %v400 = vor.u32 %v397, %v398
        %v401 = vsel %vm368, %v393, %v400
        %v402 = vrot.slane %v397, 4
        %v404 = vshrl.u32 %v228, 16
        %v406 = vrot.slane %v404, 7
        %v407 = vshll.u32 %v228, 16
        %v409 = vor.u32 %v406, %v407
        %v410 = vrot.slane %v406, 4
        %v412 = vshrl.u32 %v229, 16
        %v414 = vrot.slane %v412, 7
        %v415 = vshll.u32 %v229, 16
        %v417 = vor.u32 %v414, %v415
        %v418 = vsel %vm368, %v410, %v417
        %v419 = vrot.slane %v414, 4
        %v421 = vshrl.u32 %v230, 16
        %v423 = vrot.slane %v421, 7
        %v424 = vshll.u32 %v230, 16
        %v426 = vor.u32 %v423, %v424
        %v427 = vrot.slane %v423, 4
        %v429 = vshrl.u32 %v231, 16
        %v431 = vrot.slane %v429, 7
        %v432 = vshll.u32 %v231, 16
        %v434 = vor.u32 %v431, %v432
        %v435 = vsel %vm368, %v427, %v434
        %v436 = vrot.slane %v431, 4
        %v438 = vshrl.u32 %v232, 16
        %v440 = vrot.slane %v438, 7
        %v441 = vshll.u32 %v232, 16
        %v443 = vor.u32 %v440, %v441
        %v444 = vrot.slane %v440, 4
        %v446 = vshrl.u32 %v233, 16
        %v448 = vrot.slane %v446, 7
        %v449 = vshll.u32 %v233, 16
        %v451 = vor.u32 %v448, %v449
        %v452 = vsel %vm368, %v444, %v451
        %v453 = vrot.slane %v448, 4
        %v455 = vshrl.u32 %v234, 16
        %v457 = vrot.slane %v455, 7
        %v458 = vshll.u32 %v234, 16
        %v460 = vor.u32 %v457, %v458
        %v461 = vrot.slane %v457, 4
        %v463 = vshrl.u32 %v235, 16
        %v465 = vrot.slane %v463, 7
        %v466 = vshll.u32 %v235, 16
        %v468 = vor.u32 %v465, %v466
        %v469 = vsel %vm368, %v461, %v468
        %v470 = vrot.slane %v465, 4
        %v472 = vshrl.u32 %v236, 16
        %v474 = vrot.slane %v472, 7
        %v475 = vshll.u32 %v236, 16
        %v477 = vor.u32 %v474, %v475
        %v478 = vrot.slane %v474, 4
        %v480 = vshrl.u32 %v237, 16
        %v482 = vrot.slane %v480, 7
        %v483 = vshll.u32 %v237, 16
        %v485 = vor.u32 %v482, %v483
        %v486 = vsel %vm368, %v478, %v485
        %v487 = vrot.slane %v482, 4
        %v489 = vshrl.u32 %v238, 16
        %v491 = vrot.slane %v489, 7
        %v492 = vshll.u32 %v238, 16
        %v494 = vor.u32 %v491, %v492
        %v495 = vrot.slane %v491, 4
        %v497 = vshrl.u32 %v239, 16
        %v499 = vrot.slane %v497, 7
        %v500 = vshll.u32 %v239, 16
        %v502 = vor.u32 %v499, %v500
        %v503 = vsel %vm368, %v495, %v502
        %v504 = vrot.slane %v499, 4
        %v506 = vshrl.u32 %v240, 16
        %v508 = vrot.slane %v506, 7
        %v509 = vshll.u32 %v240, 16
        %v511 = vor.u32 %v508, %v509
        %v512 = vrot.slane %v508, 4
        %v514 = vshrl.u32 %v241, 16
        %v516 = vrot.slane %v514, 7
        %v517 = vshll.u32 %v241, 16
        %v519 = vor.u32 %v516, %v517
        %v520 = vsel %vm368, %v512, %v519
        %v521 = vrot.slane %v516, 4
        %v523 = vshrl.u32 %v242, 16
        %v525 = vrot.slane %v523, 7
        %v526 = vshll.u32 %v242, 16
        %v528 = vor.u32 %v525, %v526
        %v529 = vrot.slane %v525, 4
        %v531 = vshrl.u32 %v243, 16
        %v533 = vrot.slane %v531, 7
        %v534 = vshll.u32 %v243, 16
        %v536 = vor.u32 %v533, %v534
        %v537 = vsel %vm368, %v529, %v536
        %v538 = vrot.slane %v533, 4
        %v540 = vshrl.u32 %v244, 16
        %v542 = vrot.slane %v540, 7
        %v543 = vshll.u32 %v244, 16
        %v545 = vor.u32 %v542, %v543
        %v546 = vrot.slane %v542, 4
        %v548 = vshrl.u32 %v245, 16
        %v550 = vrot.slane %v548, 7
        %v551 = vshll.u32 %v245, 16
        %v553 = vor.u32 %v550, %v551
        %v554 = vsel %vm368, %v546, %v553
        %v555 = vrot.slane %v550, 4
        %v557 = vshrl.u32 %v246, 16
        %v559 = vrot.slane %v557, 7
        %v560 = vshll.u32 %v246, 16
        %v562 = vor.u32 %v559, %v560
        %v563 = vrot.slane %v559, 4
        %v565 = vshrl.u32 %v247, 16
        %v567 = vrot.slane %v565, 7
        %v568 = vshll.u32 %v247, 16
        %v570 = vor.u32 %v567, %v568
        %v571 = vsel %vm368, %v563, %v570
        %v572 = vrot.slane %v567, 4
        %v574 = vshrl.u32 %v248, 16
        %v576 = vrot.slane %v574, 7
        %v577 = vshll.u32 %v248, 16
        %v579 = vor.u32 %v576, %v577
        %v580 = vrot.slane %v576, 4
        %v582 = vshrl.u32 %v249, 16
        %v584 = vrot.slane %v582, 7
        %v585 = vshll.u32 %v249, 16
        %v587 = vor.u32 %v584, %v585
        %v588 = vsel %vm368, %v580, %v587
        %v589 = vrot.slane %v584, 4
        %v591 = vshrl.u32 %v250, 16
        %v593 = vrot.slane %v591, 7
        %v594 = vshll.u32 %v250, 16
        %v596 = vor.u32 %v593, %v594
        %v597 = vrot.slane %v593, 4
        %v599 = vshrl.u32 %v251, 16
        %v601 = vrot.slane %v599, 7
        %v602 = vshll.u32 %v251, 16
        %v604 = vor.u32 %v601, %v602
        %v605 = vsel %vm368, %v597, %v604
        %v606 = vrot.slane %v601, 4
        %v608 = vshrl.u32 %v252, 16
        %v610 = vrot.slane %v608, 7
        %v611 = vshll.u32 %v252, 16
        %v613 = vor.u32 %v610, %v611
        %v614 = vrot.slane %v610, 4
        %v616 = vshrl.u32 %v253, 16
        %v618 = vrot.slane %v616, 7
        %v619 = vshll.u32 %v253, 16
        %v621 = vor.u32 %v618, %v619
        %v622 = vsel %vm368, %v614, %v621
        %v623 = vrot.slane %v618, 4
        %v625 = vshrl.u32 %v254, 16
        %v627 = vrot.slane %v625, 7
        %v628 = vshll.u32 %v254, 16
        %v630 = vor.u32 %v627, %v628
        %v631 = vrot.slane %v627, 4
        %v633 = vshrl.u32 %v255, 16
        %v635 = vrot.slane %v633, 7
        %v636 = vshll.u32 %v255, 16
        %v638 = vor.u32 %v635, %v636
        %v639 = vsel %vm368, %v631, %v638
        %v640 = vrot.slane %v635, 4
        %vm689 = vcmask 60416
        %vm690 = vmand %vm689, %vm317
        %v691 = vld [vmem:[%s265] sm:$0xf]
        %v692 = vsel %vm690, %v375, %v691
        %693 = vst [vmem:[%s265] sm:$0xf] %v692
        %694 = vst.msk [vmem:[%s265 + $0x4] sm:$0xf] %vm256, %v384
        %v695 = vld [vmem:[%s265 + $0x8] sm:$0x1]
        %v696 = vsel %vm268, %v385, %v695
        %697 = vst [vmem:[%s265 + $0x8] sm:$0x1] %v696
        %v698 = vld [vmem:[%s265 + $0xc] sm:$0xf]
        %v699 = vsel %vm690, %v392, %v698
        %700 = vst [vmem:[%s265 + $0xc] sm:$0xf] %v699
        %701 = vst.msk [vmem:[%s265 + $0x10] sm:$0xf] %vm256, %v401
        %v702 = vld [vmem:[%s265 + $0x14] sm:$0x1]
        %v703 = vsel %vm268, %v402, %v702
        %704 = vst [vmem:[%s265 + $0x14] sm:$0x1] %v703
        %v705 = vld [vmem:[%s265 + $0x18] sm:$0xf]
        %v706 = vsel %vm690, %v409, %v705
        %707 = vst [vmem:[%s265 + $0x18] sm:$0xf] %v706
        %708 = vst.msk [vmem:[%s265 + $0x1c] sm:$0xf] %vm256, %v418
        %v709 = vld [vmem:[%s265 + $0x20] sm:$0x1]
        %v710 = vsel %vm268, %v419, %v709
        %711 = vst [vmem:[%s265 + $0x20] sm:$0x1] %v710
        %v712 = vld [vmem:[%s265 + $0x24] sm:$0xf]
        %v713 = vsel %vm690, %v426, %v712
        %714 = vst [vmem:[%s265 + $0x24] sm:$0xf] %v713
        %715 = vst.msk [vmem:[%s265 + $0x28] sm:$0xf] %vm256, %v435
        %v716 = vld [vmem:[%s265 + $0x2c] sm:$0x1]
        %v717 = vsel %vm268, %v436, %v716
        %718 = vst [vmem:[%s265 + $0x2c] sm:$0x1] %v717
        %v719 = vld [vmem:[%s265 + $0x30] sm:$0xf]
        %v720 = vsel %vm690, %v443, %v719
        %721 = vst [vmem:[%s265 + $0x30] sm:$0xf] %v720
        %722 = vst.msk [vmem:[%s265 + $0x34] sm:$0xf] %vm256, %v452
        %v723 = vld [vmem:[%s265 + $0x38] sm:$0x1]
        %v724 = vsel %vm268, %v453, %v723
        %725 = vst [vmem:[%s265 + $0x38] sm:$0x1] %v724
        %v726 = vld [vmem:[%s265 + $0x3c] sm:$0xf]
        %v727 = vsel %vm690, %v460, %v726
        %728 = vst [vmem:[%s265 + $0x3c] sm:$0xf] %v727
        %729 = vst.msk [vmem:[%s265 + $0x40] sm:$0xf] %vm256, %v469
        %v730 = vld [vmem:[%s265 + $0x44] sm:$0x1]
        %v731 = vsel %vm268, %v470, %v730
        %732 = vst [vmem:[%s265 + $0x44] sm:$0x1] %v731
        %v733 = vld [vmem:[%s265 + $0x48] sm:$0xf]
        %v734 = vsel %vm690, %v477, %v733
        %735 = vst [vmem:[%s265 + $0x48] sm:$0xf] %v734
        %736 = vst.msk [vmem:[%s265 + $0x4c] sm:$0xf] %vm256, %v486
        %v737 = vld [vmem:[%s265 + $0x50] sm:$0x1]
        %v738 = vsel %vm268, %v487, %v737
        %739 = vst [vmem:[%s265 + $0x50] sm:$0x1] %v738
        %v740 = vld [vmem:[%s265 + $0x54] sm:$0xf]
        %v741 = vsel %vm690, %v494, %v740
        %742 = vst [vmem:[%s265 + $0x54] sm:$0xf] %v741
        %743 = vst.msk [vmem:[%s265 + $0x58] sm:$0xf] %vm256, %v503
        %v744 = vld [vmem:[%s265 + $0x5c] sm:$0x1]
        %v745 = vsel %vm268, %v504, %v744
        %746 = vst [vmem:[%s265 + $0x5c] sm:$0x1] %v745
        %v747 = vld [vmem:[%s265 + $0x60] sm:$0xf]
        %v748 = vsel %vm690, %v511, %v747
        %749 = vst [vmem:[%s265 + $0x60] sm:$0xf] %v748
        %750 = vst.msk [vmem:[%s265 + $0x64] sm:$0xf] %vm256, %v520
        %v751 = vld [vmem:[%s265 + $0x68] sm:$0x1]
        %v752 = vsel %vm268, %v521, %v751
        %753 = vst [vmem:[%s265 + $0x68] sm:$0x1] %v752
        %v754 = vld [vmem:[%s265 + $0x6c] sm:$0xf]
        %v755 = vsel %vm690, %v528, %v754
        %756 = vst [vmem:[%s265 + $0x6c] sm:$0xf] %v755
        %757 = vst.msk [vmem:[%s265 + $0x70] sm:$0xf] %vm256, %v537
        %v758 = vld [vmem:[%s265 + $0x74] sm:$0x1]
        %v759 = vsel %vm268, %v538, %v758
        %760 = vst [vmem:[%s265 + $0x74] sm:$0x1] %v759
        %v761 = vld [vmem:[%s265 + $0x78] sm:$0xf]
        %v762 = vsel %vm690, %v545, %v761
        %763 = vst [vmem:[%s265 + $0x78] sm:$0xf] %v762
        %764 = vst.msk [vmem:[%s265 + $0x7c] sm:$0xf] %vm256, %v554
        %v765 = vld [vmem:[%s265 + $0x80] sm:$0x1]
        %v766 = vsel %vm268, %v555, %v765
        %767 = vst [vmem:[%s265 + $0x80] sm:$0x1] %v766
        %v768 = vld [vmem:[%s265 + $0x84] sm:$0xf]
        %v769 = vsel %vm690, %v562, %v768
        %770 = vst [vmem:[%s265 + $0x84] sm:$0xf] %v769
        %771 = vst.msk [vmem:[%s265 + $0x88] sm:$0xf] %vm256, %v571
        %v772 = vld [vmem:[%s265 + $0x8c] sm:$0x1]
        %v773 = vsel %vm268, %v572, %v772
        %774 = vst [vmem:[%s265 + $0x8c] sm:$0x1] %v773
        %v775 = vld [vmem:[%s265 + $0x90] sm:$0xf]
        %v776 = vsel %vm690, %v579, %v775
        %777 = vst [vmem:[%s265 + $0x90] sm:$0xf] %v776
        %778 = vst.msk [vmem:[%s265 + $0x94] sm:$0xf] %vm256, %v588
        %v779 = vld [vmem:[%s265 + $0x98] sm:$0x1]
        %v780 = vsel %vm268, %v589, %v779
        %781 = vst [vmem:[%s265 + $0x98] sm:$0x1] %v780
        %v782 = vld [vmem:[%s265 + $0x9c] sm:$0xf]
        %v783 = vsel %vm690, %v596, %v782
        %784 = vst [vmem:[%s265 + $0x9c] sm:$0xf] %v783
        %785 = vst.msk [vmem:[%s265 + $0xa0] sm:$0xf] %vm256, %v605
        %v786 = vld [vmem:[%s265 + $0xa4] sm:$0x1]
        %v787 = vsel %vm268, %v606, %v786
        %788 = vst [vmem:[%s265 + $0xa4] sm:$0x1] %v787
        %v789 = vld [vmem:[%s265 + $0xa8] sm:$0xf]
        %v790 = vsel %vm690, %v613, %v789
        %791 = vst [vmem:[%s265 + $0xa8] sm:$0xf] %v790
        %792 = vst.msk [vmem:[%s265 + $0xac] sm:$0xf] %vm256, %v622
        %v793 = vld [vmem:[%s265 + $0xb0] sm:$0x1]
        %v794 = vsel %vm268, %v623, %v793
        %795 = vst [vmem:[%s265 + $0xb0] sm:$0x1] %v794
        %v796 = vld [vmem:[%s265 + $0xb4] sm:$0xf]
        %v797 = vsel %vm690, %v630, %v796
        %798 = vst [vmem:[%s265 + $0xb4] sm:$0xf] %v797
        %799 = vst.msk [vmem:[%s265 + $0xb8] sm:$0xf] %vm256, %v639
        %v800 = vld [vmem:[%s265 + $0xbc] sm:$0x1]
        %v801 = vsel %vm268, %v640, %v800
        %802 = vst [vmem:[%s265 + $0xbc] sm:$0x1] %v801
        %v803 = vld [vmem:[#allocation2] sm:$0xf]
        %v804 = vld [vmem:[#allocation2 + $0x4] sm:$0xf]
        %v805 = vld [vmem:[#allocation2 + $0xc] sm:$0xf]
        %v806 = vld [vmem:[#allocation2 + $0x10] sm:$0xf]
        %v807 = vld [vmem:[#allocation2 + $0x18] sm:$0xf]
        %v808 = vld [vmem:[#allocation2 + $0x1c] sm:$0xf]
        %v809 = vld [vmem:[#allocation2 + $0x24] sm:$0xf]
        %v810 = vld [vmem:[#allocation2 + $0x28] sm:$0xf]
        %v811 = vld [vmem:[#allocation2 + $0x30] sm:$0xf]
        %v812 = vld [vmem:[#allocation2 + $0x34] sm:$0xf]
        %v813 = vld [vmem:[#allocation2 + $0x3c] sm:$0xf]
        %v814 = vld [vmem:[#allocation2 + $0x40] sm:$0xf]
        %v815 = vld [vmem:[#allocation2 + $0x48] sm:$0xf]
        %v816 = vld [vmem:[#allocation2 + $0x4c] sm:$0xf]
        %v817 = vld [vmem:[#allocation2 + $0x54] sm:$0xf]
        %v818 = vld [vmem:[#allocation2 + $0x58] sm:$0xf]
        %v819 = vld [vmem:[#allocation2 + $0x60] sm:$0xf]
        %v820 = vld [vmem:[#allocation2 + $0x64] sm:$0xf]
        %v821 = vld [vmem:[#allocation2 + $0x6c] sm:$0xf]
        %v822 = vld [vmem:[#allocation2 + $0x70] sm:$0xf]
        %v823 = vld [vmem:[#allocation2 + $0x78] sm:$0xf]
        %v824 = vld [vmem:[#allocation2 + $0x7c] sm:$0xf]
        %v825 = vld [vmem:[#allocation2 + $0x84] sm:$0xf]
        %v826 = vld [vmem:[#allocation2 + $0x88] sm:$0xf]
        %v827 = vld [vmem:[#allocation2 + $0x90] sm:$0xf]
        %v828 = vld [vmem:[#allocation2 + $0x94] sm:$0xf]
        %v829 = vld [vmem:[#allocation2 + $0x9c] sm:$0xf]
        %v830 = vld [vmem:[#allocation2 + $0xa0] sm:$0xf]
        %v831 = vld [vmem:[#allocation2 + $0xa8] sm:$0xf]
        %v832 = vld [vmem:[#allocation2 + $0xac] sm:$0xf]
        %v833 = vld [vmem:[#allocation2 + $0xb4] sm:$0xf]
        %v834 = vld [vmem:[#allocation2 + $0xb8] sm:$0xf]
        %v835 = vld [vmem:[#allocation2 + $0x8] sm:$0x1]
        %v836 = vld [vmem:[#allocation2 + $0x14] sm:$0x1]
        %v837 = vld [vmem:[#allocation2 + $0x20] sm:$0x1]
        %v838 = vld [vmem:[#allocation2 + $0x2c] sm:$0x1]
        %v839 = vld [vmem:[#allocation2 + $0x38] sm:$0x1]
        %v840 = vld [vmem:[#allocation2 + $0x44] sm:$0x1]
        %v841 = vld [vmem:[#allocation2 + $0x50] sm:$0x1]
        %v842 = vld [vmem:[#allocation2 + $0x5c] sm:$0x1]
        %v843 = vld [vmem:[#allocation2 + $0x68] sm:$0x1]
        %v844 = vld [vmem:[#allocation2 + $0x74] sm:$0x1]
        %v845 = vld [vmem:[#allocation2 + $0x80] sm:$0x1]
        %v846 = vld [vmem:[#allocation2 + $0x8c] sm:$0x1]
        %v847 = vld [vmem:[#allocation2 + $0x98] sm:$0x1]
        %v848 = vld [vmem:[#allocation2 + $0xa4] sm:$0x1]
        %v849 = vld [vmem:[#allocation2 + $0xb0] sm:$0x1]
        %v850 = vld [vmem:[#allocation2 + $0xbc] sm:$0x1]
        %v851 = vld [vmem:[#allocation2] sm:$0xe]
        %v852 = vld [vmem:[#allocation2 + $0xc] sm:$0xe]
        %v853 = vld [vmem:[#allocation2 + $0x18] sm:$0xe]
        %v854 = vld [vmem:[#allocation2 + $0x24] sm:$0xe]
        %v855 = vld [vmem:[#allocation2 + $0x30] sm:$0xe]
        %v856 = vld [vmem:[#allocation2 + $0x3c] sm:$0xe]
        %v857 = vld [vmem:[#allocation2 + $0x48] sm:$0xe]
        %v858 = vld [vmem:[#allocation2 + $0x54] sm:$0xe]
        %v859 = vld [vmem:[#allocation2 + $0x60] sm:$0xe]
        %v860 = vld [vmem:[#allocation2 + $0x6c] sm:$0xe]
        %v861 = vld [vmem:[#allocation2 + $0x78] sm:$0xe]
        %v862 = vld [vmem:[#allocation2 + $0x84] sm:$0xe]
        %v863 = vld [vmem:[#allocation2 + $0x90] sm:$0xe]
        %v864 = vld [vmem:[#allocation2 + $0x9c] sm:$0xe]
        %v865 = vld [vmem:[#allocation2 + $0xa8] sm:$0xe]
        %v866 = vld [vmem:[#allocation2 + $0xb4] sm:$0xe]
        %v867 = vld [vmem:[%s265] sm:$0xf]
        %v868 = vld [vmem:[%s265 + $0x4] sm:$0xf]
        %v869 = vld [vmem:[%s265 + $0xc] sm:$0xf]
        %v870 = vld [vmem:[%s265 + $0x10] sm:$0xf]
        %v871 = vld [vmem:[%s265 + $0x18] sm:$0xf]
        %v872 = vld [vmem:[%s265 + $0x1c] sm:$0xf]
        %v873 = vld [vmem:[%s265 + $0x24] sm:$0xf]
        %v874 = vld [vmem:[%s265 + $0x28] sm:$0xf]
        %v875 = vld [vmem:[%s265 + $0x30] sm:$0xf]
        %v876 = vld [vmem:[%s265 + $0x34] sm:$0xf]
        %v877 = vld [vmem:[%s265 + $0x3c] sm:$0xf]
        %v878 = vld [vmem:[%s265 + $0x40] sm:$0xf]
        %v879 = vld [vmem:[%s265 + $0x48] sm:$0xf]
        %v880 = vld [vmem:[%s265 + $0x4c] sm:$0xf]
        %v881 = vld [vmem:[%s265 + $0x54] sm:$0xf]
        %v882 = vld [vmem:[%s265 + $0x58] sm:$0xf]
        %v883 = vld [vmem:[%s265 + $0x60] sm:$0xf]
        %v884 = vld [vmem:[%s265 + $0x64] sm:$0xf]
        %v885 = vld [vmem:[%s265 + $0x6c] sm:$0xf]
        %v886 = vld [vmem:[%s265 + $0x70] sm:$0xf]
        %v887 = vld [vmem:[%s265 + $0x78] sm:$0xf]
        %v888 = vld [vmem:[%s265 + $0x7c] sm:$0xf]
        %v889 = vld [vmem:[%s265 + $0x84] sm:$0xf]
        %v890 = vld [vmem:[%s265 + $0x88] sm:$0xf]
        %v891 = vld [vmem:[%s265 + $0x90] sm:$0xf]
        %v892 = vld [vmem:[%s265 + $0x94] sm:$0xf]
        %v893 = vld [vmem:[%s265 + $0x9c] sm:$0xf]
        %v894 = vld [vmem:[%s265 + $0xa0] sm:$0xf]
        %v895 = vld [vmem:[%s265 + $0xa8] sm:$0xf]
        %v896 = vld [vmem:[%s265 + $0xac] sm:$0xf]
        %v897 = vld [vmem:[%s265 + $0xb4] sm:$0xf]
        %v898 = vld [vmem:[%s265 + $0xb8] sm:$0xf]
        %v899 = vld [vmem:[%s265 + $0x8] sm:$0x1]
        %v900 = vld [vmem:[%s265 + $0x14] sm:$0x1]
        %v901 = vld [vmem:[%s265 + $0x20] sm:$0x1]
        %v902 = vld [vmem:[%s265 + $0x2c] sm:$0x1]
        %v903 = vld [vmem:[%s265 + $0x38] sm:$0x1]
        %v904 = vld [vmem:[%s265 + $0x44] sm:$0x1]
        %v905 = vld [vmem:[%s265 + $0x50] sm:$0x1]
        %v906 = vld [vmem:[%s265 + $0x5c] sm:$0x1]
        %v907 = vld [vmem:[%s265 + $0x68] sm:$0x1]
        %v908 = vld [vmem:[%s265 + $0x74] sm:$0x1]
        %v909 = vld [vmem:[%s265 + $0x80] sm:$0x1]
        %v910 = vld [vmem:[%s265 + $0x8c] sm:$0x1]
        %v911 = vld [vmem:[%s265 + $0x98] sm:$0x1]
        %v912 = vld [vmem:[%s265 + $0xa4] sm:$0x1]
        %v913 = vld [vmem:[%s265 + $0xb0] sm:$0x1]
        %v914 = vld [vmem:[%s265 + $0xbc] sm:$0x1]
        %v915 = vld [vmem:[%s265] sm:$0xe]
        %v916 = vld [vmem:[%s265 + $0xc] sm:$0xe]
        %v917 = vld [vmem:[%s265 + $0x18] sm:$0xe]
        %v918 = vld [vmem:[%s265 + $0x24] sm:$0xe]
        %v919 = vld [vmem:[%s265 + $0x30] sm:$0xe]
        %v920 = vld [vmem:[%s265 + $0x3c] sm:$0xe]
        %v921 = vld [vmem:[%s265 + $0x48] sm:$0xe]
        %v922 = vld [vmem:[%s265 + $0x54] sm:$0xe]
        %v923 = vld [vmem:[%s265 + $0x60] sm:$0xe]
        %v924 = vld [vmem:[%s265 + $0x6c] sm:$0xe]
        %v925 = vld [vmem:[%s265 + $0x78] sm:$0xe]
        %v926 = vld [vmem:[%s265 + $0x84] sm:$0xe]
        %v927 = vld [vmem:[%s265 + $0x90] sm:$0xe]
        %v928 = vld [vmem:[%s265 + $0x9c] sm:$0xe]
        %v929 = vld [vmem:[%s265 + $0xa8] sm:$0xe]
        %v930 = vld [vmem:[%s265 + $0xb4] sm:$0xe]
        %s931 = scalar_lea.vmem [#allocation2], 24
        %v932 = vld [vmem:[%s931] sm:$0xf]
        %v933 = vld [vmem:[%s931 + $0x4] sm:$0xf]
        %v934 = vld [vmem:[%s931 + $0xc] sm:$0xf]
        %v935 = vld [vmem:[%s931 + $0x10] sm:$0xf]
        %v936 = vld [vmem:[%s931 + $0x18] sm:$0xf]
        %v937 = vld [vmem:[%s931 + $0x1c] sm:$0xf]
        %v938 = vld [vmem:[%s931 + $0x24] sm:$0xf]
        %v939 = vld [vmem:[%s931 + $0x28] sm:$0xf]
        %v940 = vld [vmem:[%s931 + $0x30] sm:$0xf]
        %v941 = vld [vmem:[%s931 + $0x34] sm:$0xf]
        %v942 = vld [vmem:[%s931 + $0x3c] sm:$0xf]
        %v943 = vld [vmem:[%s931 + $0x40] sm:$0xf]
        %v944 = vld [vmem:[%s931 + $0x48] sm:$0xf]
        %v945 = vld [vmem:[%s931 + $0x4c] sm:$0xf]
        %v946 = vld [vmem:[%s931 + $0x54] sm:$0xf]
        %v947 = vld [vmem:[%s931 + $0x58] sm:$0xf]
        %v948 = vld [vmem:[%s931 + $0x60] sm:$0xf]
        %v949 = vld [vmem:[%s931 + $0x64] sm:$0xf]
        %v950 = vld [vmem:[%s931 + $0x6c] sm:$0xf]
        %v951 = vld [vmem:[%s931 + $0x70] sm:$0xf]
        %v952 = vld [vmem:[%s931 + $0x78] sm:$0xf]
        %v953 = vld [vmem:[%s931 + $0x7c] sm:$0xf]
        %v954 = vld [vmem:[%s931 + $0x84] sm:$0xf]
        %v955 = vld [vmem:[%s931 + $0x88] sm:$0xf]
        %v956 = vld [vmem:[%s931 + $0x90] sm:$0xf]
        %v957 = vld [vmem:[%s931 + $0x94] sm:$0xf]
        %v958 = vld [vmem:[%s931 + $0x9c] sm:$0xf]
        %v959 = vld [vmem:[%s931 + $0xa0] sm:$0xf]
        %v960 = vld [vmem:[%s931 + $0xa8] sm:$0xf]
        %v961 = vld [vmem:[%s931 + $0xac] sm:$0xf]
        %v962 = vld [vmem:[%s931 + $0xb4] sm:$0xf]
        %v963 = vld [vmem:[%s931 + $0xb8] sm:$0xf]
        %v964 = vld [vmem:[%s931 + $0x8] sm:$0x1]
        %v965 = vld [vmem:[%s931 + $0x14] sm:$0x1]
        %v966 = vld [vmem:[%s931 + $0x20] sm:$0x1]
        %v967 = vld [vmem:[%s931 + $0x2c] sm:$0x1]
        %v968 = vld [vmem:[%s931 + $0x38] sm:$0x1]
        %v969 = vld [vmem:[%s931 + $0x44] sm:$0x1]
        %v970 = vld [vmem:[%s931 + $0x50] sm:$0x1]
        %v971 = vld [vmem:[%s931 + $0x5c] sm:$0x1]
        %v972 = vld [vmem:[%s931 + $0x68] sm:$0x1]
        %v973 = vld [vmem:[%s931 + $0x74] sm:$0x1]
        %v974 = vld [vmem:[%s931 + $0x80] sm:$0x1]
        %v975 = vld [vmem:[%s931 + $0x8c] sm:$0x1]
        %v976 = vld [vmem:[%s931 + $0x98] sm:$0x1]
        %v977 = vld [vmem:[%s931 + $0xa4] sm:$0x1]
        %v978 = vld [vmem:[%s931 + $0xb0] sm:$0x1]
        %v979 = vld [vmem:[%s931 + $0xbc] sm:$0x1]
        %v980 = vld [vmem:[%s931] sm:$0xe]
        %v981 = vld [vmem:[%s931 + $0xc] sm:$0xe]
        %v982 = vld [vmem:[%s931 + $0x18] sm:$0xe]
        %v983 = vld [vmem:[%s931 + $0x24] sm:$0xe]
        %v984 = vld [vmem:[%s931 + $0x30] sm:$0xe]
        %v985 = vld [vmem:[%s931 + $0x3c] sm:$0xe]
        %v986 = vld [vmem:[%s931 + $0x48] sm:$0xe]
        %v987 = vld [vmem:[%s931 + $0x54] sm:$0xe]
        %v988 = vld [vmem:[%s931 + $0x60] sm:$0xe]
        %v989 = vld [vmem:[%s931 + $0x6c] sm:$0xe]
        %v990 = vld [vmem:[%s931 + $0x78] sm:$0xe]
        %v991 = vld [vmem:[%s931 + $0x84] sm:$0xe]
        %v992 = vld [vmem:[%s931 + $0x90] sm:$0xe]
        %v993 = vld [vmem:[%s931 + $0x9c] sm:$0xe]
        %v994 = vld [vmem:[%s931 + $0xa8] sm:$0xe]
        %v995 = vld [vmem:[%s931 + $0xb4] sm:$0xe]
        %v1028 = vunpack.c.l.b16 %v803
        %v1029 = vunpack.c.l.b16 %v804
        %v1030 = vunpack.c.l.b16 %v805
        %v1031 = vunpack.c.l.b16 %v806
        %v1032 = vunpack.c.l.b16 %v807
        %v1033 = vunpack.c.l.b16 %v808
        %v1034 = vunpack.c.l.b16 %v809
        %v1035 = vunpack.c.l.b16 %v810
        %v1036 = vunpack.c.l.b16 %v811
        %v1037 = vunpack.c.l.b16 %v812
        %v1038 = vunpack.c.l.b16 %v813
        %v1039 = vunpack.c.l.b16 %v814
        %v1040 = vunpack.c.l.b16 %v815
        %v1041 = vunpack.c.l.b16 %v816
        %v1042 = vunpack.c.l.b16 %v817
        %v1043 = vunpack.c.l.b16 %v818
        %v1044 = vunpack.c.l.b16 %v819
        %v1045 = vunpack.c.l.b16 %v820
        %v1046 = vunpack.c.l.b16 %v821
        %v1047 = vunpack.c.l.b16 %v822
        %v1048 = vunpack.c.l.b16 %v823
        %v1049 = vunpack.c.l.b16 %v824
        %v1050 = vunpack.c.l.b16 %v825
        %v1051 = vunpack.c.l.b16 %v826
        %v1052 = vunpack.c.l.b16 %v827
        %v1053 = vunpack.c.l.b16 %v828
        %v1054 = vunpack.c.l.b16 %v829
        %v1055 = vunpack.c.l.b16 %v830
        %v1056 = vunpack.c.l.b16 %v831
        %v1057 = vunpack.c.l.b16 %v832
        %v1058 = vunpack.c.l.b16 %v833
        %v1059 = vunpack.c.l.b16 %v834
        %v1060 = vpack.c.b16 %v1029, %v1028
        %v1061 = vpack.c.b16 %v1031, %v1030
        %v1062 = vpack.c.b16 %v1033, %v1032
        %v1063 = vpack.c.b16 %v1035, %v1034
        %v1064 = vpack.c.b16 %v1037, %v1036
        %v1065 = vpack.c.b16 %v1039, %v1038
        %v1066 = vpack.c.b16 %v1041, %v1040
        %v1067 = vpack.c.b16 %v1043, %v1042
        %v1068 = vpack.c.b16 %v1045, %v1044
        %v1069 = vpack.c.b16 %v1047, %v1046
        %v1070 = vpack.c.b16 %v1049, %v1048
        %v1071 = vpack.c.b16 %v1051, %v1050
        %v1072 = vpack.c.b16 %v1053, %v1052
        %v1073 = vpack.c.b16 %v1055, %v1054
        %v1074 = vpack.c.b16 %v1057, %v1056
        %v1075 = vpack.c.b16 %v1059, %v1058
        %v1092 = vunpack.c.l.b16 %v835
        %v1093 = vunpack.c.l.b16 %v836
        %v1094 = vunpack.c.l.b16 %v837
        %v1095 = vunpack.c.l.b16 %v838
        %v1096 = vunpack.c.l.b16 %v839
        %v1097 = vunpack.c.l.b16 %v840
        %v1098 = vunpack.c.l.b16 %v841
        %v1099 = vunpack.c.l.b16 %v842
        %v1100 = vunpack.c.l.b16 %v843
        %v1101 = vunpack.c.l.b16 %v844
        %v1102 = vunpack.c.l.b16 %v845
        %v1103 = vunpack.c.l.b16 %v846
        %v1104 = vunpack.c.l.b16 %v847
        %v1105 = vunpack.c.l.b16 %v848
        %v1106 = vunpack.c.l.b16 %v849
        %v1107 = vunpack.c.l.b16 %v850
        %v1108 = vpack.c.b16 %v1092, %v1092
        %v1109 = vpack.c.b16 %v1093, %v1093
        %v1110 = vpack.c.b16 %v1094, %v1094
        %v1111 = vpack.c.b16 %v1095, %v1095
        %v1112 = vpack.c.b16 %v1096, %v1096
        %v1113 = vpack.c.b16 %v1097, %v1097
        %v1114 = vpack.c.b16 %v1098, %v1098
        %v1115 = vpack.c.b16 %v1099, %v1099
        %v1116 = vpack.c.b16 %v1100, %v1100
        %v1117 = vpack.c.b16 %v1101, %v1101
        %v1118 = vpack.c.b16 %v1102, %v1102
        %v1119 = vpack.c.b16 %v1103, %v1103
        %v1120 = vpack.c.b16 %v1104, %v1104
        %v1121 = vpack.c.b16 %v1105, %v1105
        %v1122 = vpack.c.b16 %v1106, %v1106
        %v1123 = vpack.c.b16 %v1107, %v1107
        %vm1124 = vsmask.f32 7424
        %v1126 = vshrl.u32 %v1060, 16
        %v1128 = vshll.u32 %v1060, 16
        %v1130 = vrot.slane %v1128, 1
        %v1131 = vor.u32 %v1126, %v1130
        %v1133 = vshll.u32 %v1108, 16
        %v1135 = vrot.slane %v1133, 1
        %v1136 = vsel %vm1124, %v1131, %v1135
        %v1138 = vshrl.u32 %v1061, 16
        %v1140 = vshll.u32 %v1061, 16
        %v1142 = vrot.slane %v1140, 1
        %v1143 = vor.u32 %v1138, %v1142
        %v1145 = vshll.u32 %v1109, 16
        %v1147 = vrot.slane %v1145, 1
        %v1148 = vsel %vm1124, %v1143, %v1147
        %v1150 = vshrl.u32 %v1062, 16
        %v1152 = vshll.u32 %v1062, 16
        %v1154 = vrot.slane %v1152, 1
        %v1155 = vor.u32 %v1150, %v1154
        %v1157 = vshll.u32 %v1110, 16
        %v1159 = vrot.slane %v1157, 1
        %v1160 = vsel %vm1124, %v1155, %v1159
        %v1162 = vshrl.u32 %v1063, 16
        %v1164 = vshll.u32 %v1063, 16
        %v1166 = vrot.slane %v1164, 1
        %v1167 = vor.u32 %v1162, %v1166
        %v1169 = vshll.u32 %v1111, 16
        %v1171 = vrot.slane %v1169, 1
        %v1172 = vsel %vm1124, %v1167, %v1171
        %v1174 = vshrl.u32 %v1064, 16
        %v1176 = vshll.u32 %v1064, 16
        %v1178 = vrot.slane %v1176, 1
        %v1179 = vor.u32 %v1174, %v1178
        %v1181 = vshll.u32 %v1112, 16
        %v1183 = vrot.slane %v1181, 1
        %v1184 = vsel %vm1124, %v1179, %v1183
        %v1186 = vshrl.u32 %v1065, 16
        %v1188 = vshll.u32 %v1065, 16
        %v1190 = vrot.slane %v1188, 1
        %v1191 = vor.u32 %v1186, %v1190
        %v1193 = vshll.u32 %v1113, 16
        %v1195 = vrot.slane %v1193, 1
        %v1196 = vsel %vm1124, %v1191, %v1195
        %v1198 = vshrl.u32 %v1066, 16
        %v1200 = vshll.u32 %v1066, 16
        %v1202 = vrot.slane %v1200, 1
        %v1203 = vor.u32 %v1198, %v1202
        %v1205 = vshll.u32 %v1114, 16
        %v1207 = vrot.slane %v1205, 1
        %v1208 = vsel %vm1124, %v1203, %v1207
        %v1210 = vshrl.u32 %v1067, 16
        %v1212 = vshll.u32 %v1067, 16
        %v1214 = vrot.slane %v1212, 1
        %v1215 = vor.u32 %v1210, %v1214
        %v1217 = vshll.u32 %v1115, 16
        %v1219 = vrot.slane %v1217, 1
        %v1220 = vsel %vm1124, %v1215, %v1219
        %v1222 = vshrl.u32 %v1068, 16
        %v1224 = vshll.u32 %v1068, 16
        %v1226 = vrot.slane %v1224, 1
        %v1227 = vor.u32 %v1222, %v1226
        %v1229 = vshll.u32 %v1116, 16
        %v1231 = vrot.slane %v1229, 1
        %v1232 = vsel %vm1124, %v1227, %v1231
        %v1234 = vshrl.u32 %v1069, 16
        %v1236 = vshll.u32 %v1069, 16
        %v1238 = vrot.slane %v1236, 1
        %v1239 = vor.u32 %v1234, %v1238
        %v1241 = vshll.u32 %v1117, 16
        %v1243 = vrot.slane %v1241, 1
        %v1244 = vsel %vm1124, %v1239, %v1243
        %v1246 = vshrl.u32 %v1070, 16
        %v1248 = vshll.u32 %v1070, 16
        %v1250 = vrot.slane %v1248, 1
        %v1251 = vor.u32 %v1246, %v1250
        %v1253 = vshll.u32 %v1118, 16
        %v1255 = vrot.slane %v1253, 1
        %v1256 = vsel %vm1124, %v1251, %v1255
        %v1258 = vshrl.u32 %v1071, 16
        %v1260 = vshll.u32 %v1071, 16
        %v1262 = vrot.slane %v1260, 1
        %v1263 = vor.u32 %v1258, %v1262
        %v1265 = vshll.u32 %v1119, 16
        %v1267 = vrot.slane %v1265, 1
        %v1268 = vsel %vm1124, %v1263, %v1267
        %v1270 = vshrl.u32 %v1072, 16
        %v1272 = vshll.u32 %v1072, 16
        %v1274 = vrot.slane %v1272, 1
        %v1275 = vor.u32 %v1270, %v1274
        %v1277 = vshll.u32 %v1120, 16
        %v1279 = vrot.slane %v1277, 1
        %v1280 = vsel %vm1124, %v1275, %v1279
        %v1282 = vshrl.u32 %v1073, 16
        %v1284 = vshll.u32 %v1073, 16
        %v1286 = vrot.slane %v1284, 1
        %v1287 = vor.u32 %v1282, %v1286
        %v1289 = vshll.u32 %v1121, 16
        %v1291 = vrot.slane %v1289, 1
        %v1292 = vsel %vm1124, %v1287, %v1291
        %v1294 = vshrl.u32 %v1074, 16
        %v1296 = vshll.u32 %v1074, 16
        %v1298 = vrot.slane %v1296, 1
        %v1299 = vor.u32 %v1294, %v1298
        %v1301 = vshll.u32 %v1122, 16
        %v1303 = vrot.slane %v1301, 1
        %v1304 = vsel %vm1124, %v1299, %v1303
        %v1306 = vshrl.u32 %v1075, 16
        %v1308 = vshll.u32 %v1075, 16
        %v1310 = vrot.slane %v1308, 1
        %v1311 = vor.u32 %v1306, %v1310
        %v1313 = vshll.u32 %v1123, 16
        %v1315 = vrot.slane %v1313, 1
        %v1316 = vsel %vm1124, %v1311, %v1315
        %1317 = vrot.lane.b32.xlu0 %v1136, 8
        %v1318 = vpop.permute.xlu0 %1317
        %1319 = vrot.lane.b32.xlu0 %v1148, 8
        %v1320 = vpop.permute.xlu0 %1319
        %1321 = vrot.lane.b32.xlu0 %v1160, 8
        %v1322 = vpop.permute.xlu0 %1321
        %1323 = vrot.lane.b32.xlu0 %v1172, 8
        %v1324 = vpop.permute.xlu0 %1323
        %1325 = vrot.lane.b32.xlu0 %v1184, 8
        %v1326 = vpop.permute.xlu0 %1325
        %1327 = vrot.lane.b32.xlu0 %v1196, 8
        %v1328 = vpop.permute.xlu0 %1327
        %1329 = vrot.lane.b32.xlu0 %v1208, 8
        %v1330 = vpop.permute.xlu0 %1329
        %1331 = vrot.lane.b32.xlu0 %v1220, 8
        %v1332 = vpop.permute.xlu0 %1331
        %1333 = vrot.lane.b32.xlu0 %v1232, 8
        %v1334 = vpop.permute.xlu0 %1333
        %1335 = vrot.lane.b32.xlu0 %v1244, 8
        %v1336 = vpop.permute.xlu0 %1335
        %1337 = vrot.lane.b32.xlu0 %v1256, 8
        %v1338 = vpop.permute.xlu0 %1337
        %1339 = vrot.lane.b32.xlu0 %v1268, 8
        %v1340 = vpop.permute.xlu0 %1339
        %1341 = vrot.lane.b32.xlu0 %v1280, 8
        %v1342 = vpop.permute.xlu0 %1341
        %1343 = vrot.lane.b32.xlu0 %v1292, 8
        %v1344 = vpop.permute.xlu0 %1343
        %1345 = vrot.lane.b32.xlu0 %v1304, 8
        %v1346 = vpop.permute.xlu0 %1345
        %1347 = vrot.lane.b32.xlu0 %v1316, 8
        %v1348 = vpop.permute.xlu0 %1347
        %v1365 = vunpack.c.l.b16 %v851
        %v1366 = vunpack.c.l.b16 %v852
        %v1367 = vunpack.c.l.b16 %v853
        %v1368 = vunpack.c.l.b16 %v854
        %v1369 = vunpack.c.l.b16 %v855
        %v1370 = vunpack.c.l.b16 %v856
        %v1371 = vunpack.c.l.b16 %v857
        %v1372 = vunpack.c.l.b16 %v858
        %v1373 = vunpack.c.l.b16 %v859
        %v1374 = vunpack.c.l.b16 %v860
        %v1375 = vunpack.c.l.b16 %v861
        %v1376 = vunpack.c.l.b16 %v862
        %v1377 = vunpack.c.l.b16 %v863
        %v1378 = vunpack.c.l.b16 %v864
        %v1379 = vunpack.c.l.b16 %v865
        %v1380 = vunpack.c.l.b16 %v866
        %v1381 = vpack.c.b16 %v1029, %v1365
        %v1382 = vpack.c.b16 %v1031, %v1366
        %v1383 = vpack.c.b16 %v1033, %v1367
        %v1384 = vpack.c.b16 %v1035, %v1368
        %v1385 = vpack.c.b16 %v1037, %v1369
        %v1386 = vpack.c.b16 %v1039, %v1370
        %v1387 = vpack.c.b16 %v1041, %v1371
        %v1388 = vpack.c.b16 %v1043, %v1372
        %v1389 = vpack.c.b16 %v1045, %v1373
        %v1390 = vpack.c.b16 %v1047, %v1374
        %v1391 = vpack.c.b16 %v1049, %v1375
        %v1392 = vpack.c.b16 %v1051, %v1376
        %v1393 = vpack.c.b16 %v1053, %v1377
        %v1394 = vpack.c.b16 %v1055, %v1378
        %v1395 = vpack.c.b16 %v1057, %v1379
        %v1396 = vpack.c.b16 %v1059, %v1380
        %vm1397 = vcmask 1046528
        %v1398 = vrot.slane %v1381, 1
        %v1399 = vrot.slane %v1108, 1
        %v1400 = vsel %vm1397, %v1398, %v1399
        %v1401 = vrot.slane %v1382, 1
        %v1402 = vrot.slane %v1109, 1
        %v1403 = vsel %vm1397, %v1401, %v1402
        %v1404 = vrot.slane %v1383, 1
        %v1405 = vrot.slane %v1110, 1
        %v1406 = vsel %vm1397, %v1404, %v1405
        %v1407 = vrot.slane %v1384, 1
        %v1408 = vrot.slane %v1111, 1
        %v1409 = vsel %vm1397, %v1407, %v1408
        %v1410 = vrot.slane %v1385, 1
        %v1411 = vrot.slane %v1112, 1
        %v1412 = vsel %vm1397, %v1410, %v1411
        %v1413 = vrot.slane %v1386, 1
        %v1414 = vrot.slane %v1113, 1
        %v1415 = vsel %vm1397, %v1413, %v1414
        %v1416 = vrot.slane %v1387, 1
        %v1417 = vrot.slane %v1114, 1
        %v1418 = vsel %vm1397, %v1416, %v1417
        %v1419 = vrot.slane %v1388, 1
        %v1420 = vrot.slane %v1115, 1
        %v1421 = vsel %vm1397, %v1419, %v1420
        %v1422 = vrot.slane %v1389, 1
        %v1423 = vrot.slane %v1116, 1
        %v1424 = vsel %vm1397, %v1422, %v1423
        %v1425 = vrot.slane %v1390, 1
        %v1426 = vrot.slane %v1117, 1
        %v1427 = vsel %vm1397, %v1425, %v1426
        %v1428 = vrot.slane %v1391, 1
        %v1429 = vrot.slane %v1118, 1
        %v1430 = vsel %vm1397, %v1428, %v1429
        %v1431 = vrot.slane %v1392, 1
        %v1432 = vrot.slane %v1119, 1
        %v1433 = vsel %vm1397, %v1431, %v1432
        %v1434 = vrot.slane %v1393, 1
        %v1435 = vrot.slane %v1120, 1
        %v1436 = vsel %vm1397, %v1434, %v1435
        %v1437 = vrot.slane %v1394, 1
        %v1438 = vrot.slane %v1121, 1
        %v1439 = vsel %vm1397, %v1437, %v1438
        %v1440 = vrot.slane %v1395, 1
        %v1441 = vrot.slane %v1122, 1
        %v1442 = vsel %vm1397, %v1440, %v1441
        %v1443 = vrot.slane %v1396, 1
        %v1444 = vrot.slane %v1123, 1
        %v1445 = vsel %vm1397, %v1443, %v1444
        %1446 = vrot.lane.b32.xlu0 %v1400, 16
        %v1447 = vpop.permute.xlu0 %1446
        %1448 = vrot.lane.b32.xlu0 %v1403, 16
        %v1449 = vpop.permute.xlu0 %1448
        %1450 = vrot.lane.b32.xlu0 %v1406, 16
        %v1451 = vpop.permute.xlu0 %1450
        %1452 = vrot.lane.b32.xlu0 %v1409, 16
        %v1453 = vpop.permute.xlu0 %1452
        %1454 = vrot.lane.b32.xlu0 %v1412, 16
        %v1455 = vpop.permute.xlu0 %1454
        %1456 = vrot.lane.b32.xlu0 %v1415, 16
        %v1457 = vpop.permute.xlu0 %1456
        %1458 = vrot.lane.b32.xlu0 %v1418, 16
        %v1459 = vpop.permute.xlu0 %1458
        %1460 = vrot.lane.b32.xlu0 %v1421, 16
        %v1461 = vpop.permute.xlu0 %1460
        %1462 = vrot.lane.b32.xlu0 %v1424, 16
        %v1463 = vpop.permute.xlu0 %1462
        %1464 = vrot.lane.b32.xlu0 %v1427, 16
        %v1465 = vpop.permute.xlu0 %1464
        %1466 = vrot.lane.b32.xlu0 %v1430, 16
        %v1467 = vpop.permute.xlu0 %1466
        %1468 = vrot.lane.b32.xlu0 %v1433, 16
        %v1469 = vpop.permute.xlu0 %1468
        %1470 = vrot.lane.b32.xlu0 %v1436, 16
        %v1471 = vpop.permute.xlu0 %1470
        %1472 = vrot.lane.b32.xlu0 %v1439, 16
        %v1473 = vpop.permute.xlu0 %1472
        %1474 = vrot.lane.b32.xlu0 %v1442, 16
        %v1475 = vpop.permute.xlu0 %1474
        %1476 = vrot.lane.b32.xlu0 %v1445, 16
        %v1477 = vpop.permute.xlu0 %1476
        %v1510 = vunpack.c.l.b16 %v867
        %v1511 = vunpack.c.l.b16 %v868
        %v1512 = vunpack.c.l.b16 %v869
        %v1513 = vunpack.c.l.b16 %v870
        %v1514 = vunpack.c.l.b16 %v871
        %v1515 = vunpack.c.l.b16 %v872
        %v1516 = vunpack.c.l.b16 %v873
        %v1517 = vunpack.c.l.b16 %v874
        %v1518 = vunpack.c.l.b16 %v875
        %v1519 = vunpack.c.l.b16 %v876
        %v1520 = vunpack.c.l.b16 %v877
        %v1521 = vunpack.c.l.b16 %v878
        %v1522 = vunpack.c.l.b16 %v879
        %v1523 = vunpack.c.l.b16 %v880
        %v1524 = vunpack.c.l.b16 %v881
        %v1525 = vunpack.c.l.b16 %v882
        %v1526 = vunpack.c.l.b16 %v883
        %v1527 = vunpack.c.l.b16 %v884
        %v1528 = vunpack.c.l.b16 %v885
        %v1529 = vunpack.c.l.b16 %v886
        %v1530 = vunpack.c.l.b16 %v887
        %v1531 = vunpack.c.l.b16 %v888
        %v1532 = vunpack.c.l.b16 %v889
        %v1533 = vunpack.c.l.b16 %v890
        %v1534 = vunpack.c.l.b16 %v891
        %v1535 = vunpack.c.l.b16 %v892
        %v1536 = vunpack.c.l.b16 %v893
        %v1537 = vunpack.c.l.b16 %v894
        %v1538 = vunpack.c.l.b16 %v895
        %v1539 = vunpack.c.l.b16 %v896
        %v1540 = vunpack.c.l.b16 %v897
        %v1541 = vunpack.c.l.b16 %v898
        %v1542 = vpack.c.b16 %v1511, %v1510
        %v1543 = vpack.c.b16 %v1513, %v1512
        %v1544 = vpack.c.b16 %v1515, %v1514
        %v1545 = vpack.c.b16 %v1517, %v1516
        %v1546 = vpack.c.b16 %v1519, %v1518
        %v1547 = vpack.c.b16 %v1521, %v1520
        %v1548 = vpack.c.b16 %v1523, %v1522
        %v1549 = vpack.c.b16 %v1525, %v1524
        %v1550 = vpack.c.b16 %v1527, %v1526
        %v1551 = vpack.c.b16 %v1529, %v1528
        %v1552 = vpack.c.b16 %v1531, %v1530
        %v1553 = vpack.c.b16 %v1533, %v1532
        %v1554 = vpack.c.b16 %v1535, %v1534
        %v1555 = vpack.c.b16 %v1537, %v1536
        %v1556 = vpack.c.b16 %v1539, %v1538
        %v1557 = vpack.c.b16 %v1541, %v1540
        %1558 = vrot.lane.b32.xlu0 %v1542, 24
        %v1559 = vpop.permute.xlu0 %1558
        %1560 = vrot.lane.b32.xlu0 %v1543, 24
        %v1561 = vpop.permute.xlu0 %1560
        %1562 = vrot.lane.b32.xlu0 %v1544, 24
        %v1563 = vpop.permute.xlu0 %1562
        %1564 = vrot.lane.b32.xlu0 %v1545, 24
        %v1565 = vpop.permute.xlu0 %1564
        %1566 = vrot.lane.b32.xlu0 %v1546, 24
        %v1567 = vpop.permute.xlu0 %1566
        %1568 = vrot.lane.b32.xlu0 %v1547, 24
        %v1569 = vpop.permute.xlu0 %1568
        %1570 = vrot.lane.b32.xlu0 %v1548, 24
        %v1571 = vpop.permute.xlu0 %1570
        %1572 = vrot.lane.b32.xlu0 %v1549, 24
        %v1573 = vpop.permute.xlu0 %1572
        %1574 = vrot.lane.b32.xlu0 %v1550, 24
        %v1575 = vpop.permute.xlu0 %1574
        %1576 = vrot.lane.b32.xlu0 %v1551, 24
        %v1577 = vpop.permute.xlu0 %1576
        %1578 = vrot.lane.b32.xlu0 %v1552, 24
        %v1579 = vpop.permute.xlu0 %1578
        %1580 = vrot.lane.b32.xlu0 %v1553, 24
        %v1581 = vpop.permute.xlu0 %1580
        %1582 = vrot.lane.b32.xlu0 %v1554, 24
        %v1583 = vpop.permute.xlu0 %1582
        %1584 = vrot.lane.b32.xlu0 %v1555, 24
        %v1585 = vpop.permute.xlu0 %1584
        %1586 = vrot.lane.b32.xlu0 %v1556, 24
        %v1587 = vpop.permute.xlu0 %1586
        %1588 = vrot.lane.b32.xlu0 %v1557, 24
        %v1589 = vpop.permute.xlu0 %1588
        %v1606 = vunpack.c.l.b16 %v899
        %v1607 = vunpack.c.l.b16 %v900
        %v1608 = vunpack.c.l.b16 %v901
        %v1609 = vunpack.c.l.b16 %v902
        %v1610 = vunpack.c.l.b16 %v903
        %v1611 = vunpack.c.l.b16 %v904
        %v1612 = vunpack.c.l.b16 %v905
        %v1613 = vunpack.c.l.b16 %v906
        %v1614 = vunpack.c.l.b16 %v907
        %v1615 = vunpack.c.l.b16 %v908
        %v1616 = vunpack.c.l.b16 %v909
        %v1617 = vunpack.c.l.b16 %v910
        %v1618 = vunpack.c.l.b16 %v911
        %v1619 = vunpack.c.l.b16 %v912
        %v1620 = vunpack.c.l.b16 %v913
        %v1621 = vunpack.c.l.b16 %v914
        %v1622 = vpack.c.b16 %v1606, %v1606
        %v1623 = vpack.c.b16 %v1607, %v1607
        %v1624 = vpack.c.b16 %v1608, %v1608
        %v1625 = vpack.c.b16 %v1609, %v1609
        %v1626 = vpack.c.b16 %v1610, %v1610
        %v1627 = vpack.c.b16 %v1611, %v1611
        %v1628 = vpack.c.b16 %v1612, %v1612
        %v1629 = vpack.c.b16 %v1613, %v1613
        %v1630 = vpack.c.b16 %v1614, %v1614
        %v1631 = vpack.c.b16 %v1615, %v1615
        %v1632 = vpack.c.b16 %v1616, %v1616
        %v1633 = vpack.c.b16 %v1617, %v1617
        %v1634 = vpack.c.b16 %v1618, %v1618
        %v1635 = vpack.c.b16 %v1619, %v1619
        %v1636 = vpack.c.b16 %v1620, %v1620
        %v1637 = vpack.c.b16 %v1621, %v1621
        %v1639 = vshrl.u32 %v1542, 16
        %v1641 = vshll.u32 %v1542, 16
        %v1643 = vrot.slane %v1641, 1
        %v1644 = vor.u32 %v1639, %v1643
        %v1646 = vshll.u32 %v1622, 16
        %v1648 = vrot.slane %v1646, 1
        %v1649 = vsel %vm1124, %v1644, %v1648
        %v1651 = vshrl.u32 %v1543, 16
        %v1653 = vshll.u32 %v1543, 16
        %v1655 = vrot.slane %v1653, 1
        %v1656 = vor.u32 %v1651, %v1655
        %v1658 = vshll.u32 %v1623, 16
        %v1660 = vrot.slane %v1658, 1
        %v1661 = vsel %vm1124, %v1656, %v1660
        %v1663 = vshrl.u32 %v1544, 16
        %v1665 = vshll.u32 %v1544, 16
        %v1667 = vrot.slane %v1665, 1
        %v1668 = vor.u32 %v1663, %v1667
        %v1670 = vshll.u32 %v1624, 16
        %v1672 = vrot.slane %v1670, 1
        %v1673 = vsel %vm1124, %v1668, %v1672
        %v1675 = vshrl.u32 %v1545, 16
        %v1677 = vshll.u32 %v1545, 16
        %v1679 = vrot.slane %v1677, 1
        %v1680 = vor.u32 %v1675, %v1679
        %v1682 = vshll.u32 %v1625, 16
        %v1684 = vrot.slane %v1682, 1
        %v1685 = vsel %vm1124, %v1680, %v1684
        %v1687 = vshrl.u32 %v1546, 16
        %v1689 = vshll.u32 %v1546, 16
        %v1691 = vrot.slane %v1689, 1
        %v1692 = vor.u32 %v1687, %v1691
        %v1694 = vshll.u32 %v1626, 16
        %v1696 = vrot.slane %v1694, 1
        %v1697 = vsel %vm1124, %v1692, %v1696
        %v1699 = vshrl.u32 %v1547, 16
        %v1701 = vshll.u32 %v1547, 16
        %v1703 = vrot.slane %v1701, 1
        %v1704 = vor.u32 %v1699, %v1703
        %v1706 = vshll.u32 %v1627, 16
        %v1708 = vrot.slane %v1706, 1
        %v1709 = vsel %vm1124, %v1704, %v1708
        %v1711 = vshrl.u32 %v1548, 16
        %v1713 = vshll.u32 %v1548, 16
        %v1715 = vrot.slane %v1713, 1
        %v1716 = vor.u32 %v1711, %v1715
        %v1718 = vshll.u32 %v1628, 16
        %v1720 = vrot.slane %v1718, 1
        %v1721 = vsel %vm1124, %v1716, %v1720
        %v1723 = vshrl.u32 %v1549, 16
        %v1725 = vshll.u32 %v1549, 16
        %v1727 = vrot.slane %v1725, 1
        %v1728 = vor.u32 %v1723, %v1727
        %v1730 = vshll.u32 %v1629, 16
        %v1732 = vrot.slane %v1730, 1
        %v1733 = vsel %vm1124, %v1728, %v1732
        %v1735 = vshrl.u32 %v1550, 16
        %v1737 = vshll.u32 %v1550, 16
        %v1739 = vrot.slane %v1737, 1
        %v1740 = vor.u32 %v1735, %v1739
        %v1742 = vshll.u32 %v1630, 16
        %v1744 = vrot.slane %v1742, 1
        %v1745 = vsel %vm1124, %v1740, %v1744
        %v1747 = vshrl.u32 %v1551, 16
        %v1749 = vshll.u32 %v1551, 16
        %v1751 = vrot.slane %v1749, 1
        %v1752 = vor.u32 %v1747, %v1751
        %v1754 = vshll.u32 %v1631, 16
        %v1756 = vrot.slane %v1754, 1
        %v1757 = vsel %vm1124, %v1752, %v1756
        %v1759 = vshrl.u32 %v1552, 16
        %v1761 = vshll.u32 %v1552, 16
        %v1763 = vrot.slane %v1761, 1
        %v1764 = vor.u32 %v1759, %v1763
        %v1766 = vshll.u32 %v1632, 16
        %v1768 = vrot.slane %v1766, 1
        %v1769 = vsel %vm1124, %v1764, %v1768
        %v1771 = vshrl.u32 %v1553, 16
        %v1773 = vshll.u32 %v1553, 16
        %v1775 = vrot.slane %v1773, 1
        %v1776 = vor.u32 %v1771, %v1775
        %v1778 = vshll.u32 %v1633, 16
        %v1780 = vrot.slane %v1778, 1
        %v1781 = vsel %vm1124, %v1776, %v1780
        %v1783 = vshrl.u32 %v1554, 16
        %v1785 = vshll.u32 %v1554, 16
        %v1787 = vrot.slane %v1785, 1
        %v1788 = vor.u32 %v1783, %v1787
        %v1790 = vshll.u32 %v1634, 16
        %v1792 = vrot.slane %v1790, 1
        %v1793 = vsel %vm1124, %v1788, %v1792
        %v1795 = vshrl.u32 %v1555, 16
        %v1797 = vshll.u32 %v1555, 16
        %v1799 = vrot.slane %v1797, 1
        %v1800 = vor.u32 %v1795, %v1799
        %v1802 = vshll.u32 %v1635, 16
        %v1804 = vrot.slane %v1802, 1
        %v1805 = vsel %vm1124, %v1800, %v1804
        %v1807 = vshrl.u32 %v1556, 16
        %v1809 = vshll.u32 %v1556, 16
        %v1811 = vrot.slane %v1809, 1
        %v1812 = vor.u32 %v1807, %v1811
        %v1814 = vshll.u32 %v1636, 16
        %v1816 = vrot.slane %v1814, 1
        %v1817 = vsel %vm1124, %v1812, %v1816
        %v1819 = vshrl.u32 %v1557, 16
        %v1821 = vshll.u32 %v1557, 16
        %v1823 = vrot.slane %v1821, 1
        %v1824 = vor.u32 %v1819, %v1823
        %v1826 = vshll.u32 %v1637, 16
        %v1828 = vrot.slane %v1826, 1
        %v1829 = vsel %vm1124, %v1824, %v1828
        %1830 = vrot.lane.b32.xlu0 %v1649, 32
        %v1831 = vpop.permute.xlu0 %1830
        %1832 = vrot.lane.b32.xlu0 %v1661, 32
        %v1833 = vpop.permute.xlu0 %1832
        %1834 = vrot.lane.b32.xlu0 %v1673, 32
        %v1835 = vpop.permute.xlu0 %1834
        %1836 = vrot.lane.b32.xlu0 %v1685, 32
        %v1837 = vpop.permute.xlu0 %1836
        %1838 = vrot.lane.b32.xlu0 %v1697, 32
        %v1839 = vpop.permute.xlu0 %1838
        %1840 = vrot.lane.b32.xlu0 %v1709, 32
        %v1841 = vpop.permute.xlu0 %1840
        %1842 = vrot.lane.b32.xlu0 %v1721, 32
        %v1843 = vpop.permute.xlu0 %1842
        %1844 = vrot.lane.b32.xlu0 %v1733, 32
        %v1845 = vpop.permute.xlu0 %1844
        %1846 = vrot.lane.b32.xlu0 %v1745, 32
        %v1847 = vpop.permute.xlu0 %1846
        %1848 = vrot.lane.b32.xlu0 %v1757, 32
        %v1849 = vpop.permute.xlu0 %1848
        %1850 = vrot.lane.b32.xlu0 %v1769, 32
        %v1851 = vpop.permute.xlu0 %1850
        %1852 = vrot.lane.b32.xlu0 %v1781, 32
        %v1853 = vpop.permute.xlu0 %1852
        %1854 = vrot.lane.b32.xlu0 %v1793, 32
        %v1855 = vpop.permute.xlu0 %1854
        %1856 = vrot.lane.b32.xlu0 %v1805, 32
        %v1857 = vpop.permute.xlu0 %1856
        %1858 = vrot.lane.b32.xlu0 %v1817, 32
        %v1859 = vpop.permute.xlu0 %1858
        %1860 = vrot.lane.b32.xlu0 %v1829, 32
        %v1861 = vpop.permute.xlu0 %1860
        %v1878 = vunpack.c.l.b16 %v915
        %v1879 = vunpack.c.l.b16 %v916
        %v1880 = vunpack.c.l.b16 %v917
        %v1881 = vunpack.c.l.b16 %v918
        %v1882 = vunpack.c.l.b16 %v919
        %v1883 = vunpack.c.l.b16 %v920
        %v1884 = vunpack.c.l.b16 %v921
        %v1885 = vunpack.c.l.b16 %v922
        %v1886 = vunpack.c.l.b16 %v923
        %v1887 = vunpack.c.l.b16 %v924
        %v1888 = vunpack.c.l.b16 %v925
        %v1889 = vunpack.c.l.b16 %v926
        %v1890 = vunpack.c.l.b16 %v927
        %v1891 = vunpack.c.l.b16 %v928
        %v1892 = vunpack.c.l.b16 %v929
        %v1893 = vunpack.c.l.b16 %v930
        %v1894 = vpack.c.b16 %v1511, %v1878
        %v1895 = vpack.c.b16 %v1513, %v1879
        %v1896 = vpack.c.b16 %v1515, %v1880
        %v1897 = vpack.c.b16 %v1517, %v1881
        %v1898 = vpack.c.b16 %v1519, %v1882
        %v1899 = vpack.c.b16 %v1521, %v1883
        %v1900 = vpack.c.b16 %v1523, %v1884
        %v1901 = vpack.c.b16 %v1525, %v1885
        %v1902 = vpack.c.b16 %v1527, %v1886
        %v1903 = vpack.c.b16 %v1529, %v1887
        %v1904 = vpack.c.b16 %v1531, %v1888
        %v1905 = vpack.c.b16 %v1533, %v1889
        %v1906 = vpack.c.b16 %v1535, %v1890
        %v1907 = vpack.c.b16 %v1537, %v1891
        %v1908 = vpack.c.b16 %v1539, %v1892
        %v1909 = vpack.c.b16 %v1541, %v1893
        %v1910 = vrot.slane %v1894, 1
        %v1911 = vrot.slane %v1622, 1
        %v1912 = vsel %vm1397, %v1910, %v1911
        %v1913 = vrot.slane %v1895, 1
        %v1914 = vrot.slane %v1623, 1
        %v1915 = vsel %vm1397, %v1913, %v1914
        %v1916 = vrot.slane %v1896, 1
        %v1917 = vrot.slane %v1624, 1
        %v1918 = vsel %vm1397, %v1916, %v1917
        %v1919 = vrot.slane %v1897, 1
        %v1920 = vrot.slane %v1625, 1
        %v1921 = vsel %vm1397, %v1919, %v1920
        %v1922 = vrot.slane %v1898, 1
        %v1923 = vrot.slane %v1626, 1
        %v1924 = vsel %vm1397, %v1922, %v1923
        %v1925 = vrot.slane %v1899, 1
        %v1926 = vrot.slane %v1627, 1
        %v1927 = vsel %vm1397, %v1925, %v1926
        %v1928 = vrot.slane %v1900, 1
        %v1929 = vrot.slane %v1628, 1
        %v1930 = vsel %vm1397, %v1928, %v1929
        %v1931 = vrot.slane %v1901, 1
        %v1932 = vrot.slane %v1629, 1
        %v1933 = vsel %vm1397, %v1931, %v1932
        %v1934 = vrot.slane %v1902, 1
        %v1935 = vrot.slane %v1630, 1
        %v1936 = vsel %vm1397, %v1934, %v1935
        %v1937 = vrot.slane %v1903, 1
        %v1938 = vrot.slane %v1631, 1
        %v1939 = vsel %vm1397, %v1937, %v1938
        %v1940 = vrot.slane %v1904, 1
        %v1941 = vrot.slane %v1632, 1
        %v1942 = vsel %vm1397, %v1940, %v1941
        %v1943 = vrot.slane %v1905, 1
        %v1944 = vrot.slane %v1633, 1
        %v1945 = vsel %vm1397, %v1943, %v1944
        %v1946 = vrot.slane %v1906, 1
        %v1947 = vrot.slane %v1634, 1
        %v1948 = vsel %vm1397, %v1946, %v1947
        %v1949 = vrot.slane %v1907, 1
        %v1950 = vrot.slane %v1635, 1
        %v1951 = vsel %vm1397, %v1949, %v1950
        %v1952 = vrot.slane %v1908, 1
        %v1953 = vrot.slane %v1636, 1
        %v1954 = vsel %vm1397, %v1952, %v1953
        %v1955 = vrot.slane %v1909, 1
        %v1956 = vrot.slane %v1637, 1
        %v1957 = vsel %vm1397, %v1955, %v1956
        %1958 = vrot.lane.b32.xlu0 %v1912, 40
        %v1959 = vpop.permute.xlu0 %1958
        %1960 = vrot.lane.b32.xlu0 %v1915, 40
        %v1961 = vpop.permute.xlu0 %1960
        %1962 = vrot.lane.b32.xlu0 %v1918, 40
        %v1963 = vpop.permute.xlu0 %1962
        %1964 = vrot.lane.b32.xlu0 %v1921, 40
        %v1965 = vpop.permute.xlu0 %1964
        %1966 = vrot.lane.b32.xlu0 %v1924, 40
        %v1967 = vpop.permute.xlu0 %1966
        %1968 = vrot.lane.b32.xlu0 %v1927, 40
        %v1969 = vpop.permute.xlu0 %1968
        %1970 = vrot.lane.b32.xlu0 %v1930, 40
        %v1971 = vpop.permute.xlu0 %1970
        %1972 = vrot.lane.b32.xlu0 %v1933, 40
        %v1973 = vpop.permute.xlu0 %1972
        %1974 = vrot.lane.b32.xlu0 %v1936, 40
        %v1975 = vpop.permute.xlu0 %1974
        %1976 = vrot.lane.b32.xlu0 %v1939, 40
        %v1977 = vpop.permute.xlu0 %1976
        %1978 = vrot.lane.b32.xlu0 %v1942, 40
        %v1979 = vpop.permute.xlu0 %1978
        %1980 = vrot.lane.b32.xlu0 %v1945, 40
        %v1981 = vpop.permute.xlu0 %1980
        %1982 = vrot.lane.b32.xlu0 %v1948, 40
        %v1983 = vpop.permute.xlu0 %1982
        %1984 = vrot.lane.b32.xlu0 %v1951, 40
        %v1985 = vpop.permute.xlu0 %1984
        %1986 = vrot.lane.b32.xlu0 %v1954, 40
        %v1987 = vpop.permute.xlu0 %1986
        %1988 = vrot.lane.b32.xlu0 %v1957, 40
        %v1989 = vpop.permute.xlu0 %1988
        %v2022 = vunpack.c.l.b16 %v932
        %v2023 = vunpack.c.l.b16 %v933
        %v2024 = vunpack.c.l.b16 %v934
        %v2025 = vunpack.c.l.b16 %v935
        %v2026 = vunpack.c.l.b16 %v936
        %v2027 = vunpack.c.l.b16 %v937
        %v2028 = vunpack.c.l.b16 %v938
        %v2029 = vunpack.c.l.b16 %v939
        %v2030 = vunpack.c.l.b16 %v940
        %v2031 = vunpack.c.l.b16 %v941
        %v2032 = vunpack.c.l.b16 %v942
        %v2033 = vunpack.c.l.b16 %v943
        %v2034 = vunpack.c.l.b16 %v944
        %v2035 = vunpack.c.l.b16 %v945
        %v2036 = vunpack.c.l.b16 %v946
        %v2037 = vunpack.c.l.b16 %v947
        %v2038 = vunpack.c.l.b16 %v948
        %v2039 = vunpack.c.l.b16 %v949
        %v2040 = vunpack.c.l.b16 %v950
        %v2041 = vunpack.c.l.b16 %v951
        %v2042 = vunpack.c.l.b16 %v952
        %v2043 = vunpack.c.l.b16 %v953
        %v2044 = vunpack.c.l.b16 %v954
        %v2045 = vunpack.c.l.b16 %v955
        %v2046 = vunpack.c.l.b16 %v956
        %v2047 = vunpack.c.l.b16 %v957
        %v2048 = vunpack.c.l.b16 %v958
        %v2049 = vunpack.c.l.b16 %v959
        %v2050 = vunpack.c.l.b16 %v960
        %v2051 = vunpack.c.l.b16 %v961
        %v2052 = vunpack.c.l.b16 %v962
        %v2053 = vunpack.c.l.b16 %v963
        %v2054 = vpack.c.b16 %v2023, %v2022
        %v2055 = vpack.c.b16 %v2025, %v2024
        %v2056 = vpack.c.b16 %v2027, %v2026
        %v2057 = vpack.c.b16 %v2029, %v2028
        %v2058 = vpack.c.b16 %v2031, %v2030
        %v2059 = vpack.c.b16 %v2033, %v2032
        %v2060 = vpack.c.b16 %v2035, %v2034
        %v2061 = vpack.c.b16 %v2037, %v2036
        %v2062 = vpack.c.b16 %v2039, %v2038
        %v2063 = vpack.c.b16 %v2041, %v2040
        %v2064 = vpack.c.b16 %v2043, %v2042
        %v2065 = vpack.c.b16 %v2045, %v2044
        %v2066 = vpack.c.b16 %v2047, %v2046
        %v2067 = vpack.c.b16 %v2049, %v2048
        %v2068 = vpack.c.b16 %v2051, %v2050
        %v2069 = vpack.c.b16 %v2053, %v2052
        %2070 = vrot.lane.b32.xlu0 %v2054, 48
        %v2071 = vpop.permute.xlu0 %2070
        %2072 = vrot.lane.b32.xlu0 %v2055, 48
        %v2073 = vpop.permute.xlu0 %2072
        %2074 = vrot.lane.b32.xlu0 %v2056, 48
        %v2075 = vpop.permute.xlu0 %2074
        %2076 = vrot.lane.b32.xlu0 %v2057, 48
        %v2077 = vpop.permute.xlu0 %2076
        %2078 = vrot.lane.b32.xlu0 %v2058, 48
        %v2079 = vpop.permute.xlu0 %2078
        %2080 = vrot.lane.b32.xlu0 %v2059, 48
        %v2081 = vpop.permute.xlu0 %2080
        %2082 = vrot.lane.b32.xlu0 %v2060, 48
        %v2083 = vpop.permute.xlu0 %2082
        %2084 = vrot.lane.b32.xlu0 %v2061, 48
        %v2085 = vpop.permute.xlu0 %2084
        %2086 = vrot.lane.b32.xlu0 %v2062, 48
        %v2087 = vpop.permute.xlu0 %2086
        %2088 = vrot.lane.b32.xlu0 %v2063, 48
        %v2089 = vpop.permute.xlu0 %2088
        %2090 = vrot.lane.b32.xlu0 %v2064, 48
        %v2091 = vpop.permute.xlu0 %2090
        %2092 = vrot.lane.b32.xlu0 %v2065, 48
        %v2093 = vpop.permute.xlu0 %2092
        %2094 = vrot.lane.b32.xlu0 %v2066, 48
        %v2095 = vpop.permute.xlu0 %2094
        %2096 = vrot.lane.b32.xlu0 %v2067, 48
        %v2097 = vpop.permute.xlu0 %2096
        %2098 = vrot.lane.b32.xlu0 %v2068, 48
        %v2099 = vpop.permute.xlu0 %2098
        %2100 = vrot.lane.b32.xlu0 %v2069, 48
        %v2101 = vpop.permute.xlu0 %2100
        %v2118 = vunpack.c.l.b16 %v964
        %v2119 = vunpack.c.l.b16 %v965
        %v2120 = vunpack.c.l.b16 %v966
        %v2121 = vunpack.c.l.b16 %v967
        %v2122 = vunpack.c.l.b16 %v968
        %v2123 = vunpack.c.l.b16 %v969
        %v2124 = vunpack.c.l.b16 %v970
        %v2125 = vunpack.c.l.b16 %v971
        %v2126 = vunpack.c.l.b16 %v972
        %v2127 = vunpack.c.l.b16 %v973
        %v2128 = vunpack.c.l.b16 %v974
        %v2129 = vunpack.c.l.b16 %v975
        %v2130 = vunpack.c.l.b16 %v976
        %v2131 = vunpack.c.l.b16 %v977
        %v2132 = vunpack.c.l.b16 %v978
        %v2133 = vunpack.c.l.b16 %v979
        %v2134 = vpack.c.b16 %v2118, %v2118
        %v2135 = vpack.c.b16 %v2119, %v2119
        %v2136 = vpack.c.b16 %v2120, %v2120
        %v2137 = vpack.c.b16 %v2121, %v2121
        %v2138 = vpack.c.b16 %v2122, %v2122
        %v2139 = vpack.c.b16 %v2123, %v2123
        %v2140 = vpack.c.b16 %v2124, %v2124
        %v2141 = vpack.c.b16 %v2125, %v2125
        %v2142 = vpack.c.b16 %v2126, %v2126
        %v2143 = vpack.c.b16 %v2127, %v2127
        %v2144 = vpack.c.b16 %v2128, %v2128
        %v2145 = vpack.c.b16 %v2129, %v2129
        %v2146 = vpack.c.b16 %v2130, %v2130
        %v2147 = vpack.c.b16 %v2131, %v2131
        %v2148 = vpack.c.b16 %v2132, %v2132
        %v2149 = vpack.c.b16 %v2133, %v2133
        %v2151 = vshrl.u32 %v2054, 16
        %v2153 = vshll.u32 %v2054, 16
        %v2155 = vrot.slane %v2153, 1
        %v2156 = vor.u32 %v2151, %v2155
        %v2158 = vshll.u32 %v2134, 16
        %v2160 = vrot.slane %v2158, 1
        %v2161 = vsel %vm1124, %v2156, %v2160
        %v2163 = vshrl.u32 %v2055, 16
        %v2165 = vshll.u32 %v2055, 16
        %v2167 = vrot.slane %v2165, 1
        %v2168 = vor.u32 %v2163, %v2167
        %v2170 = vshll.u32 %v2135, 16
        %v2172 = vrot.slane %v2170, 1
        %v2173 = vsel %vm1124, %v2168, %v2172
        %v2175 = vshrl.u32 %v2056, 16
        %v2177 = vshll.u32 %v2056, 16
        %v2179 = vrot.slane %v2177, 1
        %v2180 = vor.u32 %v2175, %v2179
        %v2182 = vshll.u32 %v2136, 16
        %v2184 = vrot.slane %v2182, 1
        %v2185 = vsel %vm1124, %v2180, %v2184
        %v2187 = vshrl.u32 %v2057, 16
        %v2189 = vshll.u32 %v2057, 16
        %v2191 = vrot.slane %v2189, 1
        %v2192 = vor.u32 %v2187, %v2191
        %v2194 = vshll.u32 %v2137, 16
        %v2196 = vrot.slane %v2194, 1
        %v2197 = vsel %vm1124, %v2192, %v2196
        %v2199 = vshrl.u32 %v2058, 16
        %v2201 = vshll.u32 %v2058, 16
        %v2203 = vrot.slane %v2201, 1
        %v2204 = vor.u32 %v2199, %v2203
        %v2206 = vshll.u32 %v2138, 16
        %v2208 = vrot.slane %v2206, 1
        %v2209 = vsel %vm1124, %v2204, %v2208
        %v2211 = vshrl.u32 %v2059, 16
        %v2213 = vshll.u32 %v2059, 16
        %v2215 = vrot.slane %v2213, 1
        %v2216 = vor.u32 %v2211, %v2215
        %v2218 = vshll.u32 %v2139, 16
        %v2220 = vrot.slane %v2218, 1
        %v2221 = vsel %vm1124, %v2216, %v2220
        %v2223 = vshrl.u32 %v2060, 16
        %v2225 = vshll.u32 %v2060, 16
        %v2227 = vrot.slane %v2225, 1
        %v2228 = vor.u32 %v2223, %v2227
        %v2230 = vshll.u32 %v2140, 16
        %v2232 = vrot.slane %v2230, 1
        %v2233 = vsel %vm1124, %v2228, %v2232
        %v2235 = vshrl.u32 %v2061, 16
        %v2237 = vshll.u32 %v2061, 16
        %v2239 = vrot.slane %v2237, 1
        %v2240 = vor.u32 %v2235, %v2239
        %v2242 = vshll.u32 %v2141, 16
        %v2244 = vrot.slane %v2242, 1
        %v2245 = vsel %vm1124, %v2240, %v2244
        %v2247 = vshrl.u32 %v2062, 16
        %v2249 = vshll.u32 %v2062, 16
        %v2251 = vrot.slane %v2249, 1
        %v2252 = vor.u32 %v2247, %v2251
        %v2254 = vshll.u32 %v2142, 16
        %v2256 = vrot.slane %v2254, 1
        %v2257 = vsel %vm1124, %v2252, %v2256
        %v2259 = vshrl.u32 %v2063, 16
        %v2261 = vshll.u32 %v2063, 16
        %v2263 = vrot.slane %v2261, 1
        %v2264 = vor.u32 %v2259, %v2263
        %v2266 = vshll.u32 %v2143, 16
        %v2268 = vrot.slane %v2266, 1
        %v2269 = vsel %vm1124, %v2264, %v2268
        %v2271 = vshrl.u32 %v2064, 16
        %v2273 = vshll.u32 %v2064, 16
        %v2275 = vrot.slane %v2273, 1
        %v2276 = vor.u32 %v2271, %v2275
        %v2278 = vshll.u32 %v2144, 16
        %v2280 = vrot.slane %v2278, 1
        %v2281 = vsel %vm1124, %v2276, %v2280
        %v2283 = vshrl.u32 %v2065, 16
        %v2285 = vshll.u32 %v2065, 16
        %v2287 = vrot.slane %v2285, 1
        %v2288 = vor.u32 %v2283, %v2287
        %v2290 = vshll.u32 %v2145, 16
        %v2292 = vrot.slane %v2290, 1
        %v2293 = vsel %vm1124, %v2288, %v2292
        %v2295 = vshrl.u32 %v2066, 16
        %v2297 = vshll.u32 %v2066, 16
        %v2299 = vrot.slane %v2297, 1
        %v2300 = vor.u32 %v2295, %v2299
        %v2302 = vshll.u32 %v2146, 16
        %v2304 = vrot.slane %v2302, 1
        %v2305 = vsel %vm1124, %v2300, %v2304
        %v2307 = vshrl.u32 %v2067, 16
        %v2309 = vshll.u32 %v2067, 16
        %v2311 = vrot.slane %v2309, 1
        %v2312 = vor.u32 %v2307, %v2311
        %v2314 = vshll.u32 %v2147, 16
        %v2316 = vrot.slane %v2314, 1
        %v2317 = vsel %vm1124, %v2312, %v2316
        %v2319 = vshrl.u32 %v2068, 16
        %v2321 = vshll.u32 %v2068, 16
        %v2323 = vrot.slane %v2321, 1
        %v2324 = vor.u32 %v2319, %v2323
        %v2326 = vshll.u32 %v2148, 16
        %v2328 = vrot.slane %v2326, 1
        %v2329 = vsel %vm1124, %v2324, %v2328
        %v2331 = vshrl.u32 %v2069, 16
        %v2333 = vshll.u32 %v2069, 16
        %v2335 = vrot.slane %v2333, 1
        %v2336 = vor.u32 %v2331, %v2335
        %v2338 = vshll.u32 %v2149, 16
        %v2340 = vrot.slane %v2338, 1
        %v2341 = vsel %vm1124, %v2336, %v2340
        %2342 = vrot.lane.b32.xlu0 %v2161, 56
        %v2343 = vpop.permute.xlu0 %2342
        %2344 = vrot.lane.b32.xlu0 %v2173, 56
        %v2345 = vpop.permute.xlu0 %2344
        %2346 = vrot.lane.b32.xlu0 %v2185, 56
        %v2347 = vpop.permute.xlu0 %2346
        %2348 = vrot.lane.b32.xlu0 %v2197, 56
        %v2349 = vpop.permute.xlu0 %2348
        %2350 = vrot.lane.b32.xlu0 %v2209, 56
        %v2351 = vpop.permute.xlu0 %2350
        %2352 = vrot.lane.b32.xlu0 %v2221, 56
        %v2353 = vpop.permute.xlu0 %2352
        %2354 = vrot.lane.b32.xlu0 %v2233, 56
        %v2355 = vpop.permute.xlu0 %2354
        %2356 = vrot.lane.b32.xlu0 %v2245, 56
        %v2357 = vpop.permute.xlu0 %2356
        %2358 = vrot.lane.b32.xlu0 %v2257, 56
        %v2359 = vpop.permute.xlu0 %2358
        %2360 = vrot.lane.b32.xlu0 %v2269, 56
        %v2361 = vpop.permute.xlu0 %2360
        %2362 = vrot.lane.b32.xlu0 %v2281, 56
        %v2363 = vpop.permute.xlu0 %2362
        %2364 = vrot.lane.b32.xlu0 %v2293, 56
        %v2365 = vpop.permute.xlu0 %2364
        %2366 = vrot.lane.b32.xlu0 %v2305, 56
        %v2367 = vpop.permute.xlu0 %2366
        %2368 = vrot.lane.b32.xlu0 %v2317, 56
        %v2369 = vpop.permute.xlu0 %2368
        %2370 = vrot.lane.b32.xlu0 %v2329, 56
        %v2371 = vpop.permute.xlu0 %2370
        %2372 = vrot.lane.b32.xlu0 %v2341, 56
        %v2373 = vpop.permute.xlu0 %2372
        %v2390 = vunpack.c.l.b16 %v980
        %v2391 = vunpack.c.l.b16 %v981
        %v2392 = vunpack.c.l.b16 %v982
        %v2393 = vunpack.c.l.b16 %v983
        %v2394 = vunpack.c.l.b16 %v984
        %v2395 = vunpack.c.l.b16 %v985
        %v2396 = vunpack.c.l.b16 %v986
        %v2397 = vunpack.c.l.b16 %v987
        %v2398 = vunpack.c.l.b16 %v988
        %v2399 = vunpack.c.l.b16 %v989
        %v2400 = vunpack.c.l.b16 %v990
        %v2401 = vunpack.c.l.b16 %v991
        %v2402 = vunpack.c.l.b16 %v992
        %v2403 = vunpack.c.l.b16 %v993
        %v2404 = vunpack.c.l.b16 %v994
        %v2405 = vunpack.c.l.b16 %v995
        %v2406 = vpack.c.b16 %v2023, %v2390
        %v2407 = vpack.c.b16 %v2025, %v2391
        %v2408 = vpack.c.b16 %v2027, %v2392
        %v2409 = vpack.c.b16 %v2029, %v2393
        %v2410 = vpack.c.b16 %v2031, %v2394
        %v2411 = vpack.c.b16 %v2033, %v2395
        %v2412 = vpack.c.b16 %v2035, %v2396
        %v2413 = vpack.c.b16 %v2037, %v2397
        %v2414 = vpack.c.b16 %v2039, %v2398
        %v2415 = vpack.c.b16 %v2041, %v2399
        %v2416 = vpack.c.b16 %v2043, %v2400
        %v2417 = vpack.c.b16 %v2045, %v2401
        %v2418 = vpack.c.b16 %v2047, %v2402
        %v2419 = vpack.c.b16 %v2049, %v2403
        %v2420 = vpack.c.b16 %v2051, %v2404
        %v2421 = vpack.c.b16 %v2053, %v2405
        %v2422 = vrot.slane %v2406, 1
        %v2423 = vrot.slane %v2134, 1
        %v2424 = vsel %vm1397, %v2422, %v2423
        %v2425 = vrot.slane %v2407, 1
        %v2426 = vrot.slane %v2135, 1
        %v2427 = vsel %vm1397, %v2425, %v2426
        %v2428 = vrot.slane %v2408, 1
        %v2429 = vrot.slane %v2136, 1
        %v2430 = vsel %vm1397, %v2428, %v2429
        %v2431 = vrot.slane %v2409, 1
        %v2432 = vrot.slane %v2137, 1
        %v2433 = vsel %vm1397, %v2431, %v2432
        %v2434 = vrot.slane %v2410, 1
        %v2435 = vrot.slane %v2138, 1
        %v2436 = vsel %vm1397, %v2434, %v2435
        %v2437 = vrot.slane %v2411, 1
        %v2438 = vrot.slane %v2139, 1
        %v2439 = vsel %vm1397, %v2437, %v2438
        %v2440 = vrot.slane %v2412, 1
        %v2441 = vrot.slane %v2140, 1
        %v2442 = vsel %vm1397, %v2440, %v2441
        %v2443 = vrot.slane %v2413, 1
        %v2444 = vrot.slane %v2141, 1
        %v2445 = vsel %vm1397, %v2443, %v2444
        %v2446 = vrot.slane %v2414, 1
        %v2447 = vrot.slane %v2142, 1
        %v2448 = vsel %vm1397, %v2446, %v2447
        %v2449 = vrot.slane %v2415, 1
        %v2450 = vrot.slane %v2143, 1
        %v2451 = vsel %vm1397, %v2449, %v2450
        %v2452 = vrot.slane %v2416, 1
        %v2453 = vrot.slane %v2144, 1
        %v2454 = vsel %vm1397, %v2452, %v2453
        %v2455 = vrot.slane %v2417, 1
        %v2456 = vrot.slane %v2145, 1
        %v2457 = vsel %vm1397, %v2455, %v2456
        %v2458 = vrot.slane %v2418, 1
        %v2459 = vrot.slane %v2146, 1
        %v2460 = vsel %vm1397, %v2458, %v2459
        %v2461 = vrot.slane %v2419, 1
        %v2462 = vrot.slane %v2147, 1
        %v2463 = vsel %vm1397, %v2461, %v2462
        %v2464 = vrot.slane %v2420, 1
        %v2465 = vrot.slane %v2148, 1
        %v2466 = vsel %vm1397, %v2464, %v2465
        %v2467 = vrot.slane %v2421, 1
        %v2468 = vrot.slane %v2149, 1
        %v2469 = vsel %vm1397, %v2467, %v2468
        %2470 = vrot.lane.b32.xlu0 %v2424, 64
        %v2471 = vpop.permute.xlu0 %2470
        %2472 = vrot.lane.b32.xlu0 %v2427, 64
        %v2473 = vpop.permute.xlu0 %2472
        %2474 = vrot.lane.b32.xlu0 %v2430, 64
        %v2475 = vpop.permute.xlu0 %2474
        %2476 = vrot.lane.b32.xlu0 %v2433, 64
        %v2477 = vpop.permute.xlu0 %2476
        %2478 = vrot.lane.b32.xlu0 %v2436, 64
        %v2479 = vpop.permute.xlu0 %2478
        %2480 = vrot.lane.b32.xlu0 %v2439, 64
        %v2481 = vpop.permute.xlu0 %2480
        %2482 = vrot.lane.b32.xlu0 %v2442, 64
        %v2483 = vpop.permute.xlu0 %2482
        %2484 = vrot.lane.b32.xlu0 %v2445, 64
        %v2485 = vpop.permute.xlu0 %2484
        %2486 = vrot.lane.b32.xlu0 %v2448, 64
        %v2487 = vpop.permute.xlu0 %2486
        %2488 = vrot.lane.b32.xlu0 %v2451, 64
        %v2489 = vpop.permute.xlu0 %2488
        %2490 = vrot.lane.b32.xlu0 %v2454, 64
        %v2491 = vpop.permute.xlu0 %2490
        %2492 = vrot.lane.b32.xlu0 %v2457, 64
        %v2493 = vpop.permute.xlu0 %2492
        %2494 = vrot.lane.b32.xlu0 %v2460, 64
        %v2495 = vpop.permute.xlu0 %2494
        %2496 = vrot.lane.b32.xlu0 %v2463, 64
        %v2497 = vpop.permute.xlu0 %2496
        %2498 = vrot.lane.b32.xlu0 %v2466, 64
        %v2499 = vpop.permute.xlu0 %2498
        %2500 = vrot.lane.b32.xlu0 %v2469, 64
        %v2501 = vpop.permute.xlu0 %2500
        %vm2502 = vcmask 64512
        %v2504 = vsel %vm2502, %v1060, %v1318
        %v2506 = vsel %vm2502, %v1061, %v1320
        %v2508 = vsel %vm2502, %v1062, %v1322
        %v2510 = vsel %vm2502, %v1063, %v1324
        %v2512 = vsel %vm2502, %v1064, %v1326
        %v2514 = vsel %vm2502, %v1065, %v1328
        %v2516 = vsel %vm2502, %v1066, %v1330
        %v2518 = vsel %vm2502, %v1067, %v1332
        %v2520 = vsel %vm2502, %v1068, %v1334
        %v2522 = vsel %vm2502, %v1069, %v1336
        %v2524 = vsel %vm2502, %v1070, %v1338
        %v2526 = vsel %vm2502, %v1071, %v1340
        %v2528 = vsel %vm2502, %v1072, %v1342
        %v2530 = vsel %vm2502, %v1073, %v1344
        %v2532 = vsel %vm2502, %v1074, %v1346
        %v2534 = vsel %vm2502, %v1075, %v1348
        %vm2535 = vcmask 130048
        %v2537 = vsel %vm2535, %v2504, %v1447
        %v2539 = vsel %vm2535, %v2506, %v1449
        %v2541 = vsel %vm2535, %v2508, %v1451
        %v2543 = vsel %vm2535, %v2510, %v1453
        %v2545 = vsel %vm2535, %v2512, %v1455
        %v2547 = vsel %vm2535, %v2514, %v1457
        %v2549 = vsel %vm2535, %v2516, %v1459
        %v2551 = vsel %vm2535, %v2518, %v1461
        %v2553 = vsel %vm2535, %v2520, %v1463
        %v2555 = vsel %vm2535, %v2522, %v1465
        %v2557 = vsel %vm2535, %v2524, %v1467
        %v2559 = vsel %vm2535, %v2526, %v1469
        %v2561 = vsel %vm2535, %v2528, %v1471
        %v2563 = vsel %vm2535, %v2530, %v1473
        %v2565 = vsel %vm2535, %v2532, %v1475
        %v2567 = vsel %vm2535, %v2534, %v1477
        %vm2568 = vcmask 195584
        %v2570 = vsel %vm2568, %v2537, %v1559
        %v2572 = vsel %vm2568, %v2539, %v1561
        %v2574 = vsel %vm2568, %v2541, %v1563
        %v2576 = vsel %vm2568, %v2543, %v1565
        %v2578 = vsel %vm2568, %v2545, %v1567
        %v2580 = vsel %vm2568, %v2547, %v1569
        %v2582 = vsel %vm2568, %v2549, %v1571
        %v2584 = vsel %vm2568, %v2551, %v1573
        %v2586 = vsel %vm2568, %v2553, %v1575
        %v2588 = vsel %vm2568, %v2555, %v1577
        %v2590 = vsel %vm2568, %v2557, %v1579
        %v2592 = vsel %vm2568, %v2559, %v1581
        %v2594 = vsel %vm2568, %v2561, %v1583
        %v2596 = vsel %vm2568, %v2563, %v1585
        %v2598 = vsel %vm2568, %v2565, %v1587
        %v2600 = vsel %vm2568, %v2567, %v1589
        %vm2601 = vcmask 261120
        %v2603 = vsel %vm2601, %v2570, %v1831
        %v2605 = vsel %vm2601, %v2572, %v1833
        %v2607 = vsel %vm2601, %v2574, %v1835
        %v2609 = vsel %vm2601, %v2576, %v1837
        %v2611 = vsel %vm2601, %v2578, %v1839
        %v2613 = vsel %vm2601, %v2580, %v1841
        %v2615 = vsel %vm2601, %v2582, %v1843
        %v2617 = vsel %vm2601, %v2584, %v1845
        %v2619 = vsel %vm2601, %v2586, %v1847
        %v2621 = vsel %vm2601, %v2588, %v1849
        %v2623 = vsel %vm2601, %v2590, %v1851
        %v2625 = vsel %vm2601, %v2592, %v1853
        %v2627 = vsel %vm2601, %v2594, %v1855
        %v2629 = vsel %vm2601, %v2596, %v1857
        %v2631 = vsel %vm2601, %v2598, %v1859
        %v2633 = vsel %vm2601, %v2600, %v1861
        %vm2634 = vcmask 326656
        %v2636 = vsel %vm2634, %v2603, %v1959
        %v2638 = vsel %vm2634, %v2605, %v1961
        %v2640 = vsel %vm2634, %v2607, %v1963
        %v2642 = vsel %vm2634, %v2609, %v1965
        %v2644 = vsel %vm2634, %v2611, %v1967
        %v2646 = vsel %vm2634, %v2613, %v1969
        %v2648 = vsel %vm2634, %v2615, %v1971
        %v2650 = vsel %vm2634, %v2617, %v1973
        %v2652 = vsel %vm2634, %v2619, %v1975
        %v2654 = vsel %vm2634, %v2621, %v1977
        %v2656 = vsel %vm2634, %v2623, %v1979
        %v2658 = vsel %vm2634, %v2625, %v1981
        %v2660 = vsel %vm2634, %v2627, %v1983
        %v2662 = vsel %vm2634, %v2629, %v1985
        %v2664 = vsel %vm2634, %v2631, %v1987
        %v2666 = vsel %vm2634, %v2633, %v1989
        %vm2667 = vcmask 392192
        %v2669 = vsel %vm2667, %v2636, %v2071
        %v2671 = vsel %vm2667, %v2638, %v2073
        %v2673 = vsel %vm2667, %v2640, %v2075
        %v2675 = vsel %vm2667, %v2642, %v2077
        %v2677 = vsel %vm2667, %v2644, %v2079
        %v2679 = vsel %vm2667, %v2646, %v2081
        %v2681 = vsel %vm2667, %v2648, %v2083
        %v2683 = vsel %vm2667, %v2650, %v2085
        %v2685 = vsel %vm2667, %v2652, %v2087
        %v2687 = vsel %vm2667, %v2654, %v2089
        %v2689 = vsel %vm2667, %v2656, %v2091
        %v2691 = vsel %vm2667, %v2658, %v2093
        %v2693 = vsel %vm2667, %v2660, %v2095
        %v2695 = vsel %vm2667, %v2662, %v2097
        %v2697 = vsel %vm2667, %v2664, %v2099
        %v2699 = vsel %vm2667, %v2666, %v2101
        %vm2700 = vcmask 457728
        %v2702 = vsel %vm2700, %v2669, %v2343
        %v2704 = vsel %vm2700, %v2671, %v2345
        %v2706 = vsel %vm2700, %v2673, %v2347
        %v2708 = vsel %vm2700, %v2675, %v2349
        %v2710 = vsel %vm2700, %v2677, %v2351
        %v2712 = vsel %vm2700, %v2679, %v2353
        %v2714 = vsel %vm2700, %v2681, %v2355
        %v2716 = vsel %vm2700, %v2683, %v2357
        %v2718 = vsel %vm2700, %v2685, %v2359
        %v2720 = vsel %vm2700, %v2687, %v2361
        %v2722 = vsel %vm2700, %v2689, %v2363
        %v2724 = vsel %vm2700, %v2691, %v2365
        %v2726 = vsel %vm2700, %v2693, %v2367
        %v2728 = vsel %vm2700, %v2695, %v2369
        %v2730 = vsel %vm2700, %v2697, %v2371
        %v2732 = vsel %vm2700, %v2699, %v2373
        %vm2733 = vcmask 523264
        %v2735 = vsel %vm2733, %v2702, %v2471
        %v2737 = vsel %vm2733, %v2704, %v2473
        %v2739 = vsel %vm2733, %v2706, %v2475
        %v2741 = vsel %vm2733, %v2708, %v2477
        %v2743 = vsel %vm2733, %v2710, %v2479
        %v2745 = vsel %vm2733, %v2712, %v2481
        %v2747 = vsel %vm2733, %v2714, %v2483
        %v2749 = vsel %vm2733, %v2716, %v2485
        %v2751 = vsel %vm2733, %v2718, %v2487
        %v2753 = vsel %vm2733, %v2720, %v2489
        %v2755 = vsel %vm2733, %v2722, %v2491
        %v2757 = vsel %vm2733, %v2724, %v2493
        %v2759 = vsel %vm2733, %v2726, %v2495
        %v2761 = vsel %vm2733, %v2728, %v2497
        %v2763 = vsel %vm2733, %v2730, %v2499
        %v2765 = vsel %vm2733, %v2732, %v2501
        %v2766 = vld [vmem:[%s1] sm:$0xf]
        %v2767 = vld [vmem:[%s1 + $0x4] sm:$0xf]
        %v2768 = vld [vmem:[%s1 + $0x8] sm:$0xf]
        %v2769 = vld [vmem:[%s1 + $0xc] sm:$0xf]
        %v2770 = vld [vmem:[%s1 + $0x10] sm:$0xf]
        %v2771 = vld [vmem:[%s1 + $0x14] sm:$0xf]
        %v2772 = vld [vmem:[%s1 + $0x18] sm:$0xf]
        %v2773 = vld [vmem:[%s1 + $0x1c] sm:$0xf]
        %v2774 = vld [vmem:[%s1 + $0x20] sm:$0xf]
        %v2784 = vunpack.c.l.b16 %v2766
        %v2785 = vunpack.c.l.b16 %v2767
        %v2786 = vunpack.c.l.b16 %v2768
        %v2787 = vunpack.c.l.b16 %v2769
        %v2788 = vunpack.c.l.b16 %v2770
        %v2789 = vunpack.c.l.b16 %v2771
        %v2790 = vunpack.c.l.b16 %v2772
        %v2791 = vunpack.c.l.b16 %v2773
        %v2792 = vunpack.c.l.b16 %v2774
        %v2793 = vpack.c.b16 %v2785, %v2784
        %v2794 = vpack.c.b16 %v2787, %v2786
        %v2795 = vpack.c.b16 %v2789, %v2788
        %v2796 = vpack.c.b16 %v2791, %v2790
        %v2797 = vpack.c.b16 %v2792, %v2792
        %vm2802 = vcmask 588800
        %v2803 = vsel %vm2802, %v2735, 0
        %v2805 = vsel %vm2802, %v2737, 0
        %v2807 = vsel %vm2802, %v2739, 0
        %v2809 = vsel %vm2802, %v2741, 0
        %v2811 = vsel %vm2802, %v2743, 0
        %v2813 = vsel %vm2802, %v2745, 0
        %v2815 = vsel %vm2802, %v2747, 0
        %v2817 = vsel %vm2802, %v2749, 0
        %v2819 = vsel %vm2802, %v2751, 0
        %v2821 = vsel %vm2802, %v2753, 0
        %v2823 = vsel %vm2802, %v2755, 0
        %v2825 = vsel %vm2802, %v2757, 0
        %v2827 = vsel %vm2802, %v2759, 0
        %v2829 = vsel %vm2802, %v2761, 0
        %v2831 = vsel %vm2802, %v2763, 0
        %v2833 = vsel %vm2802, %v2765, 0
        %vm2835 = vcmask 1043456
        %v2837 = vsel %vm2835, %v2797, 0
        %2839 = vmatprep.subr.bf16.mxu0 0
        %2840 = vmatpush1.bf16.msra.mxu0 %v2793
        %2841 = vmatprep.subr.bf16.mxu0 0
        %2842 = vmatpush1.bf16.msra.mxu0 %v2794
        %2843 = vmatprep.subr.bf16.mxu0 0
        %2844 = vmatpush1.bf16.msra.mxu0 %v2795
        %2845 = vmatprep.subr.bf16.mxu0 0
        %2846 = vmatpush1.bf16.msra.mxu0 %v2796
        %2847 = vmatprep.subr.bf16.mxu0 0
        %2848 = vmatpush1.bf16.msra.mxu0 %v2837
        %2849 = vmatprep.subr.bf16.mxu0 0
        %2850 = vmatpush1.bf16.msra.mxu0 0
        %2851 = vmatprep.subr.bf16.mxu0 0
        %2852 = vmatpush1.bf16.msra.mxu0 0
        %2853 = vmatprep.subr.bf16.mxu0 0
        %2854 = vmatpush1.bf16.msra.mxu0 0
        %2855 = vmatprep.subr.bf16.mxu0 0
        %2856 = vmatpush1.bf16.msra.mxu0 0
        %2857 = vmatprep.subr.bf16.mxu0 0
        %2858 = vmatpush1.bf16.msra.mxu0 0
        %2859 = vmatprep.subr.bf16.mxu0 0
        %2860 = vmatpush1.bf16.msra.mxu0 0
        %2861 = vmatprep.subr.bf16.mxu0 0
        %2862 = vmatpush1.bf16.msra.mxu0 0
        %2863 = vmatprep.subr.bf16.mxu0 0
        %2864 = vmatpush1.bf16.msra.mxu0 0
        %2865 = vmatprep.subr.bf16.mxu0 0
        %2866 = vmatpush1.bf16.msra.mxu0 0
        %2867 = vmatprep.subr.bf16.mxu0 0
        %2868 = vmatpush1.bf16.msra.mxu0 0
        %2869 = vmatprep.subr.bf16.mxu0 0
        %2870 = vmatpush1.bf16.msra.mxu0 0
        %2871 = vmatprep.mubr.bf16.mxu0 0
        %2872 = vmatmul.mubr.bf16.gmra.mrb[0].mxu0 %v2803
        %v2873 = vpop.f32.mrb[0].mxu0
        %v2874 = vadd.f32 0.0, %v2873
        %v2875 = vpop.f32.mrb[0].mxu0
        %v2876 = vpop.f32.mrb[0].mxu0
        %v2877 = vadd.f32 0.0, %v2876
        %v2878 = vpop.f32.mrb[0].mxu0
        %2879 = vmatprep.mubr.bf16.mxu0 0
        %2880 = vmatmul.mubr.bf16.gmra.mrb[0].mxu0 %v2805
        %v2881 = vpop.f32.mrb[0].mxu0
        %v2882 = vadd.f32 0.0, %v2881
        %v2883 = vpop.f32.mrb[0].mxu0
        %v2884 = vpop.f32.mrb[0].mxu0
        %v2885 = vadd.f32 0.0, %v2884
        %v2886 = vpop.f32.mrb[0].mxu0
        %2887 = vmatprep.mubr.bf16.mxu0 0
        %2888 = vmatmul.mubr.bf16.gmra.mrb[0].mxu0 %v2807
        %v2889 = vpop.f32.mrb[0].mxu0
        %v2890 = vadd.f32 0.0, %v2889
        %v2891 = vpop.f32.mrb[0].mxu0
        %v2892 = vpop.f32.mrb[0].mxu0
        %v2893 = vadd.f32 0.0, %v2892
        %v2894 = vpop.f32.mrb[0].mxu0
        %2895 = vmatprep.mubr.bf16.mxu0 0
        %2896 = vmatmul.mubr.bf16.gmra.mrb[0].mxu0 %v2809
        %v2897 = vpop.f32.mrb[0].mxu0
        %v2898 = vadd.f32 0.0, %v2897
        %v2899 = vpop.f32.mrb[0].mxu0
        %v2900 = vpop.f32.mrb[0].mxu0
        %v2901 = vadd.f32 0.0, %v2900
        %v2902 = vpop.f32.mrb[0].mxu0
        %2903 = vmatprep.mubr.bf16.mxu0 0
        %2904 = vmatmul.mubr.bf16.gmra.mrb[0].mxu0 %v2811
        %v2905 = vpop.f32.mrb[0].mxu0
        %v2906 = vadd.f32 0.0, %v2905
        %v2907 = vpop.f32.mrb[0].mxu0
        %v2908 = vpop.f32.mrb[0].mxu0
        %v2909 = vadd.f32 0.0, %v2908
        %v2910 = vpop.f32.mrb[0].mxu0
        %2911 = vmatprep.mubr.bf16.mxu0 0
        %2912 = vmatmul.mubr.bf16.gmra.mrb[0].mxu0 %v2813
        %v2913 = vpop.f32.mrb[0].mxu0
        %v2914 = vadd.f32 0.0, %v2913
        %v2915 = vpop.f32.mrb[0].mxu0
        %v2916 = vpop.f32.mrb[0].mxu0
        %v2917 = vadd.f32 0.0, %v2916
        %v2918 = vpop.f32.mrb[0].mxu0
        %2919 = vmatprep.mubr.bf16.mxu0 0
        %2920 = vmatmul.mubr.bf16.gmra.mrb[0].mxu0 %v2815
        %v2921 = vpop.f32.mrb[0].mxu0
        %v2922 = vadd.f32 0.0, %v2921
        %v2923 = vpop.f32.mrb[0].mxu0
        %v2924 = vpop.f32.mrb[0].mxu0
        %v2925 = vadd.f32 0.0, %v2924
        %v2926 = vpop.f32.mrb[0].mxu0
        %2927 = vmatprep.mubr.bf16.mxu0 0
        %2928 = vmatmul.mubr.bf16.gmra.mrb[0].mxu0 %v2817
        %v2929 = vpop.f32.mrb[0].mxu0
        %v2930 = vadd.f32 0.0, %v2929
        %v2931 = vpop.f32.mrb[0].mxu0
        %v2932 = vpop.f32.mrb[0].mxu0
        %v2933 = vadd.f32 0.0, %v2932
        %v2934 = vpop.f32.mrb[0].mxu0
        %2935 = vmatprep.mubr.bf16.mxu0 0
        %2936 = vmatmul.mubr.bf16.gmra.mrb[0].mxu0 %v2819
        %v2937 = vpop.f32.mrb[0].mxu0
        %v2938 = vadd.f32 0.0, %v2937
        %v2939 = vpop.f32.mrb[0].mxu0
        %v2940 = vpop.f32.mrb[0].mxu0
        %v2941 = vadd.f32 0.0, %v2940
        %v2942 = vpop.f32.mrb[0].mxu0
        %2943 = vmatprep.mubr.bf16.mxu0 0
        %2944 = vmatmul.mubr.bf16.gmra.mrb[0].mxu0 %v2821
        %v2945 = vpop.f32.mrb[0].mxu0
        %v2946 = vadd.f32 0.0, %v2945
        %v2947 = vpop.f32.mrb[0].mxu0
        %v2948 = vpop.f32.mrb[0].mxu0
        %v2949 = vadd.f32 0.0, %v2948
        %v2950 = vpop.f32.mrb[0].mxu0
        %2951 = vmatprep.mubr.bf16.mxu0 0
        %2952 = vmatmul.mubr.bf16.gmra.mrb[0].mxu0 %v2823
        %v2953 = vpop.f32.mrb[0].mxu0
        %v2954 = vadd.f32 0.0, %v2953
        %v2955 = vpop.f32.mrb[0].mxu0
        %v2956 = vpop.f32.mrb[0].mxu0
        %v2957 = vadd.f32 0.0, %v2956
        %v2958 = vpop.f32.mrb[0].mxu0
        %2959 = vmatprep.mubr.bf16.mxu0 0
        %2960 = vmatmul.mubr.bf16.gmra.mrb[0].mxu0 %v2825
        %v2961 = vpop.f32.mrb[0].mxu0
        %v2962 = vadd.f32 0.0, %v2961
        %v2963 = vpop.f32.mrb[0].mxu0
        %v2964 = vpop.f32.mrb[0].mxu0
        %v2965 = vadd.f32 0.0, %v2964
        %v2966 = vpop.f32.mrb[0].mxu0
        %2967 = vmatprep.mubr.bf16.mxu0 0
        %2968 = vmatmul.mubr.bf16.gmra.mrb[0].mxu0 %v2827
        %v2969 = vpop.f32.mrb[0].mxu0
        %v2970 = vadd.f32 0.0, %v2969
        %v2971 = vpop.f32.mrb[0].mxu0
        %v2972 = vpop.f32.mrb[0].mxu0
        %v2973 = vadd.f32 0.0, %v2972
        %v2974 = vpop.f32.mrb[0].mxu0
        %2975 = vmatprep.mubr.bf16.mxu0 0
        %2976 = vmatmul.mubr.bf16.gmra.mrb[0].mxu0 %v2829
        %v2977 = vpop.f32.mrb[0].mxu0
        %v2978 = vadd.f32 0.0, %v2977
        %v2979 = vpop.f32.mrb[0].mxu0
        %v2980 = vpop.f32.mrb[0].mxu0
        %v2981 = vadd.f32 0.0, %v2980
        %v2982 = vpop.f32.mrb[0].mxu0
        %2983 = vmatprep.mubr.bf16.mxu0 0
        %2984 = vmatmul.mubr.bf16.gmra.mrb[0].mxu0 %v2831
        %v2985 = vpop.f32.mrb[0].mxu0
        %v2986 = vadd.f32 0.0, %v2985
        %v2987 = vpop.f32.mrb[0].mxu0
        %v2988 = vpop.f32.mrb[0].mxu0
        %v2989 = vadd.f32 0.0, %v2988
        %v2990 = vpop.f32.mrb[0].mxu0
        %2991 = vmatprep.mubr.bf16.mxu0 0
        %2992 = vmatmul.mubr.bf16.gmra.mrb[0].mxu0 %v2833
        %v2993 = vpop.f32.mrb[0].mxu0
        %v2994 = vadd.f32 0.0, %v2993
        %v2995 = vpop.f32.mrb[0].mxu0
        %v2996 = vpop.f32.mrb[0].mxu0
        %v2997 = vadd.f32 0.0, %v2996
        %v2998 = vpop.f32.mrb[0].mxu0
        %2999 = vdwg.mxu0
        %v3000 = vld [vmem:[%s2] sm:$0x1]
        %v3002 = vlaneseq
        %v3003 = vshrl.u32 %v3002, 7
        %v3004 = vsub.s32 0, %v3003
        %v3005 = vrot.slane %v3000, %v3004
        %v3007 = vadd.f32 %v2874, %v3005
        %v3008 = vadd.f32 %v2877, %v3005
        %v3009 = vadd.f32 %v2882, %v3005
        %v3010 = vadd.f32 %v2885, %v3005
        %v3011 = vadd.f32 %v2890, %v3005
        %v3012 = vadd.f32 %v2893, %v3005
        %v3013 = vadd.f32 %v2898, %v3005
        %v3014 = vadd.f32 %v2901, %v3005
        %v3015 = vadd.f32 %v2906, %v3005
        %v3016 = vadd.f32 %v2909, %v3005
        %v3017 = vadd.f32 %v2914, %v3005
        %v3018 = vadd.f32 %v2917, %v3005
        %v3019 = vadd.f32 %v2922, %v3005
        %v3020 = vadd.f32 %v2925, %v3005
        %v3021 = vadd.f32 %v2930, %v3005
        %v3022 = vadd.f32 %v2933, %v3005
        %v3023 = vadd.f32 %v2938, %v3005
        %v3024 = vadd.f32 %v2941, %v3005
        %v3025 = vadd.f32 %v2946, %v3005
        %v3026 = vadd.f32 %v2949, %v3005
        %v3027 = vadd.f32 %v2954, %v3005
        %v3028 = vadd.f32 %v2957, %v3005
        %v3029 = vadd.f32 %v2962, %v3005
        %v3030 = vadd.f32 %v2965, %v3005
        %v3031 = vadd.f32 %v2970, %v3005
        %v3032 = vadd.f32 %v2973, %v3005
        %v3033 = vadd.f32 %v2978, %v3005
        %v3034 = vadd.f32 %v2981, %v3005
        %v3035 = vadd.f32 %v2986, %v3005
        %v3036 = vadd.f32 %v2989, %v3005
        %v3037 = vadd.f32 %v2994, %v3005
        %v3038 = vadd.f32 %v2997, %v3005
        %v3039 = vmax.f32 %v3007, 0.0
        %v3040 = vmax.f32 %v3008, 0.0
        %v3041 = vmax.f32 %v3009, 0.0
        %v3042 = vmax.f32 %v3010, 0.0
        %v3043 = vmax.f32 %v3011, 0.0
        %v3044 = vmax.f32 %v3012, 0.0
        %v3045 = vmax.f32 %v3013, 0.0
        %v3046 = vmax.f32 %v3014, 0.0
        %v3047 = vmax.f32 %v3015, 0.0
        %v3048 = vmax.f32 %v3016, 0.0
        %v3049 = vmax.f32 %v3017, 0.0
        %v3050 = vmax.f32 %v3018, 0.0
        %v3051 = vmax.f32 %v3019, 0.0
        %v3052 = vmax.f32 %v3020, 0.0
        %v3053 = vmax.f32 %v3021, 0.0
        %v3054 = vmax.f32 %v3022, 0.0
        %v3055 = vmax.f32 %v3023, 0.0
        %v3056 = vmax.f32 %v3024, 0.0
        %v3057 = vmax.f32 %v3025, 0.0
        %v3058 = vmax.f32 %v3026, 0.0
        %v3059 = vmax.f32 %v3027, 0.0
        %v3060 = vmax.f32 %v3028, 0.0
        %v3061 = vmax.f32 %v3029, 0.0
        %v3062 = vmax.f32 %v3030, 0.0
        %v3063 = vmax.f32 %v3031, 0.0
        %v3064 = vmax.f32 %v3032, 0.0
        %v3065 = vmax.f32 %v3033, 0.0
        %v3066 = vmax.f32 %v3034, 0.0
        %v3067 = vmax.f32 %v3035, 0.0
        %v3068 = vmax.f32 %v3036, 0.0
        %v3069 = vmax.f32 %v3037, 0.0
        %v3070 = vmax.f32 %v3038, 0.0
        %v3071 = vpack.c.bf16 %v3040, %v3039
        %v3072 = vpack.c.bf16 %v3042, %v3041
        %v3073 = vpack.c.bf16 %v3044, %v3043
        %v3074 = vpack.c.bf16 %v3046, %v3045
        %v3075 = vpack.c.bf16 %v3048, %v3047
        %v3076 = vpack.c.bf16 %v3050, %v3049
        %v3077 = vpack.c.bf16 %v3052, %v3051
        %v3078 = vpack.c.bf16 %v3054, %v3053
        %v3079 = vpack.c.bf16 %v3056, %v3055
        %v3080 = vpack.c.bf16 %v3058, %v3057
        %v3081 = vpack.c.bf16 %v3060, %v3059
        %v3082 = vpack.c.bf16 %v3062, %v3061
        %v3083 = vpack.c.bf16 %v3064, %v3063
        %v3084 = vpack.c.bf16 %v3066, %v3065
        %v3085 = vpack.c.bf16 %v3068, %v3067
        %v3086 = vpack.c.bf16 %v3070, %v3069
        %vm3087 = vcmask 125952
        %3088 = vst.msk [vmem:[#allocation3] sm:$0xf] %vm3087, 0
        %3089 = vst.msk [vmem:[#allocation3 + $0x4] sm:$0xf] %vm3087, 0
        %vm3090 = vcmask 122880
        %3091 = vst.msk [vmem:[#allocation3 + $0x8] sm:$0x1] %vm3090, 0
        %s3092 = scalar_lea.vmem [#allocation3], 204
        %3093 = vst.msk [vmem:[%s3092] sm:$0xf] %vm3087, 0
        %3094 = vst.msk [vmem:[%s3092 + $0x4] sm:$0xf] %vm3087, 0
        %3095 = vst.msk [vmem:[%s3092 + $0x8] sm:$0x1] %vm3090, 0
        %s3096 = scalar_lea.vmem [#allocation3], 12
        %vm3097 = vcmask 122880
        %vm3098 = vmand %vm3097, %vm267
        %v3099 = vld [vmem:[%s3096] sm:$0x1]
        %v3100 = vsel %vm3098, 0, %v3099
        %3101 = vst [vmem:[%s3096] sm:$0x1] %v3100
        %v3102 = vld [vmem:[%s3096 + $0xc] sm:$0x1]
        %v3103 = vsel %vm3098, 0, %v3102
        %3104 = vst [vmem:[%s3096 + $0xc] sm:$0x1] %v3103
        %v3105 = vld [vmem:[%s3096 + $0x18] sm:$0x1]
        %v3106 = vsel %vm3098, 0, %v3105
        %3107 = vst [vmem:[%s3096 + $0x18] sm:$0x1] %v3106
        %v3108 = vld [vmem:[%s3096 + $0x24] sm:$0x1]
        %v3109 = vsel %vm3098, 0, %v3108
        %3110 = vst [vmem:[%s3096 + $0x24] sm:$0x1] %v3109
        %v3111 = vld [vmem:[%s3096 + $0x30] sm:$0x1]
        %v3112 = vsel %vm3098, 0, %v3111
        %3113 = vst [vmem:[%s3096 + $0x30] sm:$0x1] %v3112
        %v3114 = vld [vmem:[%s3096 + $0x3c] sm:$0x1]
        %v3115 = vsel %vm3098, 0, %v3114
        %3116 = vst [vmem:[%s3096 + $0x3c] sm:$0x1] %v3115
        %v3117 = vld [vmem:[%s3096 + $0x48] sm:$0x1]
        %v3118 = vsel %vm3098, 0, %v3117
        %3119 = vst [vmem:[%s3096 + $0x48] sm:$0x1] %v3118
        %v3120 = vld [vmem:[%s3096 + $0x54] sm:$0x1]
        %v3121 = vsel %vm3098, 0, %v3120
        %3122 = vst [vmem:[%s3096 + $0x54] sm:$0x1] %v3121
        %v3123 = vld [vmem:[%s3096 + $0x60] sm:$0x1]
        %v3124 = vsel %vm3098, 0, %v3123
        %3125 = vst [vmem:[%s3096 + $0x60] sm:$0x1] %v3124
        %v3126 = vld [vmem:[%s3096 + $0x6c] sm:$0x1]
        %v3127 = vsel %vm3098, 0, %v3126
        %3128 = vst [vmem:[%s3096 + $0x6c] sm:$0x1] %v3127
        %v3129 = vld [vmem:[%s3096 + $0x78] sm:$0x1]
        %v3130 = vsel %vm3098, 0, %v3129
        %3131 = vst [vmem:[%s3096 + $0x78] sm:$0x1] %v3130
        %v3132 = vld [vmem:[%s3096 + $0x84] sm:$0x1]
        %v3133 = vsel %vm3098, 0, %v3132
        %3134 = vst [vmem:[%s3096 + $0x84] sm:$0x1] %v3133
        %v3135 = vld [vmem:[%s3096 + $0x90] sm:$0x1]
        %v3136 = vsel %vm3098, 0, %v3135
        %3137 = vst [vmem:[%s3096 + $0x90] sm:$0x1] %v3136
        %v3138 = vld [vmem:[%s3096 + $0x9c] sm:$0x1]
        %v3139 = vsel %vm3098, 0, %v3138
        %3140 = vst [vmem:[%s3096 + $0x9c] sm:$0x1] %v3139
        %v3141 = vld [vmem:[%s3096 + $0xa8] sm:$0x1]
        %v3142 = vsel %vm3098, 0, %v3141
        %3143 = vst [vmem:[%s3096 + $0xa8] sm:$0x1] %v3142
        %v3144 = vld [vmem:[%s3096 + $0xb4] sm:$0x1]
        %v3145 = vsel %vm3098, 0, %v3144
        %3146 = vst [vmem:[%s3096 + $0xb4] sm:$0x1] %v3145
        %vm3147 = vmand %vm3097, %vm317
        %v3148 = vld [vmem:[%s3096 + $0x8] sm:$0x1]
        %v3149 = vsel %vm3147, 0, %v3148
        %3150 = vst [vmem:[%s3096 + $0x8] sm:$0x1] %v3149
        %v3151 = vld [vmem:[%s3096 + $0x14] sm:$0x1]
        %v3152 = vsel %vm3147, 0, %v3151
        %3153 = vst [vmem:[%s3096 + $0x14] sm:$0x1] %v3152
        %v3154 = vld [vmem:[%s3096 + $0x20] sm:$0x1]
        %v3155 = vsel %vm3147, 0, %v3154
        %3156 = vst [vmem:[%s3096 + $0x20] sm:$0x1] %v3155
        %v3157 = vld [vmem:[%s3096 + $0x2c] sm:$0x1]
        %v3158 = vsel %vm3147, 0, %v3157
        %3159 = vst [vmem:[%s3096 + $0x2c] sm:$0x1] %v3158
        %v3160 = vld [vmem:[%s3096 + $0x38] sm:$0x1]
        %v3161 = vsel %vm3147, 0, %v3160
        %3162 = vst [vmem:[%s3096 + $0x38] sm:$0x1] %v3161
        %v3163 = vld [vmem:[%s3096 + $0x44] sm:$0x1]
        %v3164 = vsel %vm3147, 0, %v3163
        %3165 = vst [vmem:[%s3096 + $0x44] sm:$0x1] %v3164
        %v3166 = vld [vmem:[%s3096 + $0x50] sm:$0x1]
        %v3167 = vsel %vm3147, 0, %v3166
        %3168 = vst [vmem:[%s3096 + $0x50] sm:$0x1] %v3167
        %v3169 = vld [vmem:[%s3096 + $0x5c] sm:$0x1]
        %v3170 = vsel %vm3147, 0, %v3169
        %3171 = vst [vmem:[%s3096 + $0x5c] sm:$0x1] %v3170
        %v3172 = vld [vmem:[%s3096 + $0x68] sm:$0x1]
        %v3173 = vsel %vm3147, 0, %v3172
        %3174 = vst [vmem:[%s3096 + $0x68] sm:$0x1] %v3173
        %v3175 = vld [vmem:[%s3096 + $0x74] sm:$0x1]
        %v3176 = vsel %vm3147, 0, %v3175
        %3177 = vst [vmem:[%s3096 + $0x74] sm:$0x1] %v3176
        %v3178 = vld [vmem:[%s3096 + $0x80] sm:$0x1]
        %v3179 = vsel %vm3147, 0, %v3178
        %3180 = vst [vmem:[%s3096 + $0x80] sm:$0x1] %v3179
        %v3181 = vld [vmem:[%s3096 + $0x8c] sm:$0x1]
        %v3182 = vsel %vm3147, 0, %v3181
        %3183 = vst [vmem:[%s3096 + $0x8c] sm:$0x1] %v3182
        %v3184 = vld [vmem:[%s3096 + $0x98] sm:$0x1]
        %v3185 = vsel %vm3147, 0, %v3184
        %3186 = vst [vmem:[%s3096 + $0x98] sm:$0x1] %v3185
        %v3187 = vld [vmem:[%s3096 + $0xa4] sm:$0x1]
        %v3188 = vsel %vm3147, 0, %v3187
        %3189 = vst [vmem:[%s3096 + $0xa4] sm:$0x1] %v3188
        %v3190 = vld [vmem:[%s3096 + $0xb0] sm:$0x1]
        %v3191 = vsel %vm3147, 0, %v3190
        %3192 = vst [vmem:[%s3096 + $0xb0] sm:$0x1] %v3191
        %v3193 = vld [vmem:[%s3096 + $0xbc] sm:$0x1]
        %v3194 = vsel %vm3147, 0, %v3193
        %3195 = vst [vmem:[%s3096 + $0xbc] sm:$0x1] %v3194
        %v3212 = vunpack.c.l.b16 %v3071
        %v3213 = vunpack.c.h.b16 %v3071
        %v3214 = vunpack.c.l.b16 %v3072
        %v3215 = vunpack.c.h.b16 %v3072
        %v3216 = vunpack.c.l.b16 %v3073
        %v3217 = vunpack.c.h.b16 %v3073
        %v3218 = vunpack.c.l.b16 %v3074
        %v3219 = vunpack.c.h.b16 %v3074
        %v3220 = vunpack.c.l.b16 %v3075
        %v3221 = vunpack.c.h.b16 %v3075
        %v3222 = vunpack.c.l.b16 %v3076
        %v3223 = vunpack.c.h.b16 %v3076
        %v3224 = vunpack.c.l.b16 %v3077
        %v3225 = vunpack.c.h.b16 %v3077
        %v3226 = vunpack.c.l.b16 %v3078
        %v3227 = vunpack.c.h.b16 %v3078
        %v3228 = vunpack.c.l.b16 %v3079
        %v3229 = vunpack.c.h.b16 %v3079
        %v3230 = vunpack.c.l.b16 %v3080
        %v3231 = vunpack.c.h.b16 %v3080
        %v3232 = vunpack.c.l.b16 %v3081
        %v3233 = vunpack.c.h.b16 %v3081
        %v3234 = vunpack.c.l.b16 %v3082
        %v3235 = vunpack.c.h.b16 %v3082
        %v3236 = vunpack.c.l.b16 %v3083
        %v3237 = vunpack.c.h.b16 %v3083
        %v3238 = vunpack.c.l.b16 %v3084
        %v3239 = vunpack.c.h.b16 %v3084
        %v3240 = vunpack.c.l.b16 %v3085
        %v3241 = vunpack.c.h.b16 %v3085
        %v3242 = vunpack.c.l.b16 %v3086
        %v3243 = vunpack.c.h.b16 %v3086
        %v3244 = vpack.c.b16 %v3212, %v3212
        %v3245 = vpack.c.b16 %v3213, %v3213
        %v3246 = vpack.c.b16 %v3214, %v3214
        %v3247 = vpack.c.b16 %v3215, %v3215
        %v3248 = vpack.c.b16 %v3216, %v3216
        %v3249 = vpack.c.b16 %v3217, %v3217
        %v3250 = vpack.c.b16 %v3218, %v3218
        %v3251 = vpack.c.b16 %v3219, %v3219
        %v3252 = vpack.c.b16 %v3220, %v3220
        %v3253 = vpack.c.b16 %v3221, %v3221
        %v3254 = vpack.c.b16 %v3222, %v3222
        %v3255 = vpack.c.b16 %v3223, %v3223
        %v3256 = vpack.c.b16 %v3224, %v3224
        %v3257 = vpack.c.b16 %v3225, %v3225
        %v3258 = vpack.c.b16 %v3226, %v3226
        %v3259 = vpack.c.b16 %v3227, %v3227
        %v3260 = vpack.c.b16 %v3228, %v3228
        %v3261 = vpack.c.b16 %v3229, %v3229
        %v3262 = vpack.c.b16 %v3230, %v3230
        %v3263 = vpack.c.b16 %v3231, %v3231
        %v3264 = vpack.c.b16 %v3232, %v3232
        %v3265 = vpack.c.b16 %v3233, %v3233
        %v3266 = vpack.c.b16 %v3234, %v3234
        %v3267 = vpack.c.b16 %v3235, %v3235
        %v3268 = vpack.c.b16 %v3236, %v3236
        %v3269 = vpack.c.b16 %v3237, %v3237
        %v3270 = vpack.c.b16 %v3238, %v3238
        %v3271 = vpack.c.b16 %v3239, %v3239
        %v3272 = vpack.c.b16 %v3240, %v3240
        %v3273 = vpack.c.b16 %v3241, %v3241
        %v3274 = vpack.c.b16 %v3242, %v3242
        %v3275 = vpack.c.b16 %v3243, %v3243
        %v3277 = vshrl.u32 %v3244, 16
        %v3279 = vrot.slane %v3277, 7
        %v3280 = vshll.u32 %v3244, 16
        %v3282 = vor.u32 %v3279, %v3280
        %v3283 = vrot.slane %v3279, 4
        %v3285 = vshrl.u32 %v3245, 16
        %v3287 = vrot.slane %v3285, 7
        %v3288 = vshll.u32 %v3245, 16
        %v3290 = vor.u32 %v3287, %v3288
        %v3291 = vsel %vm368, %v3283, %v3290
        %v3292 = vrot.slane %v3287, 4
        %v3294 = vshrl.u32 %v3246, 16
        %v3296 = vrot.slane %v3294, 7
        %v3297 = vshll.u32 %v3246, 16
        %v3299 = vor.u32 %v3296, %v3297
        %v3300 = vrot.slane %v3296, 4
        %v3302 = vshrl.u32 %v3247, 16
        %v3304 = vrot.slane %v3302, 7
        %v3305 = vshll.u32 %v3247, 16
        %v3307 = vor.u32 %v3304, %v3305
        %v3308 = vsel %vm368, %v3300, %v3307
        %v3309 = vrot.slane %v3304, 4
        %v3311 = vshrl.u32 %v3248, 16
        %v3313 = vrot.slane %v3311, 7
        %v3314 = vshll.u32 %v3248, 16
        %v3316 = vor.u32 %v3313, %v3314
        %v3317 = vrot.slane %v3313, 4
        %v3319 = vshrl.u32 %v3249, 16
        %v3321 = vrot.slane %v3319, 7
        %v3322 = vshll.u32 %v3249, 16
        %v3324 = vor.u32 %v3321, %v3322
        %v3325 = vsel %vm368, %v3317, %v3324
        %v3326 = vrot.slane %v3321, 4
        %v3328 = vshrl.u32 %v3250, 16
        %v3330 = vrot.slane %v3328, 7
        %v3331 = vshll.u32 %v3250, 16
        %v3333 = vor.u32 %v3330, %v3331
        %v3334 = vrot.slane %v3330, 4
        %v3336 = vshrl.u32 %v3251, 16
        %v3338 = vrot.slane %v3336, 7
        %v3339 = vshll.u32 %v3251, 16
        %v3341 = vor.u32 %v3338, %v3339
        %v3342 = vsel %vm368, %v3334, %v3341
        %v3343 = vrot.slane %v3338, 4
        %v3345 = vshrl.u32 %v3252, 16
        %v3347 = vrot.slane %v3345, 7
        %v3348 = vshll.u32 %v3252, 16
        %v3350 = vor.u32 %v3347, %v3348
        %v3351 = vrot.slane %v3347, 4
        %v3353 = vshrl.u32 %v3253, 16
        %v3355 = vrot.slane %v3353, 7
        %v3356 = vshll.u32 %v3253, 16
        %v3358 = vor.u32 %v3355, %v3356
        %v3359 = vsel %vm368, %v3351, %v3358
        %v3360 = vrot.slane %v3355, 4
        %v3362 = vshrl.u32 %v3254, 16
        %v3364 = vrot.slane %v3362, 7
        %v3365 = vshll.u32 %v3254, 16
        %v3367 = vor.u32 %v3364, %v3365
        %v3368 = vrot.slane %v3364, 4
        %v3370 = vshrl.u32 %v3255, 16
        %v3372 = vrot.slane %v3370, 7
        %v3373 = vshll.u32 %v3255, 16
        %v3375 = vor.u32 %v3372, %v3373
        %v3376 = vsel %vm368, %v3368, %v3375
        %v3377 = vrot.slane %v3372, 4
        %v3379 = vshrl.u32 %v3256, 16
        %v3381 = vrot.slane %v3379, 7
        %v3382 = vshll.u32 %v3256, 16
        %v3384 = vor.u32 %v3381, %v3382
        %v3385 = vrot.slane %v3381, 4
        %v3387 = vshrl.u32 %v3257, 16
        %v3389 = vrot.slane %v3387, 7
        %v3390 = vshll.u32 %v3257, 16
        %v3392 = vor.u32 %v3389, %v3390
        %v3393 = vsel %vm368, %v3385, %v3392
        %v3394 = vrot.slane %v3389, 4
        %v3396 = vshrl.u32 %v3258, 16
        %v3398 = vrot.slane %v3396, 7
        %v3399 = vshll.u32 %v3258, 16
        %v3401 = vor.u32 %v3398, %v3399
        %v3402 = vrot.slane %v3398, 4
        %v3404 = vshrl.u32 %v3259, 16
        %v3406 = vrot.slane %v3404, 7
        %v3407 = vshll.u32 %v3259, 16
        %v3409 = vor.u32 %v3406, %v3407
        %v3410 = vsel %vm368, %v3402, %v3409
        %v3411 = vrot.slane %v3406, 4
        %v3413 = vshrl.u32 %v3260, 16
        %v3415 = vrot.slane %v3413, 7
        %v3416 = vshll.u32 %v3260, 16
        %v3418 = vor.u32 %v3415, %v3416
        %v3419 = vrot.slane %v3415, 4
        %v3421 = vshrl.u32 %v3261, 16
        %v3423 = vrot.slane %v3421, 7
        %v3424 = vshll.u32 %v3261, 16
        %v3426 = vor.u32 %v3423, %v3424
        %v3427 = vsel %vm368, %v3419, %v3426
        %v3428 = vrot.slane %v3423, 4
        %v3430 = vshrl.u32 %v3262, 16
        %v3432 = vrot.slane %v3430, 7
        %v3433 = vshll.u32 %v3262, 16
        %v3435 = vor.u32 %v3432, %v3433
        %v3436 = vrot.slane %v3432, 4
        %v3438 = vshrl.u32 %v3263, 16
        %v3440 = vrot.slane %v3438, 7
        %v3441 = vshll.u32 %v3263, 16
        %v3443 = vor.u32 %v3440, %v3441
        %v3444 = vsel %vm368, %v3436, %v3443
        %v3445 = vrot.slane %v3440, 4
        %v3447 = vshrl.u32 %v3264, 16
        %v3449 = vrot.slane %v3447, 7
        %v3450 = vshll.u32 %v3264, 16
        %v3452 = vor.u32 %v3449, %v3450
        %v3453 = vrot.slane %v3449, 4
        %v3455 = vshrl.u32 %v3265, 16
        %v3457 = vrot.slane %v3455, 7
        %v3458 = vshll.u32 %v3265, 16
        %v3460 = vor.u32 %v3457, %v3458
        %v3461 = vsel %vm368, %v3453, %v3460
        %v3462 = vrot.slane %v3457, 4
        %v3464 = vshrl.u32 %v3266, 16
        %v3466 = vrot.slane %v3464, 7
        %v3467 = vshll.u32 %v3266, 16
        %v3469 = vor.u32 %v3466, %v3467
        %v3470 = vrot.slane %v3466, 4
        %v3472 = vshrl.u32 %v3267, 16
        %v3474 = vrot.slane %v3472, 7
        %v3475 = vshll.u32 %v3267, 16
        %v3477 = vor.u32 %v3474, %v3475
        %v3478 = vsel %vm368, %v3470, %v3477
        %v3479 = vrot.slane %v3474, 4
        %v3481 = vshrl.u32 %v3268, 16
        %v3483 = vrot.slane %v3481, 7
        %v3484 = vshll.u32 %v3268, 16
        %v3486 = vor.u32 %v3483, %v3484
        %v3487 = vrot.slane %v3483, 4
        %v3489 = vshrl.u32 %v3269, 16
        %v3491 = vrot.slane %v3489, 7
        %v3492 = vshll.u32 %v3269, 16
        %v3494 = vor.u32 %v3491, %v3492
        %v3495 = vsel %vm368, %v3487, %v3494
        %v3496 = vrot.slane %v3491, 4
        %v3498 = vshrl.u32 %v3270, 16
        %v3500 = vrot.slane %v3498, 7
        %v3501 = vshll.u32 %v3270, 16
        %v3503 = vor.u32 %v3500, %v3501
        %v3504 = vrot.slane %v3500, 4
        %v3506 = vshrl.u32 %v3271, 16
        %v3508 = vrot.slane %v3506, 7
        %v3509 = vshll.u32 %v3271, 16
        %v3511 = vor.u32 %v3508, %v3509
        %v3512 = vsel %vm368, %v3504, %v3511
        %v3513 = vrot.slane %v3508, 4
        %v3515 = vshrl.u32 %v3272, 16
        %v3517 = vrot.slane %v3515, 7
        %v3518 = vshll.u32 %v3272, 16
        %v3520 = vor.u32 %v3517, %v3518
        %v3521 = vrot.slane %v3517, 4
        %v3523 = vshrl.u32 %v3273, 16
        %v3525 = vrot.slane %v3523, 7
        %v3526 = vshll.u32 %v3273, 16
        %v3528 = vor.u32 %v3525, %v3526
        %v3529 = vsel %vm368, %v3521, %v3528
        %v3530 = vrot.slane %v3525, 4
        %v3532 = vshrl.u32 %v3274, 16
        %v3534 = vrot.slane %v3532, 7
        %v3535 = vshll.u32 %v3274, 16
        %v3537 = vor.u32 %v3534, %v3535
        %v3538 = vrot.slane %v3534, 4
        %v3540 = vshrl.u32 %v3275, 16
        %v3542 = vrot.slane %v3540, 7
        %v3543 = vshll.u32 %v3275, 16
        %v3545 = vor.u32 %v3542, %v3543
        %v3546 = vsel %vm368, %v3538, %v3545
        %v3547 = vrot.slane %v3542, 4
        %vm3596 = vcmask 125952
        %vm3597 = vmand %vm3596, %vm317
        %v3598 = vld [vmem:[%s3096] sm:$0xf]
        %v3599 = vsel %vm3597, %v3282, %v3598
        %3600 = vst [vmem:[%s3096] sm:$0xf] %v3599
        %3601 = vst.msk [vmem:[%s3096 + $0x4] sm:$0xf] %vm3087, %v3291
        %v3602 = vld [vmem:[%s3096 + $0x8] sm:$0x1]
        %v3603 = vsel %vm3098, %v3292, %v3602
        %3604 = vst [vmem:[%s3096 + $0x8] sm:$0x1] %v3603
        %v3605 = vld [vmem:[%s3096 + $0xc] sm:$0xf]
        %v3606 = vsel %vm3597, %v3299, %v3605
        %3607 = vst [vmem:[%s3096 + $0xc] sm:$0xf] %v3606
        %3608 = vst.msk [vmem:[%s3096 + $0x10] sm:$0xf] %vm3087, %v3308
        %v3609 = vld [vmem:[%s3096 + $0x14] sm:$0x1]
        %v3610 = vsel %vm3098, %v3309, %v3609
        %3611 = vst [vmem:[%s3096 + $0x14] sm:$0x1] %v3610
        %v3612 = vld [vmem:[%s3096 + $0x18] sm:$0xf]
        %v3613 = vsel %vm3597, %v3316, %v3612
        %3614 = vst [vmem:[%s3096 + $0x18] sm:$0xf] %v3613
        %3615 = vst.msk [vmem:[%s3096 + $0x1c] sm:$0xf] %vm3087, %v3325
        %v3616 = vld [vmem:[%s3096 + $0x20] sm:$0x1]
        %v3617 = vsel %vm3098, %v3326, %v3616
        %3618 = vst [vmem:[%s3096 + $0x20] sm:$0x1] %v3617
        %v3619 = vld [vmem:[%s3096 + $0x24] sm:$0xf]
        %v3620 = vsel %vm3597, %v3333, %v3619
        %3621 = vst [vmem:[%s3096 + $0x24] sm:$0xf] %v3620
        %3622 = vst.msk [vmem:[%s3096 + $0x28] sm:$0xf] %vm3087, %v3342
        %v3623 = vld [vmem:[%s3096 + $0x2c] sm:$0x1]
        %v3624 = vsel %vm3098, %v3343, %v3623
        %3625 = vst [vmem:[%s3096 + $0x2c] sm:$0x1] %v3624
        %v3626 = vld [vmem:[%s3096 + $0x30] sm:$0xf]
        %v3627 = vsel %vm3597, %v3350, %v3626
        %3628 = vst [vmem:[%s3096 + $0x30] sm:$0xf] %v3627
        %3629 = vst.msk [vmem:[%s3096 + $0x34] sm:$0xf] %vm3087, %v3359
        %v3630 = vld [vmem:[%s3096 + $0x38] sm:$0x1]
        %v3631 = vsel %vm3098, %v3360, %v3630
        %3632 = vst [vmem:[%s3096 + $0x38] sm:$0x1] %v3631
        %v3633 = vld [vmem:[%s3096 + $0x3c] sm:$0xf]
        %v3634 = vsel %vm3597, %v3367, %v3633
        %3635 = vst [vmem:[%s3096 + $0x3c] sm:$0xf] %v3634
        %3636 = vst.msk [vmem:[%s3096 + $0x40] sm:$0xf] %vm3087, %v3376
        %v3637 = vld [vmem:[%s3096 + $0x44] sm:$0x1]
        %v3638 = vsel %vm3098, %v3377, %v3637
        %3639 = vst [vmem:[%s3096 + $0x44] sm:$0x1] %v3638
        %v3640 = vld [vmem:[%s3096 + $0x48] sm:$0xf]
        %v3641 = vsel %vm3597, %v3384, %v3640
        %3642 = vst [vmem:[%s3096 + $0x48] sm:$0xf] %v3641
        %3643 = vst.msk [vmem:[%s3096 + $0x4c] sm:$0xf] %vm3087, %v3393
        %v3644 = vld [vmem:[%s3096 + $0x50] sm:$0x1]
        %v3645 = vsel %vm3098, %v3394, %v3644
        %3646 = vst [vmem:[%s3096 + $0x50] sm:$0x1] %v3645
        %v3647 = vld [vmem:[%s3096 + $0x54] sm:$0xf]
        %v3648 = vsel %vm3597, %v3401, %v3647
        %3649 = vst [vmem:[%s3096 + $0x54] sm:$0xf] %v3648
        %3650 = vst.msk [vmem:[%s3096 + $0x58] sm:$0xf] %vm3087, %v3410
        %v3651 = vld [vmem:[%s3096 + $0x5c] sm:$0x1]
        %v3652 = vsel %vm3098, %v3411, %v3651
        %3653 = vst [vmem:[%s3096 + $0x5c] sm:$0x1] %v3652
        %v3654 = vld [vmem:[%s3096 + $0x60] sm:$0xf]
        %v3655 = vsel %vm3597, %v3418, %v3654
        %3656 = vst [vmem:[%s3096 + $0x60] sm:$0xf] %v3655
        %3657 = vst.msk [vmem:[%s3096 + $0x64] sm:$0xf] %vm3087, %v3427
        %v3658 = vld [vmem:[%s3096 + $0x68] sm:$0x1]
        %v3659 = vsel %vm3098, %v3428, %v3658
        %3660 = vst [vmem:[%s3096 + $0x68] sm:$0x1] %v3659
        %v3661 = vld [vmem:[%s3096 + $0x6c] sm:$0xf]
        %v3662 = vsel %vm3597, %v3435, %v3661
        %3663 = vst [vmem:[%s3096 + $0x6c] sm:$0xf] %v3662
        %3664 = vst.msk [vmem:[%s3096 + $0x70] sm:$0xf] %vm3087, %v3444
        %v3665 = vld [vmem:[%s3096 + $0x74] sm:$0x1]
        %v3666 = vsel %vm3098, %v3445, %v3665
        %3667 = vst [vmem:[%s3096 + $0x74] sm:$0x1] %v3666
        %v3668 = vld [vmem:[%s3096 + $0x78] sm:$0xf]
        %v3669 = vsel %vm3597, %v3452, %v3668
        %3670 = vst [vmem:[%s3096 + $0x78] sm:$0xf] %v3669
        %3671 = vst.msk [vmem:[%s3096 + $0x7c] sm:$0xf] %vm3087, %v3461
        %v3672 = vld [vmem:[%s3096 + $0x80] sm:$0x1]
        %v3673 = vsel %vm3098, %v3462, %v3672
        %3674 = vst [vmem:[%s3096 + $0x80] sm:$0x1] %v3673
        %v3675 = vld [vmem:[%s3096 + $0x84] sm:$0xf]
        %v3676 = vsel %vm3597, %v3469, %v3675
        %3677 = vst [vmem:[%s3096 + $0x84] sm:$0xf] %v3676
        %3678 = vst.msk [vmem:[%s3096 + $0x88] sm:$0xf] %vm3087, %v3478
        %v3679 = vld [vmem:[%s3096 + $0x8c] sm:$0x1]
        %v3680 = vsel %vm3098, %v3479, %v3679
        %3681 = vst [vmem:[%s3096 + $0x8c] sm:$0x1] %v3680
        %v3682 = vld [vmem:[%s3096 + $0x90] sm:$0xf]
        %v3683 = vsel %vm3597, %v3486, %v3682
        %3684 = vst [vmem:[%s3096 + $0x90] sm:$0xf] %v3683
        %3685 = vst.msk [vmem:[%s3096 + $0x94] sm:$0xf] %vm3087, %v3495
        %v3686 = vld [vmem:[%s3096 + $0x98] sm:$0x1]
        %v3687 = vsel %vm3098, %v3496, %v3686
        %3688 = vst [vmem:[%s3096 + $0x98] sm:$0x1] %v3687
        %v3689 = vld [vmem:[%s3096 + $0x9c] sm:$0xf]
        %v3690 = vsel %vm3597, %v3503, %v3689
        %3691 = vst [vmem:[%s3096 + $0x9c] sm:$0xf] %v3690
        %3692 = vst.msk [vmem:[%s3096 + $0xa0] sm:$0xf] %vm3087, %v3512
        %v3693 = vld [vmem:[%s3096 + $0xa4] sm:$0x1]
        %v3694 = vsel %vm3098, %v3513, %v3693
        %3695 = vst [vmem:[%s3096 + $0xa4] sm:$0x1] %v3694
        %v3696 = vld [vmem:[%s3096 + $0xa8] sm:$0xf]
        %v3697 = vsel %vm3597, %v3520, %v3696
        %3698 = vst [vmem:[%s3096 + $0xa8] sm:$0xf] %v3697
        %3699 = vst.msk [vmem:[%s3096 + $0xac] sm:$0xf] %vm3087, %v3529
        %v3700 = vld [vmem:[%s3096 + $0xb0] sm:$0x1]
        %v3701 = vsel %vm3098, %v3530, %v3700
        %3702 = vst [vmem:[%s3096 + $0xb0] sm:$0x1] %v3701
        %v3703 = vld [vmem:[%s3096 + $0xb4] sm:$0xf]
        %v3704 = vsel %vm3597, %v3537, %v3703
        %3705 = vst [vmem:[%s3096 + $0xb4] sm:$0xf] %v3704
        %3706 = vst.msk [vmem:[%s3096 + $0xb8] sm:$0xf] %vm3087, %v3546
        %v3707 = vld [vmem:[%s3096 + $0xbc] sm:$0x1]
        %v3708 = vsel %vm3098, %v3547, %v3707
        %3709 = vst [vmem:[%s3096 + $0xbc] sm:$0x1] %v3708
        %v3710 = vld [vmem:[#allocation3] sm:$0xf]
        %v3711 = vld [vmem:[#allocation3 + $0x4] sm:$0xf]
        %v3712 = vld [vmem:[#allocation3 + $0xc] sm:$0xf]
        %v3713 = vld [vmem:[#allocation3 + $0x10] sm:$0xf]
        %v3714 = vld [vmem:[#allocation3 + $0x18] sm:$0xf]
        %v3715 = vld [vmem:[#allocation3 + $0x1c] sm:$0xf]
        %v3716 = vld [vmem:[#allocation3 + $0x24] sm:$0xf]
        %v3717 = vld [vmem:[#allocation3 + $0x28] sm:$0xf]
        %v3718 = vld [vmem:[#allocation3 + $0x30] sm:$0xf]
        %v3719 = vld [vmem:[#allocation3 + $0x34] sm:$0xf]
        %v3720 = vld [vmem:[#allocation3 + $0x3c] sm:$0xf]
        %v3721 = vld [vmem:[#allocation3 + $0x40] sm:$0xf]
        %v3722 = vld [vmem:[#allocation3 + $0x48] sm:$0xf]
        %v3723 = vld [vmem:[#allocation3 + $0x4c] sm:$0xf]
        %v3724 = vld [vmem:[#allocation3 + $0x54] sm:$0xf]
        %v3725 = vld [vmem:[#allocation3 + $0x58] sm:$0xf]
        %v3726 = vld [vmem:[#allocation3 + $0x60] sm:$0xf]
        %v3727 = vld [vmem:[#allocation3 + $0x64] sm:$0xf]
        %v3728 = vld [vmem:[#allocation3 + $0x6c] sm:$0xf]
        %v3729 = vld [vmem:[#allocation3 + $0x70] sm:$0xf]
        %v3730 = vld [vmem:[#allocation3 + $0x78] sm:$0xf]
        %v3731 = vld [vmem:[#allocation3 + $0x7c] sm:$0xf]
        %v3732 = vld [vmem:[#allocation3 + $0x84] sm:$0xf]
        %v3733 = vld [vmem:[#allocation3 + $0x88] sm:$0xf]
        %v3734 = vld [vmem:[#allocation3 + $0x90] sm:$0xf]
        %v3735 = vld [vmem:[#allocation3 + $0x94] sm:$0xf]
        %v3736 = vld [vmem:[#allocation3 + $0x9c] sm:$0xf]
        %v3737 = vld [vmem:[#allocation3 + $0xa0] sm:$0xf]
        %v3738 = vld [vmem:[#allocation3 + $0xa8] sm:$0xf]
        %v3739 = vld [vmem:[#allocation3 + $0xac] sm:$0xf]
        %v3740 = vld [vmem:[#allocation3 + $0xb4] sm:$0xf]
        %v3741 = vld [vmem:[#allocation3 + $0xb8] sm:$0xf]
        %v3742 = vld [vmem:[#allocation3 + $0x8] sm:$0x1]
        %v3743 = vld [vmem:[#allocation3 + $0x14] sm:$0x1]
        %v3744 = vld [vmem:[#allocation3 + $0x20] sm:$0x1]
        %v3745 = vld [vmem:[#allocation3 + $0x2c] sm:$0x1]
        %v3746 = vld [vmem:[#allocation3 + $0x38] sm:$0x1]
        %v3747 = vld [vmem:[#allocation3 + $0x44] sm:$0x1]
        %v3748 = vld [vmem:[#allocation3 + $0x50] sm:$0x1]
        %v3749 = vld [vmem:[#allocation3 + $0x5c] sm:$0x1]
        %v3750 = vld [vmem:[#allocation3 + $0x68] sm:$0x1]
        %v3751 = vld [vmem:[#allocation3 + $0x74] sm:$0x1]
        %v3752 = vld [vmem:[#allocation3 + $0x80] sm:$0x1]
        %v3753 = vld [vmem:[#allocation3 + $0x8c] sm:$0x1]
        %v3754 = vld [vmem:[#allocation3 + $0x98] sm:$0x1]
        %v3755 = vld [vmem:[#allocation3 + $0xa4] sm:$0x1]
        %v3756 = vld [vmem:[#allocation3 + $0xb0] sm:$0x1]
        %v3757 = vld [vmem:[#allocation3 + $0xbc] sm:$0x1]
        %v3758 = vld [vmem:[#allocation3] sm:$0xe]
        %v3759 = vld [vmem:[#allocation3 + $0xc] sm:$0xe]
        %v3760 = vld [vmem:[#allocation3 + $0x18] sm:$0xe]
        %v3761 = vld [vmem:[#allocation3 + $0x24] sm:$0xe]
        %v3762 = vld [vmem:[#allocation3 + $0x30] sm:$0xe]
        %v3763 = vld [vmem:[#allocation3 + $0x3c] sm:$0xe]
        %v3764 = vld [vmem:[#allocation3 + $0x48] sm:$0xe]
        %v3765 = vld [vmem:[#allocation3 + $0x54] sm:$0xe]
        %v3766 = vld [vmem:[#allocation3 + $0x60] sm:$0xe]
        %v3767 = vld [vmem:[#allocation3 + $0x6c] sm:$0xe]
        %v3768 = vld [vmem:[#allocation3 + $0x78] sm:$0xe]
        %v3769 = vld [vmem:[#allocation3 + $0x84] sm:$0xe]
        %v3770 = vld [vmem:[#allocation3 + $0x90] sm:$0xe]
        %v3771 = vld [vmem:[#allocation3 + $0x9c] sm:$0xe]
        %v3772 = vld [vmem:[#allocation3 + $0xa8] sm:$0xe]
        %v3773 = vld [vmem:[#allocation3 + $0xb4] sm:$0xe]
        %v3774 = vld [vmem:[%s3096] sm:$0xf]
        %v3775 = vld [vmem:[%s3096 + $0x4] sm:$0xf]
        %v3776 = vld [vmem:[%s3096 + $0xc] sm:$0xf]
        %v3777 = vld [vmem:[%s3096 + $0x10] sm:$0xf]
        %v3778 = vld [vmem:[%s3096 + $0x18] sm:$0xf]
        %v3779 = vld [vmem:[%s3096 + $0x1c] sm:$0xf]
        %v3780 = vld [vmem:[%s3096 + $0x24] sm:$0xf]
        %v3781 = vld [vmem:[%s3096 + $0x28] sm:$0xf]
        %v3782 = vld [vmem:[%s3096 + $0x30] sm:$0xf]
        %v3783 = vld [vmem:[%s3096 + $0x34] sm:$0xf]
        %v3784 = vld [vmem:[%s3096 + $0x3c] sm:$0xf]
        %v3785 = vld [vmem:[%s3096 + $0x40] sm:$0xf]
        %v3786 = vld [vmem:[%s3096 + $0x48] sm:$0xf]
        %v3787 = vld [vmem:[%s3096 + $0x4c] sm:$0xf]
        %v3788 = vld [vmem:[%s3096 + $0x54] sm:$0xf]
        %v3789 = vld [vmem:[%s3096 + $0x58] sm:$0xf]
        %v3790 = vld [vmem:[%s3096 + $0x60] sm:$0xf]
        %v3791 = vld [vmem:[%s3096 + $0x64] sm:$0xf]
        %v3792 = vld [vmem:[%s3096 + $0x6c] sm:$0xf]
        %v3793 = vld [vmem:[%s3096 + $0x70] sm:$0xf]
        %v3794 = vld [vmem:[%s3096 + $0x78] sm:$0xf]
        %v3795 = vld [vmem:[%s3096 + $0x7c] sm:$0xf]
        %v3796 = vld [vmem:[%s3096 + $0x84] sm:$0xf]
        %v3797 = vld [vmem:[%s3096 + $0x88] sm:$0xf]
        %v3798 = vld [vmem:[%s3096 + $0x90] sm:$0xf]
        %v3799 = vld [vmem:[%s3096 + $0x94] sm:$0xf]
        %v3800 = vld [vmem:[%s3096 + $0x9c] sm:$0xf]
        %v3801 = vld [vmem:[%s3096 + $0xa0] sm:$0xf]
        %v3802 = vld [vmem:[%s3096 + $0xa8] sm:$0xf]
        %v3803 = vld [vmem:[%s3096 + $0xac] sm:$0xf]
        %v3804 = vld [vmem:[%s3096 + $0xb4] sm:$0xf]
        %v3805 = vld [vmem:[%s3096 + $0xb8] sm:$0xf]
        %v3806 = vld [vmem:[%s3096 + $0x8] sm:$0x1]
        %v3807 = vld [vmem:[%s3096 + $0x14] sm:$0x1]
        %v3808 = vld [vmem:[%s3096 + $0x20] sm:$0x1]
        %v3809 = vld [vmem:[%s3096 + $0x2c] sm:$0x1]
        %v3810 = vld [vmem:[%s3096 + $0x38] sm:$0x1]
        %v3811 = vld [vmem:[%s3096 + $0x44] sm:$0x1]
        %v3812 = vld [vmem:[%s3096 + $0x50] sm:$0x1]
        %v3813 = vld [vmem:[%s3096 + $0x5c] sm:$0x1]
        %v3814 = vld [vmem:[%s3096 + $0x68] sm:$0x1]
        %v3815 = vld [vmem:[%s3096 + $0x74] sm:$0x1]
        %v3816 = vld [vmem:[%s3096 + $0x80] sm:$0x1]
        %v3817 = vld [vmem:[%s3096 + $0x8c] sm:$0x1]
        %v3818 = vld [vmem:[%s3096 + $0x98] sm:$0x1]
        %v3819 = vld [vmem:[%s3096 + $0xa4] sm:$0x1]
        %v3820 = vld [vmem:[%s3096 + $0xb0] sm:$0x1]
        %v3821 = vld [vmem:[%s3096 + $0xbc] sm:$0x1]
        %v3822 = vld [vmem:[%s3096] sm:$0xe]
        %v3823 = vld [vmem:[%s3096 + $0xc] sm:$0xe]
        %v3824 = vld [vmem:[%s3096 + $0x18] sm:$0xe]
        %v3825 = vld [vmem:[%s3096 + $0x24] sm:$0xe]
        %v3826 = vld [vmem:[%s3096 + $0x30] sm:$0xe]
        %v3827 = vld [vmem:[%s3096 + $0x3c] sm:$0xe]
        %v3828 = vld [vmem:[%s3096 + $0x48] sm:$0xe]
        %v3829 = vld [vmem:[%s3096 + $0x54] sm:$0xe]
        %v3830 = vld [vmem:[%s3096 + $0x60] sm:$0xe]
        %v3831 = vld [vmem:[%s3096 + $0x6c] sm:$0xe]
        %v3832 = vld [vmem:[%s3096 + $0x78] sm:$0xe]
        %v3833 = vld [vmem:[%s3096 + $0x84] sm:$0xe]
        %v3834 = vld [vmem:[%s3096 + $0x90] sm:$0xe]
        %v3835 = vld [vmem:[%s3096 + $0x9c] sm:$0xe]
        %v3836 = vld [vmem:[%s3096 + $0xa8] sm:$0xe]
        %v3837 = vld [vmem:[%s3096 + $0xb4] sm:$0xe]
        %s3838 = scalar_lea.vmem [#allocation3], 24
        %v3839 = vld [vmem:[%s3838] sm:$0xf]
        %v3840 = vld [vmem:[%s3838 + $0x4] sm:$0xf]
        %v3841 = vld [vmem:[%s3838 + $0xc] sm:$0xf]
        %v3842 = vld [vmem:[%s3838 + $0x10] sm:$0xf]
        %v3843 = vld [vmem:[%s3838 + $0x18] sm:$0xf]
        %v3844 = vld [vmem:[%s3838 + $0x1c] sm:$0xf]
        %v3845 = vld [vmem:[%s3838 + $0x24] sm:$0xf]
        %v3846 = vld [vmem:[%s3838 + $0x28] sm:$0xf]
        %v3847 = vld [vmem:[%s3838 + $0x30] sm:$0xf]
        %v3848 = vld [vmem:[%s3838 + $0x34] sm:$0xf]
        %v3849 = vld [vmem:[%s3838 + $0x3c] sm:$0xf]
        %v3850 = vld [vmem:[%s3838 + $0x40] sm:$0xf]
        %v3851 = vld [vmem:[%s3838 + $0x48] sm:$0xf]
        %v3852 = vld [vmem:[%s3838 + $0x4c] sm:$0xf]
        %v3853 = vld [vmem:[%s3838 + $0x54] sm:$0xf]
        %v3854 = vld [vmem:[%s3838 + $0x58] sm:$0xf]
        %v3855 = vld [vmem:[%s3838 + $0x60] sm:$0xf]
        %v3856 = vld [vmem:[%s3838 + $0x64] sm:$0xf]
        %v3857 = vld [vmem:[%s3838 + $0x6c] sm:$0xf]
        %v3858 = vld [vmem:[%s3838 + $0x70] sm:$0xf]
        %v3859 = vld [vmem:[%s3838 + $0x78] sm:$0xf]
        %v3860 = vld [vmem:[%s3838 + $0x7c] sm:$0xf]
        %v3861 = vld [vmem:[%s3838 + $0x84] sm:$0xf]
        %v3862 = vld [vmem:[%s3838 + $0x88] sm:$0xf]
        %v3863 = vld [vmem:[%s3838 + $0x90] sm:$0xf]
        %v3864 = vld [vmem:[%s3838 + $0x94] sm:$0xf]
        %v3865 = vld [vmem:[%s3838 + $0x9c] sm:$0xf]
        %v3866 = vld [vmem:[%s3838 + $0xa0] sm:$0xf]
        %v3867 = vld [vmem:[%s3838 + $0xa8] sm:$0xf]
        %v3868 = vld [vmem:[%s3838 + $0xac] sm:$0xf]
        %v3869 = vld [vmem:[%s3838 + $0xb4] sm:$0xf]
        %v3870 = vld [vmem:[%s3838 + $0xb8] sm:$0xf]
        %v3871 = vld [vmem:[%s3838 + $0x8] sm:$0x1]
        %v3872 = vld [vmem:[%s3838 + $0x14] sm:$0x1]
        %v3873 = vld [vmem:[%s3838 + $0x20] sm:$0x1]
        %v3874 = vld [vmem:[%s3838 + $0x2c] sm:$0x1]
        %v3875 = vld [vmem:[%s3838 + $0x38] sm:$0x1]
        %v3876 = vld [vmem:[%s3838 + $0x44] sm:$0x1]
        %v3877 = vld [vmem:[%s3838 + $0x50] sm:$0x1]
        %v3878 = vld [vmem:[%s3838 + $0x5c] sm:$0x1]
        %v3879 = vld [vmem:[%s3838 + $0x68] sm:$0x1]
        %v3880 = vld [vmem:[%s3838 + $0x74] sm:$0x1]
        %v3881 = vld [vmem:[%s3838 + $0x80] sm:$0x1]
        %v3882 = vld [vmem:[%s3838 + $0x8c] sm:$0x1]
        %v3883 = vld [vmem:[%s3838 + $0x98] sm:$0x1]
        %v3884 = vld [vmem:[%s3838 + $0xa4] sm:$0x1]
        %v3885 = vld [vmem:[%s3838 + $0xb0] sm:$0x1]
        %v3886 = vld [vmem:[%s3838 + $0xbc] sm:$0x1]
        %v3887 = vld [vmem:[%s3838] sm:$0xe]
        %v3888 = vld [vmem:[%s3838 + $0xc] sm:$0xe]
        %v3889 = vld [vmem:[%s3838 + $0x18] sm:$0xe]
        %v3890 = vld [vmem:[%s3838 + $0x24] sm:$0xe]
        %v3891 = vld [vmem:[%s3838 + $0x30] sm:$0xe]
        %v3892 = vld [vmem:[%s3838 + $0x3c] sm:$0xe]
        %v3893 = vld [vmem:[%s3838 + $0x48] sm:$0xe]
        %v3894 = vld [vmem:[%s3838 + $0x54] sm:$0xe]
        %v3895 = vld [vmem:[%s3838 + $0x60] sm:$0xe]
        %v3896 = vld [vmem:[%s3838 + $0x6c] sm:$0xe]
        %v3897 = vld [vmem:[%s3838 + $0x78] sm:$0xe]
        %v3898 = vld [vmem:[%s3838 + $0x84] sm:$0xe]
        %v3899 = vld [vmem:[%s3838 + $0x90] sm:$0xe]
        %v3900 = vld [vmem:[%s3838 + $0x9c] sm:$0xe]
        %v3901 = vld [vmem:[%s3838 + $0xa8] sm:$0xe]
        %v3902 = vld [vmem:[%s3838 + $0xb4] sm:$0xe]
        %v3935 = vunpack.c.l.b16 %v3710
        %v3936 = vunpack.c.l.b16 %v3711
        %v3937 = vunpack.c.l.b16 %v3712
        %v3938 = vunpack.c.l.b16 %v3713
        %v3939 = vunpack.c.l.b16 %v3714
        %v3940 = vunpack.c.l.b16 %v3715
        %v3941 = vunpack.c.l.b16 %v3716
        %v3942 = vunpack.c.l.b16 %v3717
        %v3943 = vunpack.c.l.b16 %v3718
        %v3944 = vunpack.c.l.b16 %v3719
        %v3945 = vunpack.c.l.b16 %v3720
        %v3946 = vunpack.c.l.b16 %v3721
        %v3947 = vunpack.c.l.b16 %v3722
        %v3948 = vunpack.c.l.b16 %v3723
        %v3949 = vunpack.c.l.b16 %v3724
        %v3950 = vunpack.c.l.b16 %v3725
        %v3951 = vunpack.c.l.b16 %v3726
        %v3952 = vunpack.c.l.b16 %v3727
        %v3953 = vunpack.c.l.b16 %v3728
        %v3954 = vunpack.c.l.b16 %v3729
        %v3955 = vunpack.c.l.b16 %v3730
        %v3956 = vunpack.c.l.b16 %v3731
        %v3957 = vunpack.c.l.b16 %v3732
        %v3958 = vunpack.c.l.b16 %v3733
        %v3959 = vunpack.c.l.b16 %v3734
        %v3960 = vunpack.c.l.b16 %v3735
        %v3961 = vunpack.c.l.b16 %v3736
        %v3962 = vunpack.c.l.b16 %v3737
        %v3963 = vunpack.c.l.b16 %v3738
        %v3964 = vunpack.c.l.b16 %v3739
        %v3965 = vunpack.c.l.b16 %v3740
        %v3966 = vunpack.c.l.b16 %v3741
        %v3967 = vpack.c.b16 %v3936, %v3935
        %v3968 = vpack.c.b16 %v3938, %v3937
        %v3969 = vpack.c.b16 %v3940, %v3939
        %v3970 = vpack.c.b16 %v3942, %v3941
        %v3971 = vpack.c.b16 %v3944, %v3943
        %v3972 = vpack.c.b16 %v3946, %v3945
        %v3973 = vpack.c.b16 %v3948, %v3947
        %v3974 = vpack.c.b16 %v3950, %v3949
        %v3975 = vpack.c.b16 %v3952, %v3951
        %v3976 = vpack.c.b16 %v3954, %v3953
        %v3977 = vpack.c.b16 %v3956, %v3955
        %v3978 = vpack.c.b16 %v3958, %v3957
        %v3979 = vpack.c.b16 %v3960, %v3959
        %v3980 = vpack.c.b16 %v3962, %v3961
        %v3981 = vpack.c.b16 %v3964, %v3963
        %v3982 = vpack.c.b16 %v3966, %v3965
        %v3999 = vunpack.c.l.b16 %v3742
        %v4000 = vunpack.c.l.b16 %v3743
        %v4001 = vunpack.c.l.b16 %v3744
        %v4002 = vunpack.c.l.b16 %v3745
        %v4003 = vunpack.c.l.b16 %v3746
        %v4004 = vunpack.c.l.b16 %v3747
        %v4005 = vunpack.c.l.b16 %v3748
        %v4006 = vunpack.c.l.b16 %v3749
        %v4007 = vunpack.c.l.b16 %v3750
        %v4008 = vunpack.c.l.b16 %v3751
        %v4009 = vunpack.c.l.b16 %v3752
        %v4010 = vunpack.c.l.b16 %v3753
        %v4011 = vunpack.c.l.b16 %v3754
        %v4012 = vunpack.c.l.b16 %v3755
        %v4013 = vunpack.c.l.b16 %v3756
        %v4014 = vunpack.c.l.b16 %v3757
        %v4015 = vpack.c.b16 %v3999, %v3999
        %v4016 = vpack.c.b16 %v4000, %v4000
        %v4017 = vpack.c.b16 %v4001, %v4001
        %v4018 = vpack.c.b16 %v4002, %v4002
        %v4019 = vpack.c.b16 %v4003, %v4003
        %v4020 = vpack.c.b16 %v4004, %v4004
        %v4021 = vpack.c.b16 %v4005, %v4005
        %v4022 = vpack.c.b16 %v4006, %v4006
        %v4023 = vpack.c.b16 %v4007, %v4007
        %v4024 = vpack.c.b16 %v4008, %v4008
        %v4025 = vpack.c.b16 %v4009, %v4009
        %v4026 = vpack.c.b16 %v4010, %v4010
        %v4027 = vpack.c.b16 %v4011, %v4011
        %v4028 = vpack.c.b16 %v4012, %v4012
        %v4029 = vpack.c.b16 %v4013, %v4013
        %v4030 = vpack.c.b16 %v4014, %v4014
        %v4032 = vshrl.u32 %v3967, 16
        %v4034 = vshll.u32 %v3967, 16
        %v4036 = vrot.slane %v4034, 1
        %v4037 = vor.u32 %v4032, %v4036
        %v4039 = vshll.u32 %v4015, 16
        %v4041 = vrot.slane %v4039, 1
        %v4042 = vsel %vm1124, %v4037, %v4041
        %v4044 = vshrl.u32 %v3968, 16
        %v4046 = vshll.u32 %v3968, 16
        %v4048 = vrot.slane %v4046, 1
        %v4049 = vor.u32 %v4044, %v4048
        %v4051 = vshll.u32 %v4016, 16
        %v4053 = vrot.slane %v4051, 1
        %v4054 = vsel %vm1124, %v4049, %v4053
        %v4056 = vshrl.u32 %v3969, 16
        %v4058 = vshll.u32 %v3969, 16
        %v4060 = vrot.slane %v4058, 1
        %v4061 = vor.u32 %v4056, %v4060
        %v4063 = vshll.u32 %v4017, 16
        %v4065 = vrot.slane %v4063, 1
        %v4066 = vsel %vm1124, %v4061, %v4065
        %v4068 = vshrl.u32 %v3970, 16
        %v4070 = vshll.u32 %v3970, 16
        %v4072 = vrot.slane %v4070, 1
        %v4073 = vor.u32 %v4068, %v4072
        %v4075 = vshll.u32 %v4018, 16
        %v4077 = vrot.slane %v4075, 1
        %v4078 = vsel %vm1124, %v4073, %v4077
        %v4080 = vshrl.u32 %v3971, 16
        %v4082 = vshll.u32 %v3971, 16
        %v4084 = vrot.slane %v4082, 1
        %v4085 = vor.u32 %v4080, %v4084
        %v4087 = vshll.u32 %v4019, 16
        %v4089 = vrot.slane %v4087, 1
        %v4090 = vsel %vm1124, %v4085, %v4089
        %v4092 = vshrl.u32 %v3972, 16
        %v4094 = vshll.u32 %v3972, 16
        %v4096 = vrot.slane %v4094, 1
        %v4097 = vor.u32 %v4092, %v4096
        %v4099 = vshll.u32 %v4020, 16
        %v4101 = vrot.slane %v4099, 1
        %v4102 = vsel %vm1124, %v4097, %v4101
        %v4104 = vshrl.u32 %v3973, 16
        %v4106 = vshll.u32 %v3973, 16
        %v4108 = vrot.slane %v4106, 1
        %v4109 = vor.u32 %v4104, %v4108
        %v4111 = vshll.u32 %v4021, 16
        %v4113 = vrot.slane %v4111, 1
        %v4114 = vsel %vm1124, %v4109, %v4113
        %v4116 = vshrl.u32 %v3974, 16
        %v4118 = vshll.u32 %v3974, 16
        %v4120 = vrot.slane %v4118, 1
        %v4121 = vor.u32 %v4116, %v4120
        %v4123 = vshll.u32 %v4022, 16
        %v4125 = vrot.slane %v4123, 1
        %v4126 = vsel %vm1124, %v4121, %v4125
        %v4128 = vshrl.u32 %v3975, 16
        %v4130 = vshll.u32 %v3975, 16
        %v4132 = vrot.slane %v4130, 1
        %v4133 = vor.u32 %v4128, %v4132
        %v4135 = vshll.u32 %v4023, 16
        %v4137 = vrot.slane %v4135, 1
        %v4138 = vsel %vm1124, %v4133, %v4137
        %v4140 = vshrl.u32 %v3976, 16
        %v4142 = vshll.u32 %v3976, 16
        %v4144 = vrot.slane %v4142, 1
        %v4145 = vor.u32 %v4140, %v4144
        %v4147 = vshll.u32 %v4024, 16
        %v4149 = vrot.slane %v4147, 1
        %v4150 = vsel %vm1124, %v4145, %v4149
        %v4152 = vshrl.u32 %v3977, 16
        %v4154 = vshll.u32 %v3977, 16
        %v4156 = vrot.slane %v4154, 1
        %v4157 = vor.u32 %v4152, %v4156
        %v4159 = vshll.u32 %v4025, 16
        %v4161 = vrot.slane %v4159, 1
        %v4162 = vsel %vm1124, %v4157, %v4161
        %v4164 = vshrl.u32 %v3978, 16
        %v4166 = vshll.u32 %v3978, 16
        %v4168 = vrot.slane %v4166, 1
        %v4169 = vor.u32 %v4164, %v4168
        %v4171 = vshll.u32 %v4026, 16
        %v4173 = vrot.slane %v4171, 1
        %v4174 = vsel %vm1124, %v4169, %v4173
        %v4176 = vshrl.u32 %v3979, 16
        %v4178 = vshll.u32 %v3979, 16
        %v4180 = vrot.slane %v4178, 1
        %v4181 = vor.u32 %v4176, %v4180
        %v4183 = vshll.u32 %v4027, 16
        %v4185 = vrot.slane %v4183, 1
        %v4186 = vsel %vm1124, %v4181, %v4185
        %v4188 = vshrl.u32 %v3980, 16
        %v4190 = vshll.u32 %v3980, 16
        %v4192 = vrot.slane %v4190, 1
        %v4193 = vor.u32 %v4188, %v4192
        %v4195 = vshll.u32 %v4028, 16
        %v4197 = vrot.slane %v4195, 1
        %v4198 = vsel %vm1124, %v4193, %v4197
        %v4200 = vshrl.u32 %v3981, 16
        %v4202 = vshll.u32 %v3981, 16
        %v4204 = vrot.slane %v4202, 1
        %v4205 = vor.u32 %v4200, %v4204
        %v4207 = vshll.u32 %v4029, 16
        %v4209 = vrot.slane %v4207, 1
        %v4210 = vsel %vm1124, %v4205, %v4209
        %v4212 = vshrl.u32 %v3982, 16
        %v4214 = vshll.u32 %v3982, 16
        %v4216 = vrot.slane %v4214, 1
        %v4217 = vor.u32 %v4212, %v4216
        %v4219 = vshll.u32 %v4030, 16
        %v4221 = vrot.slane %v4219, 1
        %v4222 = vsel %vm1124, %v4217, %v4221
        %4223 = vrot.lane.b32.xlu0 %v4042, 16
        %v4224 = vpop.permute.xlu0 %4223
        %4225 = vrot.lane.b32.xlu0 %v4054, 16
        %v4226 = vpop.permute.xlu0 %4225
        %4227 = vrot.lane.b32.xlu0 %v4066, 16
        %v4228 = vpop.permute.xlu0 %4227
        %4229 = vrot.lane.b32.xlu0 %v4078, 16
        %v4230 = vpop.permute.xlu0 %4229
        %4231 = vrot.lane.b32.xlu0 %v4090, 16
        %v4232 = vpop.permute.xlu0 %4231
        %4233 = vrot.lane.b32.xlu0 %v4102, 16
        %v4234 = vpop.permute.xlu0 %4233
        %4235 = vrot.lane.b32.xlu0 %v4114, 16
        %v4236 = vpop.permute.xlu0 %4235
        %4237 = vrot.lane.b32.xlu0 %v4126, 16
        %v4238 = vpop.permute.xlu0 %4237
        %4239 = vrot.lane.b32.xlu0 %v4138, 16
        %v4240 = vpop.permute.xlu0 %4239
        %4241 = vrot.lane.b32.xlu0 %v4150, 16
        %v4242 = vpop.permute.xlu0 %4241
        %4243 = vrot.lane.b32.xlu0 %v4162, 16
        %v4244 = vpop.permute.xlu0 %4243
        %4245 = vrot.lane.b32.xlu0 %v4174, 16
        %v4246 = vpop.permute.xlu0 %4245
        %4247 = vrot.lane.b32.xlu0 %v4186, 16
        %v4248 = vpop.permute.xlu0 %4247
        %4249 = vrot.lane.b32.xlu0 %v4198, 16
        %v4250 = vpop.permute.xlu0 %4249
        %4251 = vrot.lane.b32.xlu0 %v4210, 16
        %v4252 = vpop.permute.xlu0 %4251
        %4253 = vrot.lane.b32.xlu0 %v4222, 16
        %v4254 = vpop.permute.xlu0 %4253
        %v4271 = vunpack.c.l.b16 %v3758
        %v4272 = vunpack.c.l.b16 %v3759
        %v4273 = vunpack.c.l.b16 %v3760
        %v4274 = vunpack.c.l.b16 %v3761
        %v4275 = vunpack.c.l.b16 %v3762
        %v4276 = vunpack.c.l.b16 %v3763
        %v4277 = vunpack.c.l.b16 %v3764
        %v4278 = vunpack.c.l.b16 %v3765
        %v4279 = vunpack.c.l.b16 %v3766
        %v4280 = vunpack.c.l.b16 %v3767
        %v4281 = vunpack.c.l.b16 %v3768
        %v4282 = vunpack.c.l.b16 %v3769
        %v4283 = vunpack.c.l.b16 %v3770
        %v4284 = vunpack.c.l.b16 %v3771
        %v4285 = vunpack.c.l.b16 %v3772
        %v4286 = vunpack.c.l.b16 %v3773
        %v4287 = vpack.c.b16 %v3936, %v4271
        %v4288 = vpack.c.b16 %v3938, %v4272
        %v4289 = vpack.c.b16 %v3940, %v4273
        %v4290 = vpack.c.b16 %v3942, %v4274
        %v4291 = vpack.c.b16 %v3944, %v4275
        %v4292 = vpack.c.b16 %v3946, %v4276
        %v4293 = vpack.c.b16 %v3948, %v4277
        %v4294 = vpack.c.b16 %v3950, %v4278
        %v4295 = vpack.c.b16 %v3952, %v4279
        %v4296 = vpack.c.b16 %v3954, %v4280
        %v4297 = vpack.c.b16 %v3956, %v4281
        %v4298 = vpack.c.b16 %v3958, %v4282
        %v4299 = vpack.c.b16 %v3960, %v4283
        %v4300 = vpack.c.b16 %v3962, %v4284
        %v4301 = vpack.c.b16 %v3964, %v4285
        %v4302 = vpack.c.b16 %v3966, %v4286
        %v4303 = vrot.slane %v4287, 1
        %v4304 = vrot.slane %v4015, 1
        %v4305 = vsel %vm1397, %v4303, %v4304
        %v4306 = vrot.slane %v4288, 1
        %v4307 = vrot.slane %v4016, 1
        %v4308 = vsel %vm1397, %v4306, %v4307
        %v4309 = vrot.slane %v4289, 1
        %v4310 = vrot.slane %v4017, 1
        %v4311 = vsel %vm1397, %v4309, %v4310
        %v4312 = vrot.slane %v4290, 1
        %v4313 = vrot.slane %v4018, 1
        %v4314 = vsel %vm1397, %v4312, %v4313
        %v4315 = vrot.slane %v4291, 1
        %v4316 = vrot.slane %v4019, 1
        %v4317 = vsel %vm1397, %v4315, %v4316
        %v4318 = vrot.slane %v4292, 1
        %v4319 = vrot.slane %v4020, 1
        %v4320 = vsel %vm1397, %v4318, %v4319
        %v4321 = vrot.slane %v4293, 1
        %v4322 = vrot.slane %v4021, 1
        %v4323 = vsel %vm1397, %v4321, %v4322
        %v4324 = vrot.slane %v4294, 1
        %v4325 = vrot.slane %v4022, 1
        %v4326 = vsel %vm1397, %v4324, %v4325
        %v4327 = vrot.slane %v4295, 1
        %v4328 = vrot.slane %v4023, 1
        %v4329 = vsel %vm1397, %v4327, %v4328
        %v4330 = vrot.slane %v4296, 1
        %v4331 = vrot.slane %v4024, 1
        %v4332 = vsel %vm1397, %v4330, %v4331
        %v4333 = vrot.slane %v4297, 1
        %v4334 = vrot.slane %v4025, 1
        %v4335 = vsel %vm1397, %v4333, %v4334
        %v4336 = vrot.slane %v4298, 1
        %v4337 = vrot.slane %v4026, 1
        %v4338 = vsel %vm1397, %v4336, %v4337
        %v4339 = vrot.slane %v4299, 1
        %v4340 = vrot.slane %v4027, 1
        %v4341 = vsel %vm1397, %v4339, %v4340
        %v4342 = vrot.slane %v4300, 1
        %v4343 = vrot.slane %v4028, 1
        %v4344 = vsel %vm1397, %v4342, %v4343
        %v4345 = vrot.slane %v4301, 1
        %v4346 = vrot.slane %v4029, 1
        %v4347 = vsel %vm1397, %v4345, %v4346
        %v4348 = vrot.slane %v4302, 1
        %v4349 = vrot.slane %v4030, 1
        %v4350 = vsel %vm1397, %v4348, %v4349
        %4351 = vrot.lane.b32.xlu0 %v4305, 32
        %v4352 = vpop.permute.xlu0 %4351
        %4353 = vrot.lane.b32.xlu0 %v4308, 32
        %v4354 = vpop.permute.xlu0 %4353
        %4355 = vrot.lane.b32.xlu0 %v4311, 32
        %v4356 = vpop.permute.xlu0 %4355
        %4357 = vrot.lane.b32.xlu0 %v4314, 32
        %v4358 = vpop.permute.xlu0 %4357
        %4359 = vrot.lane.b32.xlu0 %v4317, 32
        %v4360 = vpop.permute.xlu0 %4359
        %4361 = vrot.lane.b32.xlu0 %v4320, 32
        %v4362 = vpop.permute.xlu0 %4361
        %4363 = vrot.lane.b32.xlu0 %v4323, 32
        %v4364 = vpop.permute.xlu0 %4363
        %4365 = vrot.lane.b32.xlu0 %v4326, 32
        %v4366 = vpop.permute.xlu0 %4365
        %4367 = vrot.lane.b32.xlu0 %v4329, 32
        %v4368 = vpop.permute.xlu0 %4367
        %4369 = vrot.lane.b32.xlu0 %v4332, 32
        %v4370 = vpop.permute.xlu0 %4369
        %4371 = vrot.lane.b32.xlu0 %v4335, 32
        %v4372 = vpop.permute.xlu0 %4371
        %4373 = vrot.lane.b32.xlu0 %v4338, 32
        %v4374 = vpop.permute.xlu0 %4373
        %4375 = vrot.lane.b32.xlu0 %v4341, 32
        %v4376 = vpop.permute.xlu0 %4375
        %4377 = vrot.lane.b32.xlu0 %v4344, 32
        %v4378 = vpop.permute.xlu0 %4377
        %4379 = vrot.lane.b32.xlu0 %v4347, 32
        %v4380 = vpop.permute.xlu0 %4379
        %4381 = vrot.lane.b32.xlu0 %v4350, 32
        %v4382 = vpop.permute.xlu0 %4381
        %v4415 = vunpack.c.l.b16 %v3774
        %v4416 = vunpack.c.l.b16 %v3775
        %v4417 = vunpack.c.l.b16 %v3776
        %v4418 = vunpack.c.l.b16 %v3777
        %v4419 = vunpack.c.l.b16 %v3778
        %v4420 = vunpack.c.l.b16 %v3779
        %v4421 = vunpack.c.l.b16 %v3780
        %v4422 = vunpack.c.l.b16 %v3781
        %v4423 = vunpack.c.l.b16 %v3782
        %v4424 = vunpack.c.l.b16 %v3783
        %v4425 = vunpack.c.l.b16 %v3784
        %v4426 = vunpack.c.l.b16 %v3785
        %v4427 = vunpack.c.l.b16 %v3786
        %v4428 = vunpack.c.l.b16 %v3787
        %v4429 = vunpack.c.l.b16 %v3788
        %v4430 = vunpack.c.l.b16 %v3789
        %v4431 = vunpack.c.l.b16 %v3790
        %v4432 = vunpack.c.l.b16 %v3791
        %v4433 = vunpack.c.l.b16 %v3792
        %v4434 = vunpack.c.l.b16 %v3793
        %v4435 = vunpack.c.l.b16 %v3794
        %v4436 = vunpack.c.l.b16 %v3795
        %v4437 = vunpack.c.l.b16 %v3796
        %v4438 = vunpack.c.l.b16 %v3797
        %v4439 = vunpack.c.l.b16 %v3798
        %v4440 = vunpack.c.l.b16 %v3799
        %v4441 = vunpack.c.l.b16 %v3800
        %v4442 = vunpack.c.l.b16 %v3801
        %v4443 = vunpack.c.l.b16 %v3802
        %v4444 = vunpack.c.l.b16 %v3803
        %v4445 = vunpack.c.l.b16 %v3804
        %v4446 = vunpack.c.l.b16 %v3805
        %v4447 = vpack.c.b16 %v4416, %v4415
        %v4448 = vpack.c.b16 %v4418, %v4417
        %v4449 = vpack.c.b16 %v4420, %v4419
        %v4450 = vpack.c.b16 %v4422, %v4421
        %v4451 = vpack.c.b16 %v4424, %v4423
        %v4452 = vpack.c.b16 %v4426, %v4425
        %v4453 = vpack.c.b16 %v4428, %v4427
        %v4454 = vpack.c.b16 %v4430, %v4429
        %v4455 = vpack.c.b16 %v4432, %v4431
        %v4456 = vpack.c.b16 %v4434, %v4433
        %v4457 = vpack.c.b16 %v4436, %v4435
        %v4458 = vpack.c.b16 %v4438, %v4437
        %v4459 = vpack.c.b16 %v4440, %v4439
        %v4460 = vpack.c.b16 %v4442, %v4441
        %v4461 = vpack.c.b16 %v4444, %v4443
        %v4462 = vpack.c.b16 %v4446, %v4445
        %4463 = vrot.lane.b32.xlu0 %v4447, 48
        %v4464 = vpop.permute.xlu0 %4463
        %4465 = vrot.lane.b32.xlu0 %v4448, 48
        %v4466 = vpop.permute.xlu0 %4465
        %4467 = vrot.lane.b32.xlu0 %v4449, 48
        %v4468 = vpop.permute.xlu0 %4467
        %4469 = vrot.lane.b32.xlu0 %v4450, 48
        %v4470 = vpop.permute.xlu0 %4469
        %4471 = vrot.lane.b32.xlu0 %v4451, 48
        %v4472 = vpop.permute.xlu0 %4471
        %4473 = vrot.lane.b32.xlu0 %v4452, 48
        %v4474 = vpop.permute.xlu0 %4473
        %4475 = vrot.lane.b32.xlu0 %v4453, 48
        %v4476 = vpop.permute.xlu0 %4475
        %4477 = vrot.lane.b32.xlu0 %v4454, 48
        %v4478 = vpop.permute.xlu0 %4477
        %4479 = vrot.lane.b32.xlu0 %v4455, 48
        %v4480 = vpop.permute.xlu0 %4479
        %4481 = vrot.lane.b32.xlu0 %v4456, 48
        %v4482 = vpop.permute.xlu0 %4481
        %4483 = vrot.lane.b32.xlu0 %v4457, 48
        %v4484 = vpop.permute.xlu0 %4483
        %4485 = vrot.lane.b32.xlu0 %v4458, 48
        %v4486 = vpop.permute.xlu0 %4485
        %4487 = vrot.lane.b32.xlu0 %v4459, 48
        %v4488 = vpop.permute.xlu0 %4487
        %4489 = vrot.lane.b32.xlu0 %v4460, 48
        %v4490 = vpop.permute.xlu0 %4489
        %4491 = vrot.lane.b32.xlu0 %v4461, 48
        %v4492 = vpop.permute.xlu0 %4491
        %4493 = vrot.lane.b32.xlu0 %v4462, 48
        %v4494 = vpop.permute.xlu0 %4493
        %v4511 = vunpack.c.l.b16 %v3806
        %v4512 = vunpack.c.l.b16 %v3807
        %v4513 = vunpack.c.l.b16 %v3808
        %v4514 = vunpack.c.l.b16 %v3809
        %v4515 = vunpack.c.l.b16 %v3810
        %v4516 = vunpack.c.l.b16 %v3811
        %v4517 = vunpack.c.l.b16 %v3812
        %v4518 = vunpack.c.l.b16 %v3813
        %v4519 = vunpack.c.l.b16 %v3814
        %v4520 = vunpack.c.l.b16 %v3815
        %v4521 = vunpack.c.l.b16 %v3816
        %v4522 = vunpack.c.l.b16 %v3817
        %v4523 = vunpack.c.l.b16 %v3818
        %v4524 = vunpack.c.l.b16 %v3819
        %v4525 = vunpack.c.l.b16 %v3820
        %v4526 = vunpack.c.l.b16 %v3821
        %v4527 = vpack.c.b16 %v4511, %v4511
        %v4528 = vpack.c.b16 %v4512, %v4512
        %v4529 = vpack.c.b16 %v4513, %v4513
        %v4530 = vpack.c.b16 %v4514, %v4514
        %v4531 = vpack.c.b16 %v4515, %v4515
        %v4532 = vpack.c.b16 %v4516, %v4516
        %v4533 = vpack.c.b16 %v4517, %v4517
        %v4534 = vpack.c.b16 %v4518, %v4518
        %v4535 = vpack.c.b16 %v4519, %v4519
        %v4536 = vpack.c.b16 %v4520, %v4520
        %v4537 = vpack.c.b16 %v4521, %v4521
        %v4538 = vpack.c.b16 %v4522, %v4522
        %v4539 = vpack.c.b16 %v4523, %v4523
        %v4540 = vpack.c.b16 %v4524, %v4524
        %v4541 = vpack.c.b16 %v4525, %v4525
        %v4542 = vpack.c.b16 %v4526, %v4526
        %v4544 = vshrl.u32 %v4447, 16
        %v4546 = vshll.u32 %v4447, 16
        %v4548 = vrot.slane %v4546, 1
        %v4549 = vor.u32 %v4544, %v4548
        %v4551 = vshll.u32 %v4527, 16
        %v4553 = vrot.slane %v4551, 1
        %v4554 = vsel %vm1124, %v4549, %v4553
        %v4556 = vshrl.u32 %v4448, 16
        %v4558 = vshll.u32 %v4448, 16
        %v4560 = vrot.slane %v4558, 1
        %v4561 = vor.u32 %v4556, %v4560
        %v4563 = vshll.u32 %v4528, 16
        %v4565 = vrot.slane %v4563, 1
        %v4566 = vsel %vm1124, %v4561, %v4565
        %v4568 = vshrl.u32 %v4449, 16
        %v4570 = vshll.u32 %v4449, 16
        %v4572 = vrot.slane %v4570, 1
        %v4573 = vor.u32 %v4568, %v4572
        %v4575 = vshll.u32 %v4529, 16
        %v4577 = vrot.slane %v4575, 1
        %v4578 = vsel %vm1124, %v4573, %v4577
        %v4580 = vshrl.u32 %v4450, 16
        %v4582 = vshll.u32 %v4450, 16
        %v4584 = vrot.slane %v4582, 1
        %v4585 = vor.u32 %v4580, %v4584
        %v4587 = vshll.u32 %v4530, 16
        %v4589 = vrot.slane %v4587, 1
        %v4590 = vsel %vm1124, %v4585, %v4589
        %v4592 = vshrl.u32 %v4451, 16
        %v4594 = vshll.u32 %v4451, 16
        %v4596 = vrot.slane %v4594, 1
        %v4597 = vor.u32 %v4592, %v4596
        %v4599 = vshll.u32 %v4531, 16
        %v4601 = vrot.slane %v4599, 1
        %v4602 = vsel %vm1124, %v4597, %v4601
        %v4604 = vshrl.u32 %v4452, 16
        %v4606 = vshll.u32 %v4452, 16
        %v4608 = vrot.slane %v4606, 1
        %v4609 = vor.u32 %v4604, %v4608
        %v4611 = vshll.u32 %v4532, 16
        %v4613 = vrot.slane %v4611, 1
        %v4614 = vsel %vm1124, %v4609, %v4613
        %v4616 = vshrl.u32 %v4453, 16
        %v4618 = vshll.u32 %v4453, 16
        %v4620 = vrot.slane %v4618, 1
        %v4621 = vor.u32 %v4616, %v4620
        %v4623 = vshll.u32 %v4533, 16
        %v4625 = vrot.slane %v4623, 1
        %v4626 = vsel %vm1124, %v4621, %v4625
        %v4628 = vshrl.u32 %v4454, 16
        %v4630 = vshll.u32 %v4454, 16
        %v4632 = vrot.slane %v4630, 1
        %v4633 = vor.u32 %v4628, %v4632
        %v4635 = vshll.u32 %v4534, 16
        %v4637 = vrot.slane %v4635, 1
        %v4638 = vsel %vm1124, %v4633, %v4637
        %v4640 = vshrl.u32 %v4455, 16
        %v4642 = vshll.u32 %v4455, 16
        %v4644 = vrot.slane %v4642, 1
        %v4645 = vor.u32 %v4640, %v4644
        %v4647 = vshll.u32 %v4535, 16
        %v4649 = vrot.slane %v4647, 1
        %v4650 = vsel %vm1124, %v4645, %v4649
        %v4652 = vshrl.u32 %v4456, 16
        %v4654 = vshll.u32 %v4456, 16
        %v4656 = vrot.slane %v4654, 1
        %v4657 = vor.u32 %v4652, %v4656
        %v4659 = vshll.u32 %v4536, 16
        %v4661 = vrot.slane %v4659, 1
        %v4662 = vsel %vm1124, %v4657, %v4661
        %v4664 = vshrl.u32 %v4457, 16
        %v4666 = vshll.u32 %v4457, 16
        %v4668 = vrot.slane %v4666, 1
        %v4669 = vor.u32 %v4664, %v4668
        %v4671 = vshll.u32 %v4537, 16
        %v4673 = vrot.slane %v4671, 1
        %v4674 = vsel %vm1124, %v4669, %v4673
        %v4676 = vshrl.u32 %v4458, 16
        %v4678 = vshll.u32 %v4458, 16
        %v4680 = vrot.slane %v4678, 1
        %v4681 = vor.u32 %v4676, %v4680
        %v4683 = vshll.u32 %v4538, 16
        %v4685 = vrot.slane %v4683, 1
        %v4686 = vsel %vm1124, %v4681, %v4685
        %v4688 = vshrl.u32 %v4459, 16
        %v4690 = vshll.u32 %v4459, 16
        %v4692 = vrot.slane %v4690, 1
        %v4693 = vor.u32 %v4688, %v4692
        %v4695 = vshll.u32 %v4539, 16
        %v4697 = vrot.slane %v4695, 1
        %v4698 = vsel %vm1124, %v4693, %v4697
        %v4700 = vshrl.u32 %v4460, 16
        %v4702 = vshll.u32 %v4460, 16
        %v4704 = vrot.slane %v4702, 1
        %v4705 = vor.u32 %v4700, %v4704
        %v4707 = vshll.u32 %v4540, 16
        %v4709 = vrot.slane %v4707, 1
        %v4710 = vsel %vm1124, %v4705, %v4709
        %v4712 = vshrl.u32 %v4461, 16
        %v4714 = vshll.u32 %v4461, 16
        %v4716 = vrot.slane %v4714, 1
        %v4717 = vor.u32 %v4712, %v4716
        %v4719 = vshll.u32 %v4541, 16
        %v4721 = vrot.slane %v4719, 1
        %v4722 = vsel %vm1124, %v4717, %v4721
        %v4724 = vshrl.u32 %v4462, 16
        %v4726 = vshll.u32 %v4462, 16
        %v4728 = vrot.slane %v4726, 1
        %v4729 = vor.u32 %v4724, %v4728
        %v4731 = vshll.u32 %v4542, 16
        %v4733 = vrot.slane %v4731, 1
        %v4734 = vsel %vm1124, %v4729, %v4733
        %4735 = vrot.lane.b32.xlu0 %v4554, 64
        %v4736 = vpop.permute.xlu0 %4735
        %4737 = vrot.lane.b32.xlu0 %v4566, 64
        %v4738 = vpop.permute.xlu0 %4737
        %4739 = vrot.lane.b32.xlu0 %v4578, 64
        %v4740 = vpop.permute.xlu0 %4739
        %4741 = vrot.lane.b32.xlu0 %v4590, 64
        %v4742 = vpop.permute.xlu0 %4741
        %4743 = vrot.lane.b32.xlu0 %v4602, 64
        %v4744 = vpop.permute.xlu0 %4743
        %4745 = vrot.lane.b32.xlu0 %v4614, 64
        %v4746 = vpop.permute.xlu0 %4745
        %4747 = vrot.lane.b32.xlu0 %v4626, 64
        %v4748 = vpop.permute.xlu0 %4747
        %4749 = vrot.lane.b32.xlu0 %v4638, 64
        %v4750 = vpop.permute.xlu0 %4749
        %4751 = vrot.lane.b32.xlu0 %v4650, 64
        %v4752 = vpop.permute.xlu0 %4751
        %4753 = vrot.lane.b32.xlu0 %v4662, 64
        %v4754 = vpop.permute.xlu0 %4753
        %4755 = vrot.lane.b32.xlu0 %v4674, 64
        %v4756 = vpop.permute.xlu0 %4755
        %4757 = vrot.lane.b32.xlu0 %v4686, 64
        %v4758 = vpop.permute.xlu0 %4757
        %4759 = vrot.lane.b32.xlu0 %v4698, 64
        %v4760 = vpop.permute.xlu0 %4759
        %4761 = vrot.lane.b32.xlu0 %v4710, 64
        %v4762 = vpop.permute.xlu0 %4761
        %4763 = vrot.lane.b32.xlu0 %v4722, 64
        %v4764 = vpop.permute.xlu0 %4763
        %4765 = vrot.lane.b32.xlu0 %v4734, 64
        %v4766 = vpop.permute.xlu0 %4765
        %v4783 = vunpack.c.l.b16 %v3822
        %v4784 = vunpack.c.l.b16 %v3823
        %v4785 = vunpack.c.l.b16 %v3824
        %v4786 = vunpack.c.l.b16 %v3825
        %v4787 = vunpack.c.l.b16 %v3826
        %v4788 = vunpack.c.l.b16 %v3827
        %v4789 = vunpack.c.l.b16 %v3828
        %v4790 = vunpack.c.l.b16 %v3829
        %v4791 = vunpack.c.l.b16 %v3830
        %v4792 = vunpack.c.l.b16 %v3831
        %v4793 = vunpack.c.l.b16 %v3832
        %v4794 = vunpack.c.l.b16 %v3833
        %v4795 = vunpack.c.l.b16 %v3834
        %v4796 = vunpack.c.l.b16 %v3835
        %v4797 = vunpack.c.l.b16 %v3836
        %v4798 = vunpack.c.l.b16 %v3837
        %v4799 = vpack.c.b16 %v4416, %v4783
        %v4800 = vpack.c.b16 %v4418, %v4784
        %v4801 = vpack.c.b16 %v4420, %v4785
        %v4802 = vpack.c.b16 %v4422, %v4786
        %v4803 = vpack.c.b16 %v4424, %v4787
        %v4804 = vpack.c.b16 %v4426, %v4788
        %v4805 = vpack.c.b16 %v4428, %v4789
        %v4806 = vpack.c.b16 %v4430, %v4790
        %v4807 = vpack.c.b16 %v4432, %v4791
        %v4808 = vpack.c.b16 %v4434, %v4792
        %v4809 = vpack.c.b16 %v4436, %v4793
        %v4810 = vpack.c.b16 %v4438, %v4794
        %v4811 = vpack.c.b16 %v4440, %v4795
        %v4812 = vpack.c.b16 %v4442, %v4796
        %v4813 = vpack.c.b16 %v4444, %v4797
        %v4814 = vpack.c.b16 %v4446, %v4798
        %v4815 = vrot.slane %v4799, 1
        %v4816 = vrot.slane %v4527, 1
        %v4817 = vsel %vm1397, %v4815, %v4816
        %v4818 = vrot.slane %v4800, 1
        %v4819 = vrot.slane %v4528, 1
        %v4820 = vsel %vm1397, %v4818, %v4819
        %v4821 = vrot.slane %v4801, 1
        %v4822 = vrot.slane %v4529, 1
        %v4823 = vsel %vm1397, %v4821, %v4822
        %v4824 = vrot.slane %v4802, 1
        %v4825 = vrot.slane %v4530, 1
        %v4826 = vsel %vm1397, %v4824, %v4825
        %v4827 = vrot.slane %v4803, 1
        %v4828 = vrot.slane %v4531, 1
        %v4829 = vsel %vm1397, %v4827, %v4828
        %v4830 = vrot.slane %v4804, 1
        %v4831 = vrot.slane %v4532, 1
        %v4832 = vsel %vm1397, %v4830, %v4831
        %v4833 = vrot.slane %v4805, 1
        %v4834 = vrot.slane %v4533, 1
        %v4835 = vsel %vm1397, %v4833, %v4834
        %v4836 = vrot.slane %v4806, 1
        %v4837 = vrot.slane %v4534, 1
        %v4838 = vsel %vm1397, %v4836, %v4837
        %v4839 = vrot.slane %v4807, 1
        %v4840 = vrot.slane %v4535, 1
        %v4841 = vsel %vm1397, %v4839, %v4840
        %v4842 = vrot.slane %v4808, 1
        %v4843 = vrot.slane %v4536, 1
        %v4844 = vsel %vm1397, %v4842, %v4843
        %v4845 = vrot.slane %v4809, 1
        %v4846 = vrot.slane %v4537, 1
        %v4847 = vsel %vm1397, %v4845, %v4846
        %v4848 = vrot.slane %v4810, 1
        %v4849 = vrot.slane %v4538, 1
        %v4850 = vsel %vm1397, %v4848, %v4849
        %v4851 = vrot.slane %v4811, 1
        %v4852 = vrot.slane %v4539, 1
        %v4853 = vsel %vm1397, %v4851, %v4852
        %v4854 = vrot.slane %v4812, 1
        %v4855 = vrot.slane %v4540, 1
        %v4856 = vsel %vm1397, %v4854, %v4855
        %v4857 = vrot.slane %v4813, 1
        %v4858 = vrot.slane %v4541, 1
        %v4859 = vsel %vm1397, %v4857, %v4858
        %v4860 = vrot.slane %v4814, 1
        %v4861 = vrot.slane %v4542, 1
        %v4862 = vsel %vm1397, %v4860, %v4861
        %4863 = vrot.lane.b32.xlu0 %v4817, 80
        %v4864 = vpop.permute.xlu0 %4863
        %4865 = vrot.lane.b32.xlu0 %v4820, 80
        %v4866 = vpop.permute.xlu0 %4865
        %4867 = vrot.lane.b32.xlu0 %v4823, 80
        %v4868 = vpop.permute.xlu0 %4867
        %4869 = vrot.lane.b32.xlu0 %v4826, 80
        %v4870 = vpop.permute.xlu0 %4869
        %4871 = vrot.lane.b32.xlu0 %v4829, 80
        %v4872 = vpop.permute.xlu0 %4871
        %4873 = vrot.lane.b32.xlu0 %v4832, 80
        %v4874 = vpop.permute.xlu0 %4873
        %4875 = vrot.lane.b32.xlu0 %v4835, 80
        %v4876 = vpop.permute.xlu0 %4875
        %4877 = vrot.lane.b32.xlu0 %v4838, 80
        %v4878 = vpop.permute.xlu0 %4877
        %4879 = vrot.lane.b32.xlu0 %v4841, 80
        %v4880 = vpop.permute.xlu0 %4879
        %4881 = vrot.lane.b32.xlu0 %v4844, 80
        %v4882 = vpop.permute.xlu0 %4881
        %4883 = vrot.lane.b32.xlu0 %v4847, 80
        %v4884 = vpop.permute.xlu0 %4883
        %4885 = vrot.lane.b32.xlu0 %v4850, 80
        %v4886 = vpop.permute.xlu0 %4885
        %4887 = vrot.lane.b32.xlu0 %v4853, 80
        %v4888 = vpop.permute.xlu0 %4887
        %4889 = vrot.lane.b32.xlu0 %v4856, 80
        %v4890 = vpop.permute.xlu0 %4889
        %4891 = vrot.lane.b32.xlu0 %v4859, 80
        %v4892 = vpop.permute.xlu0 %4891
        %4893 = vrot.lane.b32.xlu0 %v4862, 80
        %v4894 = vpop.permute.xlu0 %4893
        %v4927 = vunpack.c.l.b16 %v3839
        %v4928 = vunpack.c.l.b16 %v3840
        %v4929 = vunpack.c.l.b16 %v3841
        %v4930 = vunpack.c.l.b16 %v3842
        %v4931 = vunpack.c.l.b16 %v3843
        %v4932 = vunpack.c.l.b16 %v3844
        %v4933 = vunpack.c.l.b16 %v3845
        %v4934 = vunpack.c.l.b16 %v3846
        %v4935 = vunpack.c.l.b16 %v3847
        %v4936 = vunpack.c.l.b16 %v3848
        %v4937 = vunpack.c.l.b16 %v3849
        %v4938 = vunpack.c.l.b16 %v3850
        %v4939 = vunpack.c.l.b16 %v3851
        %v4940 = vunpack.c.l.b16 %v3852
        %v4941 = vunpack.c.l.b16 %v3853
        %v4942 = vunpack.c.l.b16 %v3854
        %v4943 = vunpack.c.l.b16 %v3855
        %v4944 = vunpack.c.l.b16 %v3856
        %v4945 = vunpack.c.l.b16 %v3857
        %v4946 = vunpack.c.l.b16 %v3858
        %v4947 = vunpack.c.l.b16 %v3859
        %v4948 = vunpack.c.l.b16 %v3860
        %v4949 = vunpack.c.l.b16 %v3861
        %v4950 = vunpack.c.l.b16 %v3862
        %v4951 = vunpack.c.l.b16 %v3863
        %v4952 = vunpack.c.l.b16 %v3864
        %v4953 = vunpack.c.l.b16 %v3865
        %v4954 = vunpack.c.l.b16 %v3866
        %v4955 = vunpack.c.l.b16 %v3867
        %v4956 = vunpack.c.l.b16 %v3868
        %v4957 = vunpack.c.l.b16 %v3869
        %v4958 = vunpack.c.l.b16 %v3870
        %v4959 = vpack.c.b16 %v4928, %v4927
        %v4960 = vpack.c.b16 %v4930, %v4929
        %v4961 = vpack.c.b16 %v4932, %v4931
        %v4962 = vpack.c.b16 %v4934, %v4933
        %v4963 = vpack.c.b16 %v4936, %v4935
        %v4964 = vpack.c.b16 %v4938, %v4937
        %v4965 = vpack.c.b16 %v4940, %v4939
        %v4966 = vpack.c.b16 %v4942, %v4941
        %v4967 = vpack.c.b16 %v4944, %v4943
        %v4968 = vpack.c.b16 %v4946, %v4945
        %v4969 = vpack.c.b16 %v4948, %v4947
        %v4970 = vpack.c.b16 %v4950, %v4949
        %v4971 = vpack.c.b16 %v4952, %v4951
        %v4972 = vpack.c.b16 %v4954, %v4953
        %v4973 = vpack.c.b16 %v4956, %v4955
        %v4974 = vpack.c.b16 %v4958, %v4957
        %4975 = vrot.lane.b32.xlu0 %v4959, 96
        %v4976 = vpop.permute.xlu0 %4975
        %4977 = vrot.lane.b32.xlu0 %v4960, 96
        %v4978 = vpop.permute.xlu0 %4977
        %4979 = vrot.lane.b32.xlu0 %v4961, 96
        %v4980 = vpop.permute.xlu0 %4979
        %4981 = vrot.lane.b32.xlu0 %v4962, 96
        %v4982 = vpop.permute.xlu0 %4981
        %4983 = vrot.lane.b32.xlu0 %v4963, 96
        %v4984 = vpop.permute.xlu0 %4983
        %4985 = vrot.lane.b32.xlu0 %v4964, 96
        %v4986 = vpop.permute.xlu0 %4985
        %4987 = vrot.lane.b32.xlu0 %v4965, 96
        %v4988 = vpop.permute.xlu0 %4987
        %4989 = vrot.lane.b32.xlu0 %v4966, 96
        %v4990 = vpop.permute.xlu0 %4989
        %4991 = vrot.lane.b32.xlu0 %v4967, 96
        %v4992 = vpop.permute.xlu0 %4991
        %4993 = vrot.lane.b32.xlu0 %v4968, 96
        %v4994 = vpop.permute.xlu0 %4993
        %4995 = vrot.lane.b32.xlu0 %v4969, 96
        %v4996 = vpop.permute.xlu0 %4995
        %4997 = vrot.lane.b32.xlu0 %v4970, 96
        %v4998 = vpop.permute.xlu0 %4997
        %4999 = vrot.lane.b32.xlu0 %v4971, 96
        %v5000 = vpop.permute.xlu0 %4999
        %5001 = vrot.lane.b32.xlu0 %v4972, 96
        %v5002 = vpop.permute.xlu0 %5001
        %5003 = vrot.lane.b32.xlu0 %v4973, 96
        %v5004 = vpop.permute.xlu0 %5003
        %5005 = vrot.lane.b32.xlu0 %v4974, 96
        %v5006 = vpop.permute.xlu0 %5005
        %v5023 = vunpack.c.l.b16 %v3871
        %v5024 = vunpack.c.l.b16 %v3872
        %v5025 = vunpack.c.l.b16 %v3873
        %v5026 = vunpack.c.l.b16 %v3874
        %v5027 = vunpack.c.l.b16 %v3875
        %v5028 = vunpack.c.l.b16 %v3876
        %v5029 = vunpack.c.l.b16 %v3877
        %v5030 = vunpack.c.l.b16 %v3878
        %v5031 = vunpack.c.l.b16 %v3879
        %v5032 = vunpack.c.l.b16 %v3880
        %v5033 = vunpack.c.l.b16 %v3881
        %v5034 = vunpack.c.l.b16 %v3882
        %v5035 = vunpack.c.l.b16 %v3883
        %v5036 = vunpack.c.l.b16 %v3884
        %v5037 = vunpack.c.l.b16 %v3885
        %v5038 = vunpack.c.l.b16 %v3886
        %v5039 = vpack.c.b16 %v5023, %v5023
        %v5040 = vpack.c.b16 %v5024, %v5024
        %v5041 = vpack.c.b16 %v5025, %v5025
        %v5042 = vpack.c.b16 %v5026, %v5026
        %v5043 = vpack.c.b16 %v5027, %v5027
        %v5044 = vpack.c.b16 %v5028, %v5028
        %v5045 = vpack.c.b16 %v5029, %v5029
        %v5046 = vpack.c.b16 %v5030, %v5030
        %v5047 = vpack.c.b16 %v5031, %v5031
        %v5048 = vpack.c.b16 %v5032, %v5032
        %v5049 = vpack.c.b16 %v5033, %v5033
        %v5050 = vpack.c.b16 %v5034, %v5034
        %v5051 = vpack.c.b16 %v5035, %v5035
        %v5052 = vpack.c.b16 %v5036, %v5036
        %v5053 = vpack.c.b16 %v5037, %v5037
        %v5054 = vpack.c.b16 %v5038, %v5038
        %v5056 = vshrl.u32 %v4959, 16
        %v5058 = vshll.u32 %v4959, 16
        %v5060 = vrot.slane %v5058, 1
        %v5061 = vor.u32 %v5056, %v5060
        %v5063 = vshll.u32 %v5039, 16
        %v5065 = vrot.slane %v5063, 1
        %v5066 = vsel %vm1124, %v5061, %v5065
        %v5068 = vshrl.u32 %v4960, 16
        %v5070 = vshll.u32 %v4960, 16
        %v5072 = vrot.slane %v5070, 1
        %v5073 = vor.u32 %v5068, %v5072
        %v5075 = vshll.u32 %v5040, 16
        %v5077 = vrot.slane %v5075, 1
        %v5078 = vsel %vm1124, %v5073, %v5077
        %v5080 = vshrl.u32 %v4961, 16
        %v5082 = vshll.u32 %v4961, 16
        %v5084 = vrot.slane %v5082, 1
        %v5085 = vor.u32 %v5080, %v5084
        %v5087 = vshll.u32 %v5041, 16
        %v5089 = vrot.slane %v5087, 1
        %v5090 = vsel %vm1124, %v5085, %v5089
        %v5092 = vshrl.u32 %v4962, 16
        %v5094 = vshll.u32 %v4962, 16
        %v5096 = vrot.slane %v5094, 1
        %v5097 = vor.u32 %v5092, %v5096
        %v5099 = vshll.u32 %v5042, 16
        %v5101 = vrot.slane %v5099, 1
        %v5102 = vsel %vm1124, %v5097, %v5101
        %v5104 = vshrl.u32 %v4963, 16
        %v5106 = vshll.u32 %v4963, 16
        %v5108 = vrot.slane %v5106, 1
        %v5109 = vor.u32 %v5104, %v5108
        %v5111 = vshll.u32 %v5043, 16
        %v5113 = vrot.slane %v5111, 1
        %v5114 = vsel %vm1124, %v5109, %v5113
        %v5116 = vshrl.u32 %v4964, 16
        %v5118 = vshll.u32 %v4964, 16
        %v5120 = vrot.slane %v5118, 1
        %v5121 = vor.u32 %v5116, %v5120
        %v5123 = vshll.u32 %v5044, 16
        %v5125 = vrot.slane %v5123, 1
        %v5126 = vsel %vm1124, %v5121, %v5125
        %v5128 = vshrl.u32 %v4965, 16
        %v5130 = vshll.u32 %v4965, 16
        %v5132 = vrot.slane %v5130, 1
        %v5133 = vor.u32 %v5128, %v5132
        %v5135 = vshll.u32 %v5045, 16
        %v5137 = vrot.slane %v5135, 1
        %v5138 = vsel %vm1124, %v5133, %v5137
        %v5140 = vshrl.u32 %v4966, 16
        %v5142 = vshll.u32 %v4966, 16
        %v5144 = vrot.slane %v5142, 1
        %v5145 = vor.u32 %v5140, %v5144
        %v5147 = vshll.u32 %v5046, 16
        %v5149 = vrot.slane %v5147, 1
        %v5150 = vsel %vm1124, %v5145, %v5149
        %v5152 = vshrl.u32 %v4967, 16
        %v5154 = vshll.u32 %v4967, 16
        %v5156 = vrot.slane %v5154, 1
        %v5157 = vor.u32 %v5152, %v5156
        %v5159 = vshll.u32 %v5047, 16
        %v5161 = vrot.slane %v5159, 1
        %v5162 = vsel %vm1124, %v5157, %v5161
        %v5164 = vshrl.u32 %v4968, 16
        %v5166 = vshll.u32 %v4968, 16
        %v5168 = vrot.slane %v5166, 1
        %v5169 = vor.u32 %v5164, %v5168
        %v5171 = vshll.u32 %v5048, 16
        %v5173 = vrot.slane %v5171, 1
        %v5174 = vsel %vm1124, %v5169, %v5173
        %v5176 = vshrl.u32 %v4969, 16
        %v5178 = vshll.u32 %v4969, 16
        %v5180 = vrot.slane %v5178, 1
        %v5181 = vor.u32 %v5176, %v5180
        %v5183 = vshll.u32 %v5049, 16
        %v5185 = vrot.slane %v5183, 1
        %v5186 = vsel %vm1124, %v5181, %v5185
        %v5188 = vshrl.u32 %v4970, 16
        %v5190 = vshll.u32 %v4970, 16
        %v5192 = vrot.slane %v5190, 1
        %v5193 = vor.u32 %v5188, %v5192
        %v5195 = vshll.u32 %v5050, 16
        %v5197 = vrot.slane %v5195, 1
        %v5198 = vsel %vm1124, %v5193, %v5197
        %v5200 = vshrl.u32 %v4971, 16
        %v5202 = vshll.u32 %v4971, 16
        %v5204 = vrot.slane %v5202, 1
        %v5205 = vor.u32 %v5200, %v5204
        %v5207 = vshll.u32 %v5051, 16
        %v5209 = vrot.slane %v5207, 1
        %v5210 = vsel %vm1124, %v5205, %v5209
        %v5212 = vshrl.u32 %v4972, 16
        %v5214 = vshll.u32 %v4972, 16
        %v5216 = vrot.slane %v5214, 1
        %v5217 = vor.u32 %v5212, %v5216
        %v5219 = vshll.u32 %v5052, 16
        %v5221 = vrot.slane %v5219, 1
        %v5222 = vsel %vm1124, %v5217, %v5221
        %v5224 = vshrl.u32 %v4973, 16
        %v5226 = vshll.u32 %v4973, 16
        %v5228 = vrot.slane %v5226, 1
        %v5229 = vor.u32 %v5224, %v5228
        %v5231 = vshll.u32 %v5053, 16
        %v5233 = vrot.slane %v5231, 1
        %v5234 = vsel %vm1124, %v5229, %v5233
        %v5236 = vshrl.u32 %v4974, 16
        %v5238 = vshll.u32 %v4974, 16
        %v5240 = vrot.slane %v5238, 1
        %v5241 = vor.u32 %v5236, %v5240
        %v5243 = vshll.u32 %v5054, 16
        %v5245 = vrot.slane %v5243, 1
        %v5246 = vsel %vm1124, %v5241, %v5245
        %5247 = vrot.lane.b32.xlu0 %v5066, 112
        %v5248 = vpop.permute.xlu0 %5247
        %5249 = vrot.lane.b32.xlu0 %v5078, 112
        %v5250 = vpop.permute.xlu0 %5249
        %5251 = vrot.lane.b32.xlu0 %v5090, 112
        %v5252 = vpop.permute.xlu0 %5251
        %5253 = vrot.lane.b32.xlu0 %v5102, 112
        %v5254 = vpop.permute.xlu0 %5253
        %5255 = vrot.lane.b32.xlu0 %v5114, 112
        %v5256 = vpop.permute.xlu0 %5255
        %5257 = vrot.lane.b32.xlu0 %v5126, 112
        %v5258 = vpop.permute.xlu0 %5257
        %5259 = vrot.lane.b32.xlu0 %v5138, 112
        %v5260 = vpop.permute.xlu0 %5259
        %5261 = vrot.lane.b32.xlu0 %v5150, 112
        %v5262 = vpop.permute.xlu0 %5261
        %5263 = vrot.lane.b32.xlu0 %v5162, 112
        %v5264 = vpop.permute.xlu0 %5263
        %5265 = vrot.lane.b32.xlu0 %v5174, 112
        %v5266 = vpop.permute.xlu0 %5265
        %5267 = vrot.lane.b32.xlu0 %v5186, 112
        %v5268 = vpop.permute.xlu0 %5267
        %5269 = vrot.lane.b32.xlu0 %v5198, 112
        %v5270 = vpop.permute.xlu0 %5269
        %5271 = vrot.lane.b32.xlu0 %v5210, 112
        %v5272 = vpop.permute.xlu0 %5271
        %5273 = vrot.lane.b32.xlu0 %v5222, 112
        %v5274 = vpop.permute.xlu0 %5273
        %5275 = vrot.lane.b32.xlu0 %v5234, 112
        %v5276 = vpop.permute.xlu0 %5275
        %5277 = vrot.lane.b32.xlu0 %v5246, 112
        %v5278 = vpop.permute.xlu0 %5277
        %v5295 = vunpack.c.l.b16 %v3887
        %v5296 = vunpack.c.l.b16 %v3888
        %v5297 = vunpack.c.l.b16 %v3889
        %v5298 = vunpack.c.l.b16 %v3890
        %v5299 = vunpack.c.l.b16 %v3891
        %v5300 = vunpack.c.l.b16 %v3892
        %v5301 = vunpack.c.l.b16 %v3893
        %v5302 = vunpack.c.l.b16 %v3894
        %v5303 = vunpack.c.l.b16 %v3895
        %v5304 = vunpack.c.l.b16 %v3896
        %v5305 = vunpack.c.l.b16 %v3897
        %v5306 = vunpack.c.l.b16 %v3898
        %v5307 = vunpack.c.l.b16 %v3899
        %v5308 = vunpack.c.l.b16 %v3900
        %v5309 = vunpack.c.l.b16 %v3901
        %v5310 = vunpack.c.l.b16 %v3902
        %v5311 = vpack.c.b16 %v4928, %v5295
        %v5312 = vpack.c.b16 %v4930, %v5296
        %v5313 = vpack.c.b16 %v4932, %v5297
        %v5314 = vpack.c.b16 %v4934, %v5298
        %v5315 = vpack.c.b16 %v4936, %v5299
        %v5316 = vpack.c.b16 %v4938, %v5300
        %v5317 = vpack.c.b16 %v4940, %v5301
        %v5318 = vpack.c.b16 %v4942, %v5302
        %v5319 = vpack.c.b16 %v4944, %v5303
        %v5320 = vpack.c.b16 %v4946, %v5304
        %v5321 = vpack.c.b16 %v4948, %v5305
        %v5322 = vpack.c.b16 %v4950, %v5306
        %v5323 = vpack.c.b16 %v4952, %v5307
        %v5324 = vpack.c.b16 %v4954, %v5308
        %v5325 = vpack.c.b16 %v4956, %v5309
        %v5326 = vpack.c.b16 %v4958, %v5310
        %v5327 = vrot.slane %v5311, 1
        %v5328 = vrot.slane %v5039, 1
        %v5329 = vsel %vm1397, %v5327, %v5328
        %v5330 = vrot.slane %v5312, 1
        %v5331 = vrot.slane %v5040, 1
        %v5332 = vsel %vm1397, %v5330, %v5331
        %v5333 = vrot.slane %v5313, 1
        %v5334 = vrot.slane %v5041, 1
        %v5335 = vsel %vm1397, %v5333, %v5334
        %v5336 = vrot.slane %v5314, 1
        %v5337 = vrot.slane %v5042, 1
        %v5338 = vsel %vm1397, %v5336, %v5337
        %v5339 = vrot.slane %v5315, 1
        %v5340 = vrot.slane %v5043, 1
        %v5341 = vsel %vm1397, %v5339, %v5340
        %v5342 = vrot.slane %v5316, 1
        %v5343 = vrot.slane %v5044, 1
        %v5344 = vsel %vm1397, %v5342, %v5343
        %v5345 = vrot.slane %v5317, 1
        %v5346 = vrot.slane %v5045, 1
        %v5347 = vsel %vm1397, %v5345, %v5346
        %v5348 = vrot.slane %v5318, 1
        %v5349 = vrot.slane %v5046, 1
        %v5350 = vsel %vm1397, %v5348, %v5349
        %v5351 = vrot.slane %v5319, 1
        %v5352 = vrot.slane %v5047, 1
        %v5353 = vsel %vm1397, %v5351, %v5352
        %v5354 = vrot.slane %v5320, 1
        %v5355 = vrot.slane %v5048, 1
        %v5356 = vsel %vm1397, %v5354, %v5355
        %v5357 = vrot.slane %v5321, 1
        %v5358 = vrot.slane %v5049, 1
        %v5359 = vsel %vm1397, %v5357, %v5358
        %v5360 = vrot.slane %v5322, 1
        %v5361 = vrot.slane %v5050, 1
        %v5362 = vsel %vm1397, %v5360, %v5361
        %v5363 = vrot.slane %v5323, 1
        %v5364 = vrot.slane %v5051, 1
        %v5365 = vsel %vm1397, %v5363, %v5364
        %v5366 = vrot.slane %v5324, 1
        %v5367 = vrot.slane %v5052, 1
        %v5368 = vsel %vm1397, %v5366, %v5367
        %v5369 = vrot.slane %v5325, 1
        %v5370 = vrot.slane %v5053, 1
        %v5371 = vsel %vm1397, %v5369, %v5370
        %v5372 = vrot.slane %v5326, 1
        %v5373 = vrot.slane %v5054, 1
        %v5374 = vsel %vm1397, %v5372, %v5373
        %v5376 = vsel %vm2535, %v3967, %v4224
        %v5378 = vsel %vm2535, %v3968, %v4226
        %v5380 = vsel %vm2535, %v3969, %v4228
        %v5382 = vsel %vm2535, %v3970, %v4230
        %v5384 = vsel %vm2535, %v3971, %v4232
        %v5386 = vsel %vm2535, %v3972, %v4234
        %v5388 = vsel %vm2535, %v3973, %v4236
        %v5390 = vsel %vm2535, %v3974, %v4238
        %v5392 = vsel %vm2535, %v3975, %v4240
        %v5394 = vsel %vm2535, %v3976, %v4242
        %v5396 = vsel %vm2535, %v3977, %v4244
        %v5398 = vsel %vm2535, %v3978, %v4246
        %v5400 = vsel %vm2535, %v3979, %v4248
        %v5402 = vsel %vm2535, %v3980, %v4250
        %v5404 = vsel %vm2535, %v3981, %v4252
        %v5406 = vsel %vm2535, %v3982, %v4254
        %v5408 = vsel %vm2601, %v5376, %v4352
        %v5410 = vsel %vm2601, %v5378, %v4354
        %v5412 = vsel %vm2601, %v5380, %v4356
        %v5414 = vsel %vm2601, %v5382, %v4358
        %v5416 = vsel %vm2601, %v5384, %v4360
        %v5418 = vsel %vm2601, %v5386, %v4362
        %v5420 = vsel %vm2601, %v5388, %v4364
        %v5422 = vsel %vm2601, %v5390, %v4366
        %v5424 = vsel %vm2601, %v5392, %v4368
        %v5426 = vsel %vm2601, %v5394, %v4370
        %v5428 = vsel %vm2601, %v5396, %v4372
        %v5430 = vsel %vm2601, %v5398, %v4374
        %v5432 = vsel %vm2601, %v5400, %v4376
        %v5434 = vsel %vm2601, %v5402, %v4378
        %v5436 = vsel %vm2601, %v5404, %v4380
        %v5438 = vsel %vm2601, %v5406, %v4382
        %v5440 = vsel %vm2667, %v5408, %v4464
        %v5442 = vsel %vm2667, %v5410, %v4466
        %v5444 = vsel %vm2667, %v5412, %v4468
        %v5446 = vsel %vm2667, %v5414, %v4470
        %v5448 = vsel %vm2667, %v5416, %v4472
        %v5450 = vsel %vm2667, %v5418, %v4474
        %v5452 = vsel %vm2667, %v5420, %v4476
        %v5454 = vsel %vm2667, %v5422, %v4478
        %v5456 = vsel %vm2667, %v5424, %v4480
        %v5458 = vsel %vm2667, %v5426, %v4482
        %v5460 = vsel %vm2667, %v5428, %v4484
        %v5462 = vsel %vm2667, %v5430, %v4486
        %v5464 = vsel %vm2667, %v5432, %v4488
        %v5466 = vsel %vm2667, %v5434, %v4490
        %v5468 = vsel %vm2667, %v5436, %v4492
        %v5470 = vsel %vm2667, %v5438, %v4494
        %v5472 = vsel %vm2733, %v5440, %v4736
        %v5474 = vsel %vm2733, %v5442, %v4738
        %v5476 = vsel %vm2733, %v5444, %v4740
        %v5478 = vsel %vm2733, %v5446, %v4742
        %v5480 = vsel %vm2733, %v5448, %v4744
        %v5482 = vsel %vm2733, %v5450, %v4746
        %v5484 = vsel %vm2733, %v5452, %v4748
        %v5486 = vsel %vm2733, %v5454, %v4750
        %v5488 = vsel %vm2733, %v5456, %v4752
        %v5490 = vsel %vm2733, %v5458, %v4754
        %v5492 = vsel %vm2733, %v5460, %v4756
        %v5494 = vsel %vm2733, %v5462, %v4758
        %v5496 = vsel %vm2733, %v5464, %v4760
        %v5498 = vsel %vm2733, %v5466, %v4762
        %v5500 = vsel %vm2733, %v5468, %v4764
        %v5502 = vsel %vm2733, %v5470, %v4766
        %vm5503 = vcmask 654336
        %v5505 = vsel %vm5503, %v5472, %v4864
        %v5507 = vsel %vm5503, %v5474, %v4866
        %v5509 = vsel %vm5503, %v5476, %v4868
        %v5511 = vsel %vm5503, %v5478, %v4870
        %v5513 = vsel %vm5503, %v5480, %v4872
        %v5515 = vsel %vm5503, %v5482, %v4874
        %v5517 = vsel %vm5503, %v5484, %v4876
        %v5519 = vsel %vm5503, %v5486, %v4878
        %v5521 = vsel %vm5503, %v5488, %v4880
        %v5523 = vsel %vm5503, %v5490, %v4882
        %v5525 = vsel %vm5503, %v5492, %v4884
        %v5527 = vsel %vm5503, %v5494, %v4886
        %v5529 = vsel %vm5503, %v5496, %v4888
        %v5531 = vsel %vm5503, %v5498, %v4890
        %v5533 = vsel %vm5503, %v5500, %v4892
        %v5535 = vsel %vm5503, %v5502, %v4894
        %vm5536 = vcmask 785408
        %v5538 = vsel %vm5536, %v5505, %v4976
        %v5540 = vsel %vm5536, %v5507, %v4978
        %v5542 = vsel %vm5536, %v5509, %v4980
        %v5544 = vsel %vm5536, %v5511, %v4982
        %v5546 = vsel %vm5536, %v5513, %v4984
        %v5548 = vsel %vm5536, %v5515, %v4986
        %v5550 = vsel %vm5536, %v5517, %v4988
        %v5552 = vsel %vm5536, %v5519, %v4990
        %v5554 = vsel %vm5536, %v5521, %v4992
        %v5556 = vsel %vm5536, %v5523, %v4994
        %v5558 = vsel %vm5536, %v5525, %v4996
        %v5560 = vsel %vm5536, %v5527, %v4998
        %v5562 = vsel %vm5536, %v5529, %v5000
        %v5564 = vsel %vm5536, %v5531, %v5002
        %v5566 = vsel %vm5536, %v5533, %v5004
        %v5568 = vsel %vm5536, %v5535, %v5006
        %vm5569 = vcmask 916480
        %v5571 = vsel %vm5569, %v5538, %v5248
        %v5574 = vsel %vm5569, %v5540, %v5250
        %v5577 = vsel %vm5569, %v5542, %v5252
        %v5580 = vsel %vm5569, %v5544, %v5254
        %v5583 = vsel %vm5569, %v5546, %v5256
        %v5586 = vsel %vm5569, %v5548, %v5258
        %v5589 = vsel %vm5569, %v5550, %v5260
        %v5592 = vsel %vm5569, %v5552, %v5262
        %v5595 = vsel %vm5569, %v5554, %v5264
        %v5598 = vsel %vm5569, %v5556, %v5266
        %v5601 = vsel %vm5569, %v5558, %v5268
        %v5604 = vsel %vm5569, %v5560, %v5270
        %v5607 = vsel %vm5569, %v5562, %v5272
        %v5610 = vsel %vm5569, %v5564, %v5274
        %v5613 = vsel %vm5569, %v5566, %v5276
        %v5616 = vsel %vm5569, %v5568, %v5278
        %v5618 = vld [vmem:[%s3] sm:$0xf]
        %v5619 = vld [vmem:[%s3 + $0x4] sm:$0xf]
        %v5620 = vld [vmem:[%s3 + $0x8] sm:$0xf]
        %v5621 = vld [vmem:[%s3 + $0xc] sm:$0xf]
        %v5622 = vld [vmem:[%s3 + $0x10] sm:$0xf]
        %v5623 = vld [vmem:[%s3 + $0x14] sm:$0xf]
        %v5624 = vld [vmem:[%s3 + $0x18] sm:$0xf]
        %v5625 = vld [vmem:[%s3 + $0x1c] sm:$0xf]
        %v5626 = vld [vmem:[%s3 + $0x20] sm:$0xf]
        %v5627 = vld [vmem:[%s3 + $0x24] sm:$0xf]
        %v5628 = vld [vmem:[%s3 + $0x28] sm:$0xf]
        %v5629 = vld [vmem:[%s3 + $0x2c] sm:$0xf]
        %v5630 = vld [vmem:[%s3 + $0x30] sm:$0xf]
        %v5631 = vld [vmem:[%s3 + $0x34] sm:$0xf]
        %v5632 = vld [vmem:[%s3 + $0x38] sm:$0xf]
        %v5633 = vld [vmem:[%s3 + $0x3c] sm:$0xf]
        %v5634 = vld [vmem:[%s3 + $0x40] sm:$0xf]
        %v5635 = vld [vmem:[%s3 + $0x44] sm:$0xf]
        %v5654 = vunpack.c.l.b16 %v5618
        %v5655 = vunpack.c.l.b16 %v5619
        %v5656 = vunpack.c.l.b16 %v5620
        %v5657 = vunpack.c.l.b16 %v5621
        %v5658 = vunpack.c.l.b16 %v5622
        %v5659 = vunpack.c.l.b16 %v5623
        %v5660 = vunpack.c.l.b16 %v5624
        %v5661 = vunpack.c.l.b16 %v5625
        %v5662 = vunpack.c.l.b16 %v5626
        %v5663 = vunpack.c.l.b16 %v5627
        %v5664 = vunpack.c.l.b16 %v5628
        %v5665 = vunpack.c.l.b16 %v5629
        %v5666 = vunpack.c.l.b16 %v5630
        %v5667 = vunpack.c.l.b16 %v5631
        %v5668 = vunpack.c.l.b16 %v5632
        %v5669 = vunpack.c.l.b16 %v5633
        %v5670 = vunpack.c.l.b16 %v5634
        %v5671 = vunpack.c.l.b16 %v5635
        %v5672 = vpack.c.b16 %v5655, %v5654
        %v5673 = vpack.c.b16 %v5657, %v5656
        %v5674 = vpack.c.b16 %v5659, %v5658
        %v5675 = vpack.c.b16 %v5661, %v5660
        %v5676 = vpack.c.b16 %v5663, %v5662
        %v5677 = vpack.c.b16 %v5665, %v5664
        %v5678 = vpack.c.b16 %v5667, %v5666
        %v5679 = vpack.c.b16 %v5669, %v5668
        %v5680 = vpack.c.b16 %v5671, %v5670
        %5722 = vrot.lane.b32.xlu0 %v2874, 112
        %v5723 = vpop.permute.xlu0 %5722
        %5724 = vrot.lane.b32.xlu0 %v2877, 112
        %v5725 = vpop.permute.xlu0 %5724
        %5726 = vrot.lane.b32.xlu0 %v2882, 112
        %v5727 = vpop.permute.xlu0 %5726
        %5728 = vrot.lane.b32.xlu0 %v2885, 112
        %v5729 = vpop.permute.xlu0 %5728
        %5730 = vrot.lane.b32.xlu0 %v2890, 112
        %v5731 = vpop.permute.xlu0 %5730
        %5732 = vrot.lane.b32.xlu0 %v2893, 112
        %v5733 = vpop.permute.xlu0 %5732
        %5734 = vrot.lane.b32.xlu0 %v2898, 112
        %v5735 = vpop.permute.xlu0 %5734
        %5736 = vrot.lane.b32.xlu0 %v2901, 112
        %v5737 = vpop.permute.xlu0 %5736
        %5738 = vrot.lane.b32.xlu0 %v2906, 112
        %v5739 = vpop.permute.xlu0 %5738
        %5740 = vrot.lane.b32.xlu0 %v2909, 112
        %v5741 = vpop.permute.xlu0 %5740
        %5742 = vrot.lane.b32.xlu0 %v2914, 112
        %v5743 = vpop.permute.xlu0 %5742
        %5744 = vrot.lane.b32.xlu0 %v2917, 112
        %v5745 = vpop.permute.xlu0 %5744
        %5746 = vrot.lane.b32.xlu0 %v2922, 112
        %v5747 = vpop.permute.xlu0 %5746
        %5748 = vrot.lane.b32.xlu0 %v2925, 112
        %v5749 = vpop.permute.xlu0 %5748
        %5750 = vrot.lane.b32.xlu0 %v2930, 112
        %v5751 = vpop.permute.xlu0 %5750
        %5752 = vrot.lane.b32.xlu0 %v2933, 112
        %v5753 = vpop.permute.xlu0 %5752
        %5754 = vrot.lane.b32.xlu0 %v2938, 112
        %v5755 = vpop.permute.xlu0 %5754
        %5756 = vrot.lane.b32.xlu0 %v2941, 112
        %v5757 = vpop.permute.xlu0 %5756
        %5758 = vrot.lane.b32.xlu0 %v2946, 112
        %v5759 = vpop.permute.xlu0 %5758
        %5760 = vrot.lane.b32.xlu0 %v2949, 112
        %v5761 = vpop.permute.xlu0 %5760
        %5762 = vrot.lane.b32.xlu0 %v2954, 112
        %v5763 = vpop.permute.xlu0 %5762
        %5764 = vrot.lane.b32.xlu0 %v2957, 112
        %v5765 = vpop.permute.xlu0 %5764
        %5766 = vrot.lane.b32.xlu0 %v2962, 112
        %v5767 = vpop.permute.xlu0 %5766
        %5768 = vrot.lane.b32.xlu0 %v2965, 112
        %v5769 = vpop.permute.xlu0 %5768
        %5770 = vrot.lane.b32.xlu0 %v2970, 112
        %v5771 = vpop.permute.xlu0 %5770
        %5772 = vrot.lane.b32.xlu0 %v2973, 112
        %v5773 = vpop.permute.xlu0 %5772
        %5774 = vrot.lane.b32.xlu0 %v2978, 112
        %v5775 = vpop.permute.xlu0 %5774
        %5776 = vrot.lane.b32.xlu0 %v2981, 112
        %v5777 = vpop.permute.xlu0 %5776
        %5778 = vrot.lane.b32.xlu0 %v2986, 112
        %v5779 = vpop.permute.xlu0 %5778
        %5780 = vrot.lane.b32.xlu0 %v2989, 112
        %v5781 = vpop.permute.xlu0 %5780
        %5782 = vrot.lane.b32.xlu0 %v2994, 112
        %v5783 = vpop.permute.xlu0 %5782
        %5784 = vrot.lane.b32.xlu0 %v2997, 112
        %v5785 = vpop.permute.xlu0 %5784
        %v5819 = vsel %vm2535, %v5329, 0
        %v5822 = vsel %vm2535, %v5332, 0
        %v5825 = vsel %vm2535, %v5335, 0
        %v5828 = vsel %vm2535, %v5338, 0
        %v5831 = vsel %vm2535, %v5341, 0
        %v5834 = vsel %vm2535, %v5344, 0
        %v5837 = vsel %vm2535, %v5347, 0
        %v5840 = vsel %vm2535, %v5350, 0
        %v5843 = vsel %vm2535, %v5353, 0
        %v5846 = vsel %vm2535, %v5356, 0
        %v5849 = vsel %vm2535, %v5359, 0
        %v5852 = vsel %vm2535, %v5362, 0
        %v5855 = vsel %vm2535, %v5365, 0
        %v5858 = vsel %vm2535, %v5368, 0
        %v5861 = vsel %vm2535, %v5371, 0
        %v5864 = vsel %vm2535, %v5374, 0
        %5866 = vmatprep.subr.bf16.mxu0 0
        %5867 = vmatpush1.bf16.msra.mxu0 %v5672
        %5868 = vmatprep.subr.bf16.mxu0 0
        %5869 = vmatpush1.bf16.msra.mxu0 %v5673
        %5870 = vmatprep.subr.bf16.mxu0 0
        %5871 = vmatpush1.bf16.msra.mxu0 %v5674
        %5872 = vmatprep.subr.bf16.mxu0 0
        %5873 = vmatpush1.bf16.msra.mxu0 %v5675
        %5874 = vmatprep.subr.bf16.mxu0 0
        %5875 = vmatpush1.bf16.msra.mxu0 %v5676
        %5876 = vmatprep.subr.bf16.mxu0 0
        %5877 = vmatpush1.bf16.msra.mxu0 %v5677
        %5878 = vmatprep.subr.bf16.mxu0 0
        %5879 = vmatpush1.bf16.msra.mxu0 %v5678
        %5880 = vmatprep.subr.bf16.mxu0 0
        %5881 = vmatpush1.bf16.msra.mxu0 %v5679
        %5882 = vmatprep.subr.bf16.mxu0 0
        %5883 = vmatpush1.bf16.msra.mxu0 %v5680
        %5884 = vmatprep.subr.bf16.mxu0 0
        %5885 = vmatpush1.bf16.msra.mxu0 0
        %5886 = vmatprep.subr.bf16.mxu0 0
        %5887 = vmatpush1.bf16.msra.mxu0 0
        %5888 = vmatprep.subr.bf16.mxu0 0
        %5889 = vmatpush1.bf16.msra.mxu0 0
        %5890 = vmatprep.subr.bf16.mxu0 0
        %5891 = vmatpush1.bf16.msra.mxu0 0
        %5892 = vmatprep.subr.bf16.mxu0 0
        %5893 = vmatpush1.bf16.msra.mxu0 0
        %5894 = vmatprep.subr.bf16.mxu0 0
        %5895 = vmatpush1.bf16.msra.mxu0 0
        %5896 = vmatprep.subr.bf16.mxu0 0
        %5897 = vmatpush1.bf16.msra.mxu0 0
        %5898 = vmatprep.mubr.bf16.mxu0 %v5819
        %5899 = vmatmul.mubr.bf16.gmra.mrb[0].mxu0 %v5571
        %v5900 = vpop.f32.mrb[0].mxu0
        %v5901 = vadd.f32 %v5723, %v5900
        %v5902 = vpop.f32.mrb[0].mxu0
        %v5903 = vpop.f32.mrb[0].mxu0
        %v5904 = vadd.f32 %v5725, %v5903
        %v5905 = vpop.f32.mrb[0].mxu0
        %5906 = vmatprep.mubr.bf16.mxu0 %v5822
        %5907 = vmatmul.mubr.bf16.gmra.mrb[0].mxu0 %v5574
        %v5908 = vpop.f32.mrb[0].mxu0
        %v5909 = vadd.f32 %v5727, %v5908
        %v5910 = vpop.f32.mrb[0].mxu0
        %v5911 = vpop.f32.mrb[0].mxu0
        %v5912 = vadd.f32 %v5729, %v5911
        %v5913 = vpop.f32.mrb[0].mxu0
        %5914 = vmatprep.mubr.bf16.mxu0 %v5825
        %5915 = vmatmul.mubr.bf16.gmra.mrb[0].mxu0 %v5577
        %v5916 = vpop.f32.mrb[0].mxu0
        %v5917 = vadd.f32 %v5731, %v5916
        %v5918 = vpop.f32.mrb[0].mxu0
        %v5919 = vpop.f32.mrb[0].mxu0
        %v5920 = vadd.f32 %v5733, %v5919
        %v5921 = vpop.f32.mrb[0].mxu0
        %5922 = vmatprep.mubr.bf16.mxu0 %v5828
        %5923 = vmatmul.mubr.bf16.gmra.mrb[0].mxu0 %v5580
        %v5924 = vpop.f32.mrb[0].mxu0
        %v5925 = vadd.f32 %v5735, %v5924
        %v5926 = vpop.f32.mrb[0].mxu0
        %v5927 = vpop.f32.mrb[0].mxu0
        %v5928 = vadd.f32 %v5737, %v5927
        %v5929 = vpop.f32.mrb[0].mxu0
        %5930 = vmatprep.mubr.bf16.mxu0 %v5831
        %5931 = vmatmul.mubr.bf16.gmra.mrb[0].mxu0 %v5583
        %v5932 = vpop.f32.mrb[0].mxu0
        %v5933 = vadd.f32 %v5739, %v5932
        %v5934 = vpop.f32.mrb[0].mxu0
        %v5935 = vpop.f32.mrb[0].mxu0
        %v5936 = vadd.f32 %v5741, %v5935
        %v5937 = vpop.f32.mrb[0].mxu0
        %5938 = vmatprep.mubr.bf16.mxu0 %v5834
        %5939 = vmatmul.mubr.bf16.gmra.mrb[0].mxu0 %v5586
        %v5940 = vpop.f32.mrb[0].mxu0
        %v5941 = vadd.f32 %v5743, %v5940
        %v5942 = vpop.f32.mrb[0].mxu0
        %v5943 = vpop.f32.mrb[0].mxu0
        %v5944 = vadd.f32 %v5745, %v5943
        %v5945 = vpop.f32.mrb[0].mxu0
        %5946 = vmatprep.mubr.bf16.mxu0 %v5837
        %5947 = vmatmul.mubr.bf16.gmra.mrb[0].mxu0 %v5589
        %v5948 = vpop.f32.mrb[0].mxu0
        %v5949 = vadd.f32 %v5747, %v5948
        %v5950 = vpop.f32.mrb[0].mxu0
        %v5951 = vpop.f32.mrb[0].mxu0
        %v5952 = vadd.f32 %v5749, %v5951
        %v5953 = vpop.f32.mrb[0].mxu0
        %5954 = vmatprep.mubr.bf16.mxu0 %v5840
        %5955 = vmatmul.mubr.bf16.gmra.mrb[0].mxu0 %v5592
        %v5956 = vpop.f32.mrb[0].mxu0
        %v5957 = vadd.f32 %v5751, %v5956
        %v5958 = vpop.f32.mrb[0].mxu0
        %v5959 = vpop.f32.mrb[0].mxu0
        %v5960 = vadd.f32 %v5753, %v5959
        %v5961 = vpop.f32.mrb[0].mxu0
        %5962 = vmatprep.mubr.bf16.mxu0 %v5843
        %5963 = vmatmul.mubr.bf16.gmra.mrb[0].mxu0 %v5595
        %v5964 = vpop.f32.mrb[0].mxu0
        %v5965 = vadd.f32 %v5755, %v5964
        %v5966 = vpop.f32.mrb[0].mxu0
        %v5967 = vpop.f32.mrb[0].mxu0
        %v5968 = vadd.f32 %v5757, %v5967
        %v5969 = vpop.f32.mrb[0].mxu0
        %5970 = vmatprep.mubr.bf16.mxu0 %v5846
        %5971 = vmatmul.mubr.bf16.gmra.mrb[0].mxu0 %v5598
        %v5972 = vpop.f32.mrb[0].mxu0
        %v5973 = vadd.f32 %v5759, %v5972
        %v5974 = vpop.f32.mrb[0].mxu0
        %v5975 = vpop.f32.mrb[0].mxu0
        %v5976 = vadd.f32 %v5761, %v5975
        %v5977 = vpop.f32.mrb[0].mxu0
        %5978 = vmatprep.mubr.bf16.mxu0 %v5849
        %5979 = vmatmul.mubr.bf16.gmra.mrb[0].mxu0 %v5601
        %v5980 = vpop.f32.mrb[0].mxu0
        %v5981 = vadd.f32 %v5763, %v5980
        %v5982 = vpop.f32.mrb[0].mxu0
        %v5983 = vpop.f32.mrb[0].mxu0
        %v5984 = vadd.f32 %v5765, %v5983
        %v5985 = vpop.f32.mrb[0].mxu0
        %5986 = vmatprep.mubr.bf16.mxu0 %v5852
        %5987 = vmatmul.mubr.bf16.gmra.mrb[0].mxu0 %v5604
        %v5988 = vpop.f32.mrb[0].mxu0
        %v5989 = vadd.f32 %v5767, %v5988
        %v5990 = vpop.f32.mrb[0].mxu0
        %v5991 = vpop.f32.mrb[0].mxu0
        %v5992 = vadd.f32 %v5769, %v5991
        %v5993 = vpop.f32.mrb[0].mxu0
        %5994 = vmatprep.mubr.bf16.mxu0 %v5855
        %5995 = vmatmul.mubr.bf16.gmra.mrb[0].mxu0 %v5607
        %v5996 = vpop.f32.mrb[0].mxu0
        %v5997 = vadd.f32 %v5771, %v5996
        %v5998 = vpop.f32.mrb[0].mxu0
        %v5999 = vpop.f32.mrb[0].mxu0
        %v6000 = vadd.f32 %v5773, %v5999
        %v6001 = vpop.f32.mrb[0].mxu0
        %6002 = vmatprep.mubr.bf16.mxu0 %v5858
        %6003 = vmatmul.mubr.bf16.gmra.mrb[0].mxu0 %v5610
        %v6004 = vpop.f32.mrb[0].mxu0
        %v6005 = vadd.f32 %v5775, %v6004
        %v6006 = vpop.f32.mrb[0].mxu0
        %v6007 = vpop.f32.mrb[0].mxu0
        %v6008 = vadd.f32 %v5777, %v6007
        %v6009 = vpop.f32.mrb[0].mxu0
        %6010 = vmatprep.mubr.bf16.mxu0 %v5861
        %6011 = vmatmul.mubr.bf16.gmra.mrb[0].mxu0 %v5613
        %v6012 = vpop.f32.mrb[0].mxu0
        %v6013 = vadd.f32 %v5779, %v6012
        %v6014 = vpop.f32.mrb[0].mxu0
        %v6015 = vpop.f32.mrb[0].mxu0
        %v6016 = vadd.f32 %v5781, %v6015
        %v6017 = vpop.f32.mrb[0].mxu0
        %6018 = vmatprep.mubr.bf16.mxu0 %v5864
        %6019 = vmatmul.mubr.bf16.gmra.mrb[0].mxu0 %v5616
        %v6020 = vpop.f32.mrb[0].mxu0
        %v6021 = vadd.f32 %v5783, %v6020
        %v6022 = vpop.f32.mrb[0].mxu0
        %v6023 = vpop.f32.mrb[0].mxu0
        %v6024 = vadd.f32 %v5785, %v6023
        %v6025 = vpop.f32.mrb[0].mxu0
        %6026 = vdwg.mxu0
        %v6027 = vld [vmem:[%s4] sm:$0x1]
        %v6029 = vlaneseq
        %v6030 = vshrl.u32 %v6029, 7
        %v6031 = vsub.s32 0, %v6030
        %v6032 = vrot.slane %v6027, %v6031
        %v6034 = vadd.f32 %v5901, %v6032
        %v6035 = vadd.f32 %v5904, %v6032
        %v6036 = vadd.f32 %v5909, %v6032
        %v6037 = vadd.f32 %v5912, %v6032
        %v6038 = vadd.f32 %v5917, %v6032
        %v6039 = vadd.f32 %v5920, %v6032
        %v6040 = vadd.f32 %v5925, %v6032
        %v6041 = vadd.f32 %v5928, %v6032
        %v6042 = vadd.f32 %v5933, %v6032
        %v6043 = vadd.f32 %v5936, %v6032
        %v6044 = vadd.f32 %v5941, %v6032
        %v6045 = vadd.f32 %v5944, %v6032
        %v6046 = vadd.f32 %v5949, %v6032
        %v6047 = vadd.f32 %v5952, %v6032
        %v6048 = vadd.f32 %v5957, %v6032
        %v6049 = vadd.f32 %v5960, %v6032
        %v6050 = vadd.f32 %v5965, %v6032
        %v6051 = vadd.f32 %v5968, %v6032
        %v6052 = vadd.f32 %v5973, %v6032
        %v6053 = vadd.f32 %v5976, %v6032
        %v6054 = vadd.f32 %v5981, %v6032
        %v6055 = vadd.f32 %v5984, %v6032
        %v6056 = vadd.f32 %v5989, %v6032
        %v6057 = vadd.f32 %v5992, %v6032
        %v6058 = vadd.f32 %v5997, %v6032
        %v6059 = vadd.f32 %v6000, %v6032
        %v6060 = vadd.f32 %v6005, %v6032
        %v6061 = vadd.f32 %v6008, %v6032
        %v6062 = vadd.f32 %v6013, %v6032
        %v6063 = vadd.f32 %v6016, %v6032
        %v6064 = vadd.f32 %v6021, %v6032
        %v6065 = vadd.f32 %v6024, %v6032
        %v6066 = vmax.f32 %v6034, 0.0
        %v6067 = vmax.f32 %v6035, 0.0
        %v6068 = vmax.f32 %v6036, 0.0
        %v6069 = vmax.f32 %v6037, 0.0
        %v6070 = vmax.f32 %v6038, 0.0
        %v6071 = vmax.f32 %v6039, 0.0
        %v6072 = vmax.f32 %v6040, 0.0
        %v6073 = vmax.f32 %v6041, 0.0
        %v6074 = vmax.f32 %v6042, 0.0
        %v6075 = vmax.f32 %v6043, 0.0
        %v6076 = vmax.f32 %v6044, 0.0
        %v6077 = vmax.f32 %v6045, 0.0
        %v6078 = vmax.f32 %v6046, 0.0
        %v6079 = vmax.f32 %v6047, 0.0
        %v6080 = vmax.f32 %v6048, 0.0
        %v6081 = vmax.f32 %v6049, 0.0
        %v6082 = vmax.f32 %v6050, 0.0
        %v6083 = vmax.f32 %v6051, 0.0
        %v6084 = vmax.f32 %v6052, 0.0
        %v6085 = vmax.f32 %v6053, 0.0
        %v6086 = vmax.f32 %v6054, 0.0
        %v6087 = vmax.f32 %v6055, 0.0
        %v6088 = vmax.f32 %v6056, 0.0
        %v6089 = vmax.f32 %v6057, 0.0
        %v6090 = vmax.f32 %v6058, 0.0
        %v6091 = vmax.f32 %v6059, 0.0
        %v6092 = vmax.f32 %v6060, 0.0
        %v6093 = vmax.f32 %v6061, 0.0
        %v6094 = vmax.f32 %v6062, 0.0
        %v6095 = vmax.f32 %v6063, 0.0
        %v6096 = vmax.f32 %v6064, 0.0
        %v6097 = vmax.f32 %v6065, 0.0
        %6098 = vst.msk [vmem:[%s217] sm:$0xff] %vm2535, %v6066
        %6099 = vst.msk [vmem:[%s217 + $0x8] sm:$0xff] %vm2535, %v6067
        %6100 = vst.msk [vmem:[%s217 + $0x10] sm:$0xff] %vm2535, %v6068
        %6101 = vst.msk [vmem:[%s217 + $0x18] sm:$0xff] %vm2535, %v6069
        %6102 = vst.msk [vmem:[%s217 + $0x20] sm:$0xff] %vm2535, %v6070
        %6103 = vst.msk [vmem:[%s217 + $0x28] sm:$0xff] %vm2535, %v6071
        %6104 = vst.msk [vmem:[%s217 + $0x30] sm:$0xff] %vm2535, %v6072
        %6105 = vst.msk [vmem:[%s217 + $0x38] sm:$0xff] %vm2535, %v6073
        %6106 = vst.msk [vmem:[%s217 + $0x40] sm:$0xff] %vm2535, %v6074
        %6107 = vst.msk [vmem:[%s217 + $0x48] sm:$0xff] %vm2535, %v6075
        %6108 = vst.msk [vmem:[%s217 + $0x50] sm:$0xff] %vm2535, %v6076
        %6109 = vst.msk [vmem:[%s217 + $0x58] sm:$0xff] %vm2535, %v6077
        %6110 = vst.msk [vmem:[%s217 + $0x60] sm:$0xff] %vm2535, %v6078
        %6111 = vst.msk [vmem:[%s217 + $0x68] sm:$0xff] %vm2535, %v6079
        %6112 = vst.msk [vmem:[%s217 + $0x70] sm:$0xff] %vm2535, %v6080
        %6113 = vst.msk [vmem:[%s217 + $0x78] sm:$0xff] %vm2535, %v6081
        %6114 = vst.msk [vmem:[%s217 + $0x80] sm:$0xff] %vm2535, %v6082
        %6115 = vst.msk [vmem:[%s217 + $0x88] sm:$0xff] %vm2535, %v6083
        %6116 = vst.msk [vmem:[%s217 + $0x90] sm:$0xff] %vm2535, %v6084
        %6117 = vst.msk [vmem:[%s217 + $0x98] sm:$0xff] %vm2535, %v6085
        %6118 = vst.msk [vmem:[%s217 + $0xa0] sm:$0xff] %vm2535, %v6086
        %6119 = vst.msk [vmem:[%s217 + $0xa8] sm:$0xff] %vm2535, %v6087
        %6120 = vst.msk [vmem:[%s217 + $0xb0] sm:$0xff] %vm2535, %v6088
        %6121 = vst.msk [vmem:[%s217 + $0xb8] sm:$0xff] %vm2535, %v6089
        %6122 = vst.msk [vmem:[%s217 + $0xc0] sm:$0xff] %vm2535, %v6090
        %6123 = vst.msk [vmem:[%s217 + $0xc8] sm:$0xff] %vm2535, %v6091
        %6124 = vst.msk [vmem:[%s217 + $0xd0] sm:$0xff] %vm2535, %v6092
        %6125 = vst.msk [vmem:[%s217 + $0xd8] sm:$0xff] %vm2535, %v6093
        %6126 = vst.msk [vmem:[%s217 + $0xe0] sm:$0xff] %vm2535, %v6094
        %6127 = vst.msk [vmem:[%s217 + $0xe8] sm:$0xff] %vm2535, %v6095
        %6128 = vst.msk [vmem:[%s217 + $0xf0] sm:$0xff] %vm2535, %v6096
        %6129 = vst.msk [vmem:[%s217 + $0xf8] sm:$0xff] %vm2535, %v6097
        %s6130 = sand.u32 %s137, 1
        %s6131 = scalar_lea.sflag [#allocation5], %s6130
        %s6132 = sand.u32 %s137, 1
        %s6133 = smul.addr %s6132, 256
        %s6134 = scalar_lea.vmem [#allocation4], %s6133
        // Predicated region
        $region41: #{tpu_custom_call.1} parent=39 // pred_check
          %p6135 = pneg %p147
        $region42: #{tpu_custom_call.1} parent=39 // pred_check_branch
          %6137 = sbr.rel (%p6135) target = $region44
        $region43: #{tpu_custom_call.1} parent=39 // pred_region
          %s6139 = ssub.s32 4096, 4096
          %6140 = vsyncadd %s6131, %s6139
          %s6141 = smul.addr %s19, 32
          %s6142 = smul.addr %s6141, 128
          %s6143 = scalar_lea.hbm %s5, %s6142
          %s6144 = sshll.u32 %s6134, 4
          %s6145 = int_to_ptr.vmem [resolvable:$true] %s6144
          %6150 = dma.vmem_to_hbm [thread:$0]  %s6145, 4096, %s6143, %s6131, 128, 128, 8
        $region44: #{tpu_custom_call.1} parent=39 // pred_fallthru
          _
      $region40: #{tpu_custom_call.1} parent=5 // pred_fallthru
        _
      %p6151 = scmp.le.s32.totalorder 2, %s14
      // Predicated region
      $region45: #{tpu_custom_call.1} parent=5 // pred_check
        %p6152 = pneg %p6151
      $region46: #{tpu_custom_call.1} parent=5 // pred_check_branch
        %6154 = sbr.rel (%p6152) target = $region48
      $region47: #{tpu_custom_call.1} parent=5 // pred_region
        %s6155 = ssub.s32 %s14, 2
        // Predicated region
        $region49: #{tpu_custom_call.1} parent=47 // pred_check
          %p6156 = pneg %p153
        $region50: #{tpu_custom_call.1} parent=47 // pred_check_branch
          %6158 = sbr.rel (%p6156) target = $region52
        $region51: #{tpu_custom_call.1} parent=47 // pred_region
          %s6159 = sand.u32 %s138, 1
          %s6160 = scalar_lea.sflag [#allocation5], %s6159
          %s6161 = sand.u32 %s138, 1
          %s6162 = smul.addr %s6161, 256
          %s6163 = scalar_lea.vmem [#allocation4], %s6162
          %6164 = dma.done %s6160, 4096
        $region52: #{tpu_custom_call.1} parent=47 // pred_fallthru
          _
      $region48: #{tpu_custom_call.1} parent=5 // pred_fallthru
        _
    $region6: #{tpu_custom_call.1} parent=1 // loop_footer
      %s18 = sadd.s32 1, %s14
    $region7: #{tpu_custom_call.1} parent=1 // loop_footer_branch
      %13 = sbr.rel target = $region3
    $region8: #{tpu_custom_call.1} parent=1 // loop_exit
      _
    %6165 = vsyncpa [#allocation5], 1
    %s6166 = scalar_lea.sflag [#allocation5], 1
    %6167 = vsyncpa %s6166, 1

</llo_original>
